<compile_context>
chip_gen: v7x
topology: tpu7x:2x2x1
jax: 0.10.0
libtpu: 0.0.40
codegen_flags: <defaults>
</compile_context>

<pallas_src>
import functools

import jax
import jax.numpy as jnp
from jax.experimental import pallas as pl
from jax.experimental.pallas import tpu as pltpu


def _round_up(x, m):
    return (x + m - 1) // m * m


def _conv_kernel(w_ref, b_ref, x_ref, o_ref, slab_ref, *, kh, kw, wp, stride,
                 c, precision):
    # w_ref    : (OC, K=kh*kw*C)  -- resident flattened weights (tap-major, then C)
    # b_ref    : (OC, 1) f32      -- resident bias
    # x_ref    : (L, C)           -- flattened zero-padded input, one batch element
    # o_ref    : (OC, TN) f32     -- lane-dense output tile over flat positions
    # slab_ref : (TN, K)          -- VMEM scratch: fused per-tile input slab
    tn = o_ref.shape[1]
    ni = pl.program_id(1)

    # First flat input index touched by this tile (multiple of 128 since TN is).
    n0 = pl.multiple_of(ni * (tn * stride), 128)

    # Build the (TN, K) slab: one ref-level (optionally strided) slice per tap,
    # written into its lane range of the scratch.  K is ordered (i, j, c) to
    # match w_ref's layout.
    for i in range(kh):
        for j in range(kw):
            t = i * kw + j
            start = n0 + i * wp + j
            if stride == 1:
                tap = x_ref[pl.ds(start, tn), :]
            else:
                tap = x_ref[pl.ds(start, tn, stride=stride), :]
            slab_ref[:, t * c:(t + 1) * c] = tap

    # One MXU contraction of depth K: (OC, K) x (TN, K)^T -> (OC, TN), f32 acc.
    acc = jax.lax.dot_general(
        w_ref[...], slab_ref[...],
        dimension_numbers=(((1,), (1,)), ((), ())),
        precision=precision,
        preferred_element_type=jnp.float32)
    o_ref[...] = (acc + b_ref[...]).astype(o_ref.dtype)


def _vmem_capacity_bytes():
    try:
        return int(pltpu.get_tpu_info().vmem_capacity_bytes)
    except Exception:  # defensive: assume the smallest (v7x) part
        return 64 << 20


@functools.partial(jax.jit,
                   static_argnames=("stride", "padding", "tile_n", "compute_dtype"))
def my_conv2d(x, W, b, *, stride=1, padding=0, tile_n=None,
              compute_dtype=jnp.float32):
    """Equivalent of MyFConv2D: x (B,C,H,W), W (OC,C,kh,kw), b (OC,) or None."""
    B, C, H, Wd = x.shape
    OC, Cw, kh, kw = W.shape
    assert Cw == C
    s = int(stride)
    p = int(padding)

    Hp, Wp = H + 2 * p, Wd + 2 * p
    OH = (Hp - kh) // s + 1
    OW = (Wp - kw) // s + 1
    K = kh * kw * C

    # Generation-aware sizing: v5e/v6e have 128 MiB VMEM, v7x only 64 MiB.
    vmem_cap = _vmem_capacity_bytes()
    if tile_n is None:
        tile_n = 1024 if vmem_cap >= (96 << 20) else 512

    # Virtual flattened output grid: rows r in [0, OH), virtual cols in [0, Wp).
    # Garbage virtual columns (c >= OW) are cropped in the wrapper.
    # TODO(synk): for stride >= 2 roughly (Wp-OW)/Wp of the MXU work is cropped;
    # a row-tiled grid over real output columns would avoid that waste.
    n_virt = OH * Wp
    TN = min(_round_up(tile_n, 128), _round_up(n_virt, 128))
    n_pad = _round_up(n_virt, TN)
    n_tiles = n_pad // TN

    # Extra zero rows so every in-kernel slice stays in bounds (last tile/tap).
    L_req = (n_tiles - 1) * TN * s + (TN - 1) * s + (kh - 1) * Wp + kw
    extra_rows = max(0, -(-(L_req - Hp * Wp) // Wp))
    Hp2 = Hp + extra_rows
    L = Hp2 * Wp

    # Single pad+transpose(+cast) pre-pass to (B, L, C).
    # TODO(synk): a multi-layer network keeping activations NHWC/(B,L,C) between
    # layers would remove this transpose and the output crop pass entirely.
    x_pad = jnp.pad(x, ((0, 0), (0, 0), (p, p + extra_rows), (p, p)))
    x_flat = jnp.transpose(x_pad, (0, 2, 3, 1)).reshape(B, L, C)
    x_flat = x_flat.astype(compute_dtype)

    # Weights flattened to (OC, K) with K ordered (i, j, c) to match the slab.
    w_flat = jnp.transpose(W, (0, 2, 3, 1)).reshape(OC, K).astype(compute_dtype)
    bias = jnp.zeros((OC,), jnp.float32) if b is None else b.astype(jnp.float32)
    bias2d = bias.reshape(OC, 1)

    # f32 compute keeps the PyTorch module's numerics; bf16 is the fast path.
    precision = (jax.lax.Precision.HIGHEST
                 if jnp.dtype(compute_dtype) == jnp.dtype(jnp.float32) else None)

    # VMEM budget from actual (padded) tile footprints (double-buffered blocks).
    isz = jnp.dtype(compute_dtype).itemsize
    sub = 8 * (4 // isz)                                # sublane multiple
    lane = lambda n: max(_round_up(n, 128), 128)        # lane padding
    bx = _round_up(L, sub) * lane(C) * isz              # resident x block
    bw = _round_up(OC, sub) * lane(K) * isz             # resident weights
    bb = _round_up(OC, 8) * 128 * 4                     # resident bias
    bo = _round_up(OC, 8) * lane(TN) * 4                # output tile (f32)
    bslab = _round_up(TN, sub) * lane(K) * isz          # scratch slab
    est = 2 * (bx + bw + bb + bo) + bslab + (4 << 20)
    # TODO(synk): shapes whose resident (L, C) block pushes `est` past ~85% of
    # VMEM capacity (large images / channel counts, especially on v7x's 64 MiB)
    # need an L-windowed (pl.Element / manual-DMA halo) or C-chunked-reduction
    # path instead of whole-image residency.
    vmem_limit = int(min(int(vmem_cap * 0.85), max(32 << 20, est)))

    kernel = functools.partial(_conv_kernel, kh=kh, kw=kw, wp=Wp, stride=s,
                               c=C, precision=precision)

    out_flat = pl.pallas_call(
        kernel,
        out_shape=jax.ShapeDtypeStruct((B, OC, n_pad), jnp.float32),
        grid_spec=pltpu.PrefetchScalarGridSpec(
            num_scalar_prefetch=0,
            grid=(B, n_tiles),
            in_specs=[
                pl.BlockSpec((OC, K), lambda bi, ni: (0, 0)),            # W flat
                pl.BlockSpec((OC, 1), lambda bi, ni: (0, 0)),            # bias
                pl.BlockSpec((None, L, C), lambda bi, ni: (bi, 0, 0)),   # x flat
            ],
            out_specs=pl.BlockSpec((None, OC, TN), lambda bi, ni: (bi, 0, ni)),
            scratch_shapes=[pltpu.VMEM((TN, K), compute_dtype)],
        ),
        compiler_params=pltpu.CompilerParams(
            dimension_semantics=("parallel", "parallel"),
            vmem_limit_bytes=vmem_limit),
    )(w_flat, bias2d, x_flat)

    # Crop garbage virtual columns / padded rows; output is already OC-major
    # (NCHW), so no final transpose is needed.
    out = out_flat[:, :, :n_virt].reshape(B, OC, OH, Wp)[:, :, :, :OW]
    return out


class MyConv2DPallas:
    """Mirror of the PyTorch MyConv2D module (forward only)."""

    def __init__(self, in_channels, out_channels, kernel_size, stride, padding,
                 bias=True, key=jax.random.PRNGKey(0)):
        self.in_channels = in_channels
        self.out_channels = out_channels
        self.kernel_size = kernel_size
        self.stride = stride
        self.padding = padding
        self.bias_bool = bias
        kW, kb = jax.random.split(key)
        # torch.randn -> standard normal; torch.rand -> uniform [0, 1)
        self.W = jax.random.normal(
            kW, (out_channels, in_channels, kernel_size, kernel_size), jnp.float32)
        self.b = (jax.random.uniform(kb, (out_channels,), jnp.float32)
                  if bias else None)

    def __call__(self, x):
        return self.forward(x)

    def forward(self, x):
        return my_conv2d(x, self.W, self.b, stride=self.stride,
                         padding=self.padding)


if __name__ == "__main__":
    key = jax.random.PRNGKey(0)
    k_x, k_mod = jax.random.split(key)

    # batch=2, in_channels=4, 16x16 spatial, out_channels=8, 3x3, stride=1, pad=1.
    x = jax.random.normal(k_x, (2, 4, 16, 16), jnp.float32)
    conv = MyConv2DPallas(in_channels=4, out_channels=8, kernel_size=3,
                          stride=1, padding=1, bias=True, key=k_mod)

    out = conv(x)
    jax.block_until_ready(out)
    assert out.shape == (2, 8, 16, 16), out.shape

    # f32 reference (HIGHEST so the XLA conv does not demote precision).
    ref = jax.lax.conv_general_dilated(
        x, conv.W, window_strides=(1, 1), padding=((1, 1), (1, 1)),
        dimension_numbers=("NCHW", "OIHW", "NCHW"),
        precision=jax.lax.Precision.HIGHEST)
    ref = ref + conv.b.reshape(1, -1, 1, 1)
    err = float(jnp.max(jnp.abs(out - ref)))
    # Tolerance leaves headroom for platform-dependent matmul precision modes;
    # logic/indexing bugs would produce O(1)-O(10) discrepancies.
    assert jnp.allclose(out, ref, atol=5e-2, rtol=5e-2), err

    print("KERNEL_OK")
</pallas_src>

<mosaic_0001>
module attributes {stable_mosaic.version = 11 : i64} {
  func.func @_conv_kernel(%arg0: i32, %arg1: i32, %arg2: memref<8x36xf32, #tpu.memory_space<vmem>>, %arg3: memref<8x1xf32, #tpu.memory_space<vmem>>, %arg4: memref<1x432x4xf32, #tpu.memory_space<vmem>>, %arg5: memref<1x8x384xf32, #tpu.memory_space<vmem>>, %arg6: memref<384x36xf32, #tpu.memory_space<vmem>>) attributes {dimension_semantics = [#tpu.dimension_semantics<parallel>, #tpu.dimension_semantics<parallel>], iteration_bounds = array<i64: 2, 1>, scalar_prefetch = 0 : i64, scratch_operands = 1 : i64, tpu.core_type = #tpu.core_type<tc>, window_params = [{pipeline_mode = #tpu.pipeline_mode<synchronous>, transform_indices = @transform_0, window_bounds = array<i64: 8, 36>}, {pipeline_mode = #tpu.pipeline_mode<synchronous>, transform_indices = @transform_1, window_bounds = array<i64: 8, 1>}, {transform_indices = @transform_2, window_bounds = array<i64: 1, 432, 4>}, {transform_indices = @transform_3, window_bounds = array<i64: 1, 8, 384>}]} {
    %c384_i32 = arith.constant 384 : i32
    %0 = arith.muli %arg1, %c384_i32 : i32
    %1 = tpu.assume_multiple %0, 128 : i32
    %c0_i32 = arith.constant 0 : i32
    %2 = arith.addi %1, %c0_i32 : i32
    %c0_i32_0 = arith.constant 0 : i32
    %3 = arith.addi %2, %c0_i32_0 : i32
    %c0 = arith.constant 0 : index
    %4 = arith.index_cast %3 : i32 to index
    %c0_1 = arith.constant 0 : index
    %5 = vector.load %arg4[%c0, %4, %c0_1] : memref<1x432x4xf32, #tpu.memory_space<vmem>>, vector<1x384x4xf32>
    %6 = vector.shape_cast %5 : vector<1x384x4xf32> to vector<384x4xf32>
    %c0_2 = arith.constant 0 : index
    %c0_3 = arith.constant 0 : index
    %7 = vector.load %arg6[%c0_2, %c0_3] : memref<384x36xf32, #tpu.memory_space<vmem>>, vector<384x4xf32>
    tpu.vector_store %arg6[%c0_2, %c0_3], %6 {strides = array<i32>} : memref<384x36xf32, #tpu.memory_space<vmem>>, vector<384x4xf32>,
    %c0_i32_4 = arith.constant 0 : i32
    %8 = arith.addi %1, %c0_i32_4 : i32
    %c1_i32 = arith.constant 1 : i32
    %9 = arith.addi %8, %c1_i32 : i32
    %c0_5 = arith.constant 0 : index
    %10 = arith.index_cast %9 : i32 to index
    %c0_6 = arith.constant 0 : index
    %11 = vector.load %arg4[%c0_5, %10, %c0_6] : memref<1x432x4xf32, #tpu.memory_space<vmem>>, vector<1x384x4xf32>
    %12 = vector.shape_cast %11 : vector<1x384x4xf32> to vector<384x4xf32>
    %c0_7 = arith.constant 0 : index
    %c4 = arith.constant 4 : index
    %13 = vector.load %arg6[%c0_7, %c4] : memref<384x36xf32, #tpu.memory_space<vmem>>, vector<384x4xf32>
    tpu.vector_store %arg6[%c0_7, %c4], %12 {strides = array<i32>} : memref<384x36xf32, #tpu.memory_space<vmem>>, vector<384x4xf32>,
    %c0_i32_8 = arith.constant 0 : i32
    %14 = arith.addi %1, %c0_i32_8 : i32
    %c2_i32 = arith.constant 2 : i32
    %15 = arith.addi %14, %c2_i32 : i32
    %c0_9 = arith.constant 0 : index
    %16 = arith.index_cast %15 : i32 to index
    %c0_10 = arith.constant 0 : index
    %17 = vector.load %arg4[%c0_9, %16, %c0_10] : memref<1x432x4xf32, #tpu.memory_space<vmem>>, vector<1x384x4xf32>
    %18 = vector.shape_cast %17 : vector<1x384x4xf32> to vector<384x4xf32>
    %c0_11 = arith.constant 0 : index
    %c8 = arith.constant 8 : index
    %19 = vector.load %arg6[%c0_11, %c8] : memref<384x36xf32, #tpu.memory_space<vmem>>, vector<384x4xf32>
    tpu.vector_store %arg6[%c0_11, %c8], %18 {strides = array<i32>} : memref<384x36xf32, #tpu.memory_space<vmem>>, vector<384x4xf32>,
    %c18_i32 = arith.constant 18 : i32
    %20 = arith.addi %1, %c18_i32 : i32
    %c0_i32_12 = arith.constant 0 : i32
    %21 = arith.addi %20, %c0_i32_12 : i32
    %c0_13 = arith.constant 0 : index
    %22 = arith.index_cast %21 : i32 to index
    %c0_14 = arith.constant 0 : index
    %23 = vector.load %arg4[%c0_13, %22, %c0_14] : memref<1x432x4xf32, #tpu.memory_space<vmem>>, vector<1x384x4xf32>
    %24 = vector.shape_cast %23 : vector<1x384x4xf32> to vector<384x4xf32>
    %c0_15 = arith.constant 0 : index
    %c12 = arith.constant 12 : index
    %25 = vector.load %arg6[%c0_15, %c12] : memref<384x36xf32, #tpu.memory_space<vmem>>, vector<384x4xf32>
    tpu.vector_store %arg6[%c0_15, %c12], %24 {strides = array<i32>} : memref<384x36xf32, #tpu.memory_space<vmem>>, vector<384x4xf32>,
    %c18_i32_16 = arith.constant 18 : i32
    %26 = arith.addi %1, %c18_i32_16 : i32
    %c1_i32_17 = arith.constant 1 : i32
    %27 = arith.addi %26, %c1_i32_17 : i32
    %c0_18 = arith.constant 0 : index
    %28 = arith.index_cast %27 : i32 to index
    %c0_19 = arith.constant 0 : index
    %29 = vector.load %arg4[%c0_18, %28, %c0_19] : memref<1x432x4xf32, #tpu.memory_space<vmem>>, vector<1x384x4xf32>
    %30 = vector.shape_cast %29 : vector<1x384x4xf32> to vector<384x4xf32>
    %c0_20 = arith.constant 0 : index
    %c16 = arith.constant 16 : index
    %31 = vector.load %arg6[%c0_20, %c16] : memref<384x36xf32, #tpu.memory_space<vmem>>, vector<384x4xf32>
    tpu.vector_store %arg6[%c0_20, %c16], %30 {strides = array<i32>} : memref<384x36xf32, #tpu.memory_space<vmem>>, vector<384x4xf32>,
    %c18_i32_21 = arith.constant 18 : i32
    %32 = arith.addi %1, %c18_i32_21 : i32
    %c2_i32_22 = arith.constant 2 : i32
    %33 = arith.addi %32, %c2_i32_22 : i32
    %c0_23 = arith.constant 0 : index
    %34 = arith.index_cast %33 : i32 to index
    %c0_24 = arith.constant 0 : index
    %35 = vector.load %arg4[%c0_23, %34, %c0_24] : memref<1x432x4xf32, #tpu.memory_space<vmem>>, vector<1x384x4xf32>
    %36 = vector.shape_cast %35 : vector<1x384x4xf32> to vector<384x4xf32>
    %c0_25 = arith.constant 0 : index
    %c20 = arith.constant 20 : index
    %37 = vector.load %arg6[%c0_25, %c20] : memref<384x36xf32, #tpu.memory_space<vmem>>, vector<384x4xf32>
    tpu.vector_store %arg6[%c0_25, %c20], %36 {strides = array<i32>} : memref<384x36xf32, #tpu.memory_space<vmem>>, vector<384x4xf32>,
    %c36_i32 = arith.constant 36 : i32
    %38 = arith.addi %1, %c36_i32 : i32
    %c0_i32_26 = arith.constant 0 : i32
    %39 = arith.addi %38, %c0_i32_26 : i32
    %c0_27 = arith.constant 0 : index
    %40 = arith.index_cast %39 : i32 to index
    %c0_28 = arith.constant 0 : index
    %41 = vector.load %arg4[%c0_27, %40, %c0_28] : memref<1x432x4xf32, #tpu.memory_space<vmem>>, vector<1x384x4xf32>
    %42 = vector.shape_cast %41 : vector<1x384x4xf32> to vector<384x4xf32>
    %c0_29 = arith.constant 0 : index
    %c24 = arith.constant 24 : index
    %43 = vector.load %arg6[%c0_29, %c24] : memref<384x36xf32, #tpu.memory_space<vmem>>, vector<384x4xf32>
    tpu.vector_store %arg6[%c0_29, %c24], %42 {strides = array<i32>} : memref<384x36xf32, #tpu.memory_space<vmem>>, vector<384x4xf32>,
    %c36_i32_30 = arith.constant 36 : i32
    %44 = arith.addi %1, %c36_i32_30 : i32
    %c1_i32_31 = arith.constant 1 : i32
    %45 = arith.addi %44, %c1_i32_31 : i32
    %c0_32 = arith.constant 0 : index
    %46 = arith.index_cast %45 : i32 to index
    %c0_33 = arith.constant 0 : index
    %47 = vector.load %arg4[%c0_32, %46, %c0_33] : memref<1x432x4xf32, #tpu.memory_space<vmem>>, vector<1x384x4xf32>
    %48 = vector.shape_cast %47 : vector<1x384x4xf32> to vector<384x4xf32>
    %c0_34 = arith.constant 0 : index
    %c28 = arith.constant 28 : index
    %49 = vector.load %arg6[%c0_34, %c28] : memref<384x36xf32, #tpu.memory_space<vmem>>, vector<384x4xf32>
    tpu.vector_store %arg6[%c0_34, %c28], %48 {strides = array<i32>} : memref<384x36xf32, #tpu.memory_space<vmem>>, vector<384x4xf32>,
    %c36_i32_35 = arith.constant 36 : i32
    %50 = arith.addi %1, %c36_i32_35 : i32
    %c2_i32_36 = arith.constant 2 : i32
    %51 = arith.addi %50, %c2_i32_36 : i32
    %c0_37 = arith.constant 0 : index
    %52 = arith.index_cast %51 : i32 to index
    %c0_38 = arith.constant 0 : index
    %53 = vector.load %arg4[%c0_37, %52, %c0_38] : memref<1x432x4xf32, #tpu.memory_space<vmem>>, vector<1x384x4xf32>
    %54 = vector.shape_cast %53 : vector<1x384x4xf32> to vector<384x4xf32>
    %c0_39 = arith.constant 0 : index
    %c32 = arith.constant 32 : index
    %55 = vector.load %arg6[%c0_39, %c32] : memref<384x36xf32, #tpu.memory_space<vmem>>, vector<384x4xf32>
    tpu.vector_store %arg6[%c0_39, %c32], %54 {strides = array<i32>} : memref<384x36xf32, #tpu.memory_space<vmem>>, vector<384x4xf32>,
    %c0_40 = arith.constant 0 : index
    %c0_41 = arith.constant 0 : index
    %56 = vector.load %arg2[%c0_40, %c0_41] : memref<8x36xf32, #tpu.memory_space<vmem>>, vector<8x36xf32>
    %c0_42 = arith.constant 0 : index
    %c0_43 = arith.constant 0 : index
    %57 = vector.load %arg6[%c0_42, %c0_43] : memref<384x36xf32, #tpu.memory_space<vmem>>, vector<384x36xf32>
    %cst = arith.constant dense<0.000000e+00> : vector<8x384xf32>
    %58 = tpu.matmul %56, %57, %cst {dimension_numbers = #tpu.dot_dimension_numbers<[1], [1], [0], [0], [0, 0, 1, 0], [], []>, precision = #tpu.contract_precision<fp32>} : vector<8x36xf32>, vector<384x36xf32>, vector<8x384xf32> -> vector<8x384xf32>
    %c0_44 = arith.constant 0 : index
    %c0_45 = arith.constant 0 : index
    %59 = vector.load %arg3[%c0_44, %c0_45] : memref<8x1xf32, #tpu.memory_space<vmem>>, vector<8x1xf32>
    %60 = vector.broadcast %59 : vector<8x1xf32> to vector<8x384xf32>
    %61 = arith.addf %58, %60 : vector<8x384xf32>
    %c0_46 = arith.constant 0 : index
    %c0_47 = arith.constant 0 : index
    %c0_48 = arith.constant 0 : index
    %62 = vector.load %arg5[%c0_46, %c0_47, %c0_48] : memref<1x8x384xf32, #tpu.memory_space<vmem>>, vector<1x8x384xf32>
    %63 = vector.shape_cast %62 : vector<1x8x384xf32> to vector<8x384xf32>
    %64 = vector.shape_cast %61 : vector<8x384xf32> to vector<1x8x384xf32>
    tpu.vector_store %arg5[%c0_46, %c0_47, %c0_48], %64 {strides = array<i32>} : memref<1x8x384xf32, #tpu.memory_space<vmem>>, vector<1x8x384xf32>,
    return
  }
  func.func @transform_0(%arg0: i32, %arg1: i32) -> (i32, i32) {
    %c0_i32 = arith.constant 0 : i32
    %c0_i32_0 = arith.constant 0 : i32
    %c0_i32_1 = arith.constant 0 : i32
    return %c0_i32, %c0_i32_0 : i32, i32
  }
  func.func @transform_1(%arg0: i32, %arg1: i32) -> (i32, i32) {
    %c0_i32 = arith.constant 0 : i32
    %c0_i32_0 = arith.constant 0 : i32
    %c0_i32_1 = arith.constant 0 : i32
    return %c0_i32, %c0_i32_0 : i32, i32
  }
  func.func @transform_2(%arg0: i32, %arg1: i32) -> (i32, i32, i32) {
    %c0_i32 = arith.constant 0 : i32
    %c0_i32_0 = arith.constant 0 : i32
    %c0_i32_1 = arith.constant 0 : i32
    return %arg0, %c0_i32, %c0_i32_0 : i32, i32, i32
  }
  func.func @transform_3(%arg0: i32, %arg1: i32) -> (i32, i32, i32) {
    %c0_i32 = arith.constant 0 : i32
    %c0_i32_0 = arith.constant 0 : i32
    return %arg0, %c0_i32, %arg1 : i32, i32, i32
  }
}

</mosaic_0001>

<llo_original>
// kernel: my_conv2d.1
$region0: #{my_conv2d.1}
  #allocation0 [shape = 'u32[]', space=smem, size = 0x4, offset = 0x4, fixed_abs, tag = 'smem constant byte address 0x4 - core index']
  #allocation1 [shape = 'u32[144,128]{1,0:T(1,128)}', space=vmem, size = 0x12000, scoped, tag = 'internal scratch']
  #allocation2 [shape = 'f32[384,36]{1,0:T(8,128)}', space=vmem, size = 0x30000, scoped, tag = 'scratch operand']
  %s0 = inlined_call_operand.vmem [shape: f32[8,36], index: 0, kind: input, shape index: {}]
  %s1 = inlined_call_operand.vmem [shape: f32[8,1], index: 1, kind: input, shape index: {}]
  %s2 = inlined_call_operand.vmem [shape: f32[2,432,4], index: 2, kind: input, shape index: {}]
  %s3 = inlined_call_operand.vmem [shape: f32[2,8,384], index: 3, kind: output, shape index: {}]
  %s4 = sld [smem:[#allocation0]]
  $region45: #{my_conv2d.1} parent=0
    _
  %s6 = ssub.s32 1, %s4
  %s7 = scalar_select 0, %s6, %s4
  loop: start=0, step=1, limit=4
  $region2: #{my_conv2d.1} parent=0 // loop_pre_header
    _
  $region3: #{my_conv2d.1} parent=0 // loop_header
    %s9 = sphi 0, %s13
    %p10 = scmp.ge.s32.totalorder %s9, 4
    %s16 = sphi 0, %s28
    %s17 = sphi 0, %s24
    %s18 = sphi 0, %s16
    %s19 = sphi 0, %s17
    %s20 = sphi 0, %s18
    %s21 = sphi 0, %s19
    %s29 = sphi 0, %s29
    %s31 = sphi 0, %s29
    %s32 = sphi 0, %s31
    %s46 = sphi 0, %s32
    %s50 = sphi 0, %s50
    %s52 = sphi 0, %s50
    %s53 = sphi 0, %s52
    %s67 = sphi 0, %s53
    %s73 = sphi 0, %s75
    %s76 = sphi 0, %s73
    %s77 = sphi 0, %s76
    %s93 = sphi 0, %s77
    %s101 = sphi 0, %s103
    %s104 = sphi 0, %s101
    %s105 = sphi 0, %s104
    %s121 = sphi 0, %s105
  $region4: #{my_conv2d.1} parent=0 // loop_header_branch
    %12 = sbr.rel (%p10) target = $region8
  $region5: #{my_conv2d.1} parent=0 // loop_body
    %s14 = ssub.s32 %s9, 1
    %s15 = ssub.s32 %s9, 2
    %s22 = sadd.s32 1, %s17
    %p23 = scmp.ge.s32.totalorder %s22, 1
    %s24 = scalar_select %p23, 0, %s22
    %s25 = sadd.s32 1, %s16
    %s26 = scalar_select %p23, %s25, %s16
    %p27 = scmp.ge.s32.totalorder %s26, 2
    %s28 = scalar_select %p27, 0, %s26
    %s30 = sadd.s32 %s29, 1
    %p33 = scmp.eq.s32.totalorder %s9, 1
    %p34 = scmp.ne.s32.totalorder %s29, %s31
    %p35 = scmp.eq.s32.totalorder %s9, 0
    %p36 = por %p34, %p35
    %p37 = scmp.ne.s32.totalorder %s29, %s31
    %p38 = scmp.eq.s32.totalorder %s14, 1
    %p39 = por %p37, %p38
    %p40 = scmp.ne.s32.totalorder %s31, %s32
    %p41 = scmp.eq.s32.totalorder %s14, 0
    %p42 = por %p40, %p41
    %p43 = scmp.ne.s32.totalorder %s31, %s32
    %p44 = scmp.eq.s32.totalorder %s15, 1
    %p45 = por %p43, %p44
    %p47 = scmp.ne.s32.totalorder %s32, %s46
    %p48 = scmp.eq.s32.totalorder %s15, 0
    %p49 = por %p47, %p48
    %s51 = sadd.s32 %s50, 1
    %p54 = scmp.eq.s32.totalorder %s9, 1
    %p55 = scmp.ne.s32.totalorder %s50, %s52
    %p56 = scmp.eq.s32.totalorder %s9, 0
    %p57 = por %p55, %p56
    %p58 = scmp.ne.s32.totalorder %s50, %s52
    %p59 = scmp.eq.s32.totalorder %s14, 1
    %p60 = por %p58, %p59
    %p61 = scmp.ne.s32.totalorder %s52, %s53
    %p62 = scmp.eq.s32.totalorder %s14, 0
    %p63 = por %p61, %p62
    %p64 = scmp.ne.s32.totalorder %s52, %s53
    %p65 = scmp.eq.s32.totalorder %s15, 1
    %p66 = por %p64, %p65
    %p68 = scmp.ne.s32.totalorder %s53, %s67
    %p69 = scmp.eq.s32.totalorder %s15, 0
    %p70 = por %p68, %p69
    %s71 = ssub.s32 %s16, %s28
    %p72 = scmp.eq.s32.totalorder %s71, 0
    %s74 = sadd.s32 %s73, 1
    %s75 = scalar_select %p72, %s73, %s74
    %p78 = pneg %p72
    %p79 = scmp.eq.s32.totalorder %s9, 1
    %p80 = por %p78, %p79
    %p81 = scmp.ne.s32.totalorder %s73, %s76
    %p82 = scmp.eq.s32.totalorder %s9, 0
    %p83 = por %p81, %p82
    %p84 = scmp.ne.s32.totalorder %s73, %s76
    %p85 = scmp.eq.s32.totalorder %s14, 1
    %p86 = por %p84, %p85
    %p87 = scmp.ne.s32.totalorder %s76, %s77
    %p88 = scmp.eq.s32.totalorder %s14, 0
    %p89 = por %p87, %p88
    %p90 = scmp.ne.s32.totalorder %s76, %s77
    %p91 = scmp.eq.s32.totalorder %s15, 1
    %p92 = por %p90, %p91
    %p94 = scmp.ne.s32.totalorder %s77, %s93
    %p95 = scmp.eq.s32.totalorder %s15, 0
    %p96 = por %p94, %p95
    %s97 = ssub.s32 %s16, %s28
    %s98 = ssub.s32 %s17, %s24
    %s99 = sor.u32 %s97, %s98
    %p100 = scmp.eq.s32.totalorder %s99, 0
    %s102 = sadd.s32 %s101, 1
    %s103 = scalar_select %p100, %s101, %s102
    %p106 = pneg %p100
    %p107 = scmp.eq.s32.totalorder %s9, 1
    %p108 = por %p106, %p107
    %p109 = scmp.ne.s32.totalorder %s101, %s104
    %p110 = scmp.eq.s32.totalorder %s9, 0
    %p111 = por %p109, %p110
    %p112 = scmp.ne.s32.totalorder %s101, %s104
    %p113 = scmp.eq.s32.totalorder %s14, 1
    %p114 = por %p112, %p113
    %p115 = scmp.ne.s32.totalorder %s104, %s105
    %p116 = scmp.eq.s32.totalorder %s14, 0
    %p117 = por %p115, %p116
    %p118 = scmp.ne.s32.totalorder %s104, %s105
    %p119 = scmp.eq.s32.totalorder %s15, 1
    %p120 = por %p118, %p119
    %p122 = scmp.ne.s32.totalorder %s105, %s121
    %p123 = scmp.eq.s32.totalorder %s15, 0
    %p124 = por %p122, %p123
    %p125 = scmp.le.s32.totalorder 1, %s9
    %p126 = scmp.lt.s32.totalorder %s9, 3
    %p127 = pnand %p125, %p126
    %p128 = pneg %p127
    // Predicated region
    $region9: #{my_conv2d.1} parent=5 // pred_check
      _
    $region10: #{my_conv2d.1} parent=5 // pred_check_branch
      %130 = sbr.rel (%p127) target = $region12
    $region11: #{my_conv2d.1} parent=5 // pred_region
      %s131 = ssub.s32 %s9, 1
      // Predicated region
      $region13: #{my_conv2d.1} parent=11 // pred_check
        %p132 = pneg %p42
      $region14: #{my_conv2d.1} parent=11 // pred_check_branch
        %134 = sbr.rel (%p132) target = $region16
      $region15: #{my_conv2d.1} parent=11 // pred_region
        _
      $region16: #{my_conv2d.1} parent=11 // pred_fallthru
        _
      // Predicated region
      $region17: #{my_conv2d.1} parent=11 // pred_check
        %p135 = pneg %p63
      $region18: #{my_conv2d.1} parent=11 // pred_check_branch
        %137 = sbr.rel (%p135) target = $region20
      $region19: #{my_conv2d.1} parent=11 // pred_region
        _
      $region20: #{my_conv2d.1} parent=11 // pred_fallthru
        _
    $region12: #{my_conv2d.1} parent=5 // pred_fallthru
      _
    %p138 = scmp.lt.s32.totalorder %s9, 2
    // Predicated region
    $region21: #{my_conv2d.1} parent=5 // pred_check
      %p139 = pneg %p138
    $region22: #{my_conv2d.1} parent=5 // pred_check_branch
      %141 = sbr.rel (%p139) target = $region24
    $region23: #{my_conv2d.1} parent=5 // pred_region
      // Predicated region
      $region25: #{my_conv2d.1} parent=23 // pred_check
        %p142 = pneg %p83
      $region26: #{my_conv2d.1} parent=23 // pred_check_branch
        %144 = sbr.rel (%p142) target = $region28
      $region27: #{my_conv2d.1} parent=23 // pred_region
        %p145 = scmp.lt.s32.totalorder %s16, 1
        %s146 = scalar_select %p145, %s16, 1
        %s147 = smul.addr %s146, 54
        %s148 = smul.addr %s147, 8
        %s149 = scalar_lea.vmem %s2, %s148
      $region28: #{my_conv2d.1} parent=23 // pred_fallthru
        _
    $region24: #{my_conv2d.1} parent=5 // pred_fallthru
      _
    %p150 = scmp.le.s32.totalorder 1, %s9
    %p151 = scmp.lt.s32.totalorder %s9, 3
    %p152 = pnand %p150, %p151
    %p153 = pneg %p152
    // Predicated region
    $region29: #{my_conv2d.1} parent=5 // pred_check
      _
    $region30: #{my_conv2d.1} parent=5 // pred_check_branch
      %155 = sbr.rel (%p152) target = $region32
    $region31: #{my_conv2d.1} parent=5 // pred_region
      %s156 = ssub.s32 %s9, 1
      %p157 = pneg %p42
      %p158 = pneg %p39
      %p159 = pneg %p63
      %p160 = pneg %p60
      %p161 = scmp.lt.s32.totalorder %s18, 1
      %s162 = scalar_select %p161, %s18, 1
      %s163 = smul.addr %s162, 54
      %s164 = smul.addr %s163, 8
      %s165 = scalar_lea.vmem %s2, %s164
      %p166 = pneg %p89
      %p167 = pneg %p86
      %p168 = pneg %p117
      %p169 = pneg %p114
      %s170 = smul.u32 3, %s19
      %p171 = scmp.lt.s32.totalorder %s18, 1
      %s172 = scalar_select %p171, %s18, 1
      %p173 = scmp.lt.s32.totalorder %s170, 2
      %s174 = scalar_select %p173, %s170, 2
      %s175 = smul.addr %s172, 3
      %s176 = sadd.s32 %s174, %s175
      %s177 = smul.addr %s176, 8
      %s178 = scalar_lea.vmem %s3, %s177
      %p179 = scmp.lt.s32.totalorder %s18, 1
      %s180 = scalar_select %p179, %s18, 1
      %s181 = smul.addr %s180, 54
      %s182 = smul.addr %s181, 8
      %s183 = scalar_lea.vmem %s2, %s182
      %s184 = smul.u32 3, %s19
      %p185 = scmp.lt.s32.totalorder %s18, 1
      %s186 = scalar_select %p185, %s18, 1
      %p187 = scmp.lt.s32.totalorder %s184, 2
      %s188 = scalar_select %p187, %s184, 2
      %s189 = smul.addr %s186, 3
      %s190 = sadd.s32 %s188, %s189
      %s191 = smul.addr %s190, 8
      %s192 = scalar_lea.vmem %s3, %s191
      %s193 = smul.u32 3, %s19
      %s194 = smul.u32 %s19, 384
      %s195 = scalar_lea.vmem %s183, %s194
      %v196 = vld [vmem:[%s195] sm:$0xff]
      %v197 = vld [vmem:[%s195 + $0x8] sm:$0xff]
      %v198 = vld [vmem:[%s195 + $0x10] sm:$0xff]
      %v199 = vld [vmem:[%s195 + $0x18] sm:$0xff]
      %v200 = vld [vmem:[%s195 + $0x20] sm:$0xff]
      %v201 = vld [vmem:[%s195 + $0x28] sm:$0xff]
      %v202 = vld [vmem:[%s195 + $0x30] sm:$0xff]
      %v203 = vld [vmem:[%s195 + $0x38] sm:$0xff]
      %v204 = vld [vmem:[%s195 + $0x40] sm:$0xff]
      %v205 = vld [vmem:[%s195 + $0x48] sm:$0xff]
      %v206 = vld [vmem:[%s195 + $0x50] sm:$0xff]
      %v207 = vld [vmem:[%s195 + $0x58] sm:$0xff]
      %v208 = vld [vmem:[%s195 + $0x60] sm:$0xff]
      %v209 = vld [vmem:[%s195 + $0x68] sm:$0xff]
      %v210 = vld [vmem:[%s195 + $0x70] sm:$0xff]
      %v211 = vld [vmem:[%s195 + $0x78] sm:$0xff]
      %v212 = vld [vmem:[%s195 + $0x80] sm:$0xff]
      %v213 = vld [vmem:[%s195 + $0x88] sm:$0xff]
      %v214 = vld [vmem:[%s195 + $0x90] sm:$0xff]
      %v215 = vld [vmem:[%s195 + $0x98] sm:$0xff]
      %v216 = vld [vmem:[%s195 + $0xa0] sm:$0xff]
      %v217 = vld [vmem:[%s195 + $0xa8] sm:$0xff]
      %v218 = vld [vmem:[%s195 + $0xb0] sm:$0xff]
      %v219 = vld [vmem:[%s195 + $0xb8] sm:$0xff]
      %v220 = vld [vmem:[%s195 + $0xc0] sm:$0xff]
      %v221 = vld [vmem:[%s195 + $0xc8] sm:$0xff]
      %v222 = vld [vmem:[%s195 + $0xd0] sm:$0xff]
      %v223 = vld [vmem:[%s195 + $0xd8] sm:$0xff]
      %v224 = vld [vmem:[%s195 + $0xe0] sm:$0xff]
      %v225 = vld [vmem:[%s195 + $0xe8] sm:$0xff]
      %v226 = vld [vmem:[%s195 + $0xf0] sm:$0xff]
      %v227 = vld [vmem:[%s195 + $0xf8] sm:$0xff]
      %v228 = vld [vmem:[%s195 + $0x100] sm:$0xff]
      %v229 = vld [vmem:[%s195 + $0x108] sm:$0xff]
      %v230 = vld [vmem:[%s195 + $0x110] sm:$0xff]
      %v231 = vld [vmem:[%s195 + $0x118] sm:$0xff]
      %v232 = vld [vmem:[%s195 + $0x120] sm:$0xff]
      %v233 = vld [vmem:[%s195 + $0x128] sm:$0xff]
      %v234 = vld [vmem:[%s195 + $0x130] sm:$0xff]
      %v235 = vld [vmem:[%s195 + $0x138] sm:$0xff]
      %v236 = vld [vmem:[%s195 + $0x140] sm:$0xff]
      %v237 = vld [vmem:[%s195 + $0x148] sm:$0xff]
      %v238 = vld [vmem:[%s195 + $0x150] sm:$0xff]
      %v239 = vld [vmem:[%s195 + $0x158] sm:$0xff]
      %v240 = vld [vmem:[%s195 + $0x160] sm:$0xff]
      %v241 = vld [vmem:[%s195 + $0x168] sm:$0xff]
      %v242 = vld [vmem:[%s195 + $0x170] sm:$0xff]
      %v243 = vld [vmem:[%s195 + $0x178] sm:$0xff]
      %vm244 = vcmask 31744
      %245 = vst.msk [vmem:[#allocation2] sm:$0xff] %vm244, %v196
      %246 = vst.msk [vmem:[#allocation2 + $0x8] sm:$0xff] %vm244, %v197
      %247 = vst.msk [vmem:[#allocation2 + $0x10] sm:$0xff] %vm244, %v198
      %248 = vst.msk [vmem:[#allocation2 + $0x18] sm:$0xff] %vm244, %v199
      %249 = vst.msk [vmem:[#allocation2 + $0x20] sm:$0xff] %vm244, %v200
      %250 = vst.msk [vmem:[#allocation2 + $0x28] sm:$0xff] %vm244, %v201
      %251 = vst.msk [vmem:[#allocation2 + $0x30] sm:$0xff] %vm244, %v202
      %252 = vst.msk [vmem:[#allocation2 + $0x38] sm:$0xff] %vm244, %v203
      %253 = vst.msk [vmem:[#allocation2 + $0x40] sm:$0xff] %vm244, %v204
      %254 = vst.msk [vmem:[#allocation2 + $0x48] sm:$0xff] %vm244, %v205
      %255 = vst.msk [vmem:[#allocation2 + $0x50] sm:$0xff] %vm244, %v206
      %256 = vst.msk [vmem:[#allocation2 + $0x58] sm:$0xff] %vm244, %v207
      %257 = vst.msk [vmem:[#allocation2 + $0x60] sm:$0xff] %vm244, %v208
      %258 = vst.msk [vmem:[#allocation2 + $0x68] sm:$0xff] %vm244, %v209
      %259 = vst.msk [vmem:[#allocation2 + $0x70] sm:$0xff] %vm244, %v210
      %260 = vst.msk [vmem:[#allocation2 + $0x78] sm:$0xff] %vm244, %v211
      %261 = vst.msk [vmem:[#allocation2 + $0x80] sm:$0xff] %vm244, %v212
      %262 = vst.msk [vmem:[#allocation2 + $0x88] sm:$0xff] %vm244, %v213
      %263 = vst.msk [vmem:[#allocation2 + $0x90] sm:$0xff] %vm244, %v214
      %264 = vst.msk [vmem:[#allocation2 + $0x98] sm:$0xff] %vm244, %v215
      %265 = vst.msk [vmem:[#allocation2 + $0xa0] sm:$0xff] %vm244, %v216
      %266 = vst.msk [vmem:[#allocation2 + $0xa8] sm:$0xff] %vm244, %v217
      %267 = vst.msk [vmem:[#allocation2 + $0xb0] sm:$0xff] %vm244, %v218
      %268 = vst.msk [vmem:[#allocation2 + $0xb8] sm:$0xff] %vm244, %v219
      %269 = vst.msk [vmem:[#allocation2 + $0xc0] sm:$0xff] %vm244, %v220
      %270 = vst.msk [vmem:[#allocation2 + $0xc8] sm:$0xff] %vm244, %v221
      %271 = vst.msk [vmem:[#allocation2 + $0xd0] sm:$0xff] %vm244, %v222
      %272 = vst.msk [vmem:[#allocation2 + $0xd8] sm:$0xff] %vm244, %v223
      %273 = vst.msk [vmem:[#allocation2 + $0xe0] sm:$0xff] %vm244, %v224
      %274 = vst.msk [vmem:[#allocation2 + $0xe8] sm:$0xff] %vm244, %v225
      %275 = vst.msk [vmem:[#allocation2 + $0xf0] sm:$0xff] %vm244, %v226
      %276 = vst.msk [vmem:[#allocation2 + $0xf8] sm:$0xff] %vm244, %v227
      %277 = vst.msk [vmem:[#allocation2 + $0x100] sm:$0xff] %vm244, %v228
      %278 = vst.msk [vmem:[#allocation2 + $0x108] sm:$0xff] %vm244, %v229
      %279 = vst.msk [vmem:[#allocation2 + $0x110] sm:$0xff] %vm244, %v230
      %280 = vst.msk [vmem:[#allocation2 + $0x118] sm:$0xff] %vm244, %v231
      %281 = vst.msk [vmem:[#allocation2 + $0x120] sm:$0xff] %vm244, %v232
      %282 = vst.msk [vmem:[#allocation2 + $0x128] sm:$0xff] %vm244, %v233
      %283 = vst.msk [vmem:[#allocation2 + $0x130] sm:$0xff] %vm244, %v234
      %284 = vst.msk [vmem:[#allocation2 + $0x138] sm:$0xff] %vm244, %v235
      %285 = vst.msk [vmem:[#allocation2 + $0x140] sm:$0xff] %vm244, %v236
      %286 = vst.msk [vmem:[#allocation2 + $0x148] sm:$0xff] %vm244, %v237
      %287 = vst.msk [vmem:[#allocation2 + $0x150] sm:$0xff] %vm244, %v238
      %288 = vst.msk [vmem:[#allocation2 + $0x158] sm:$0xff] %vm244, %v239
      %289 = vst.msk [vmem:[#allocation2 + $0x160] sm:$0xff] %vm244, %v240
      %290 = vst.msk [vmem:[#allocation2 + $0x168] sm:$0xff] %vm244, %v241
      %291 = vst.msk [vmem:[#allocation2 + $0x170] sm:$0xff] %vm244, %v242
      %292 = vst.msk [vmem:[#allocation2 + $0x178] sm:$0xff] %vm244, %v243
      %s293 = sadd.s32 %s194, 1
      %s294 = scalar_lea.vmem %s183, %s293
      %v295 = vld [vmem:[%s294] sm:$0xff]
      %v296 = vld [vmem:[%s294 + $0x8] sm:$0xff]
      %v297 = vld [vmem:[%s294 + $0x10] sm:$0xff]
      %v298 = vld [vmem:[%s294 + $0x18] sm:$0xff]
      %v299 = vld [vmem:[%s294 + $0x20] sm:$0xff]
      %v300 = vld [vmem:[%s294 + $0x28] sm:$0xff]
      %v301 = vld [vmem:[%s294 + $0x30] sm:$0xff]
      %v302 = vld [vmem:[%s294 + $0x38] sm:$0xff]
      %v303 = vld [vmem:[%s294 + $0x40] sm:$0xff]
      %v304 = vld [vmem:[%s294 + $0x48] sm:$0xff]
      %v305 = vld [vmem:[%s294 + $0x50] sm:$0xff]
      %v306 = vld [vmem:[%s294 + $0x58] sm:$0xff]
      %v307 = vld [vmem:[%s294 + $0x60] sm:$0xff]
      %v308 = vld [vmem:[%s294 + $0x68] sm:$0xff]
      %v309 = vld [vmem:[%s294 + $0x70] sm:$0xff]
      %v310 = vld [vmem:[%s294 + $0x78] sm:$0xff]
      %v311 = vld [vmem:[%s294 + $0x80] sm:$0xff]
      %v312 = vld [vmem:[%s294 + $0x88] sm:$0xff]
      %v313 = vld [vmem:[%s294 + $0x90] sm:$0xff]
      %v314 = vld [vmem:[%s294 + $0x98] sm:$0xff]
      %v315 = vld [vmem:[%s294 + $0xa0] sm:$0xff]
      %v316 = vld [vmem:[%s294 + $0xa8] sm:$0xff]
      %v317 = vld [vmem:[%s294 + $0xb0] sm:$0xff]
      %v318 = vld [vmem:[%s294 + $0xb8] sm:$0xff]
      %v319 = vld [vmem:[%s294 + $0xc0] sm:$0xff]
      %v320 = vld [vmem:[%s294 + $0xc8] sm:$0xff]
      %v321 = vld [vmem:[%s294 + $0xd0] sm:$0xff]
      %v322 = vld [vmem:[%s294 + $0xd8] sm:$0xff]
      %v323 = vld [vmem:[%s294 + $0xe0] sm:$0xff]
      %v324 = vld [vmem:[%s294 + $0xe8] sm:$0xff]
      %v325 = vld [vmem:[%s294 + $0xf0] sm:$0xff]
      %v326 = vld [vmem:[%s294 + $0xf8] sm:$0xff]
      %v327 = vld [vmem:[%s294 + $0x100] sm:$0xff]
      %v328 = vld [vmem:[%s294 + $0x108] sm:$0xff]
      %v329 = vld [vmem:[%s294 + $0x110] sm:$0xff]
      %v330 = vld [vmem:[%s294 + $0x118] sm:$0xff]
      %v331 = vld [vmem:[%s294 + $0x120] sm:$0xff]
      %v332 = vld [vmem:[%s294 + $0x128] sm:$0xff]
      %v333 = vld [vmem:[%s294 + $0x130] sm:$0xff]
      %v334 = vld [vmem:[%s294 + $0x138] sm:$0xff]
      %v335 = vld [vmem:[%s294 + $0x140] sm:$0xff]
      %v336 = vld [vmem:[%s294 + $0x148] sm:$0xff]
      %v337 = vld [vmem:[%s294 + $0x150] sm:$0xff]
      %v338 = vld [vmem:[%s294 + $0x158] sm:$0xff]
      %v339 = vld [vmem:[%s294 + $0x160] sm:$0xff]
      %v340 = vld [vmem:[%s294 + $0x168] sm:$0xff]
      %v341 = vld [vmem:[%s294 + $0x170] sm:$0xff]
      %v342 = vld [vmem:[%s294 + $0x178] sm:$0xff]
      %391 = vrot.lane.b32.xlu0 %v295, 4
      %v392 = vpop.permute.xlu0 %391
      %393 = vrot.lane.b32.xlu0 %v296, 4
      %v394 = vpop.permute.xlu0 %393
      %395 = vrot.lane.b32.xlu0 %v297, 4
      %v396 = vpop.permute.xlu0 %395
      %397 = vrot.lane.b32.xlu0 %v298, 4
      %v398 = vpop.permute.xlu0 %397
      %399 = vrot.lane.b32.xlu0 %v299, 4
      %v400 = vpop.permute.xlu0 %399
      %401 = vrot.lane.b32.xlu0 %v300, 4
      %v402 = vpop.permute.xlu0 %401
      %403 = vrot.lane.b32.xlu0 %v301, 4
      %v404 = vpop.permute.xlu0 %403
      %405 = vrot.lane.b32.xlu0 %v302, 4
      %v406 = vpop.permute.xlu0 %405
      %407 = vrot.lane.b32.xlu0 %v303, 4
      %v408 = vpop.permute.xlu0 %407
      %409 = vrot.lane.b32.xlu0 %v304, 4
      %v410 = vpop.permute.xlu0 %409
      %411 = vrot.lane.b32.xlu0 %v305, 4
      %v412 = vpop.permute.xlu0 %411
      %413 = vrot.lane.b32.xlu0 %v306, 4
      %v414 = vpop.permute.xlu0 %413
      %415 = vrot.lane.b32.xlu0 %v307, 4
      %v416 = vpop.permute.xlu0 %415
      %417 = vrot.lane.b32.xlu0 %v308, 4
      %v418 = vpop.permute.xlu0 %417
      %419 = vrot.lane.b32.xlu0 %v309, 4
      %v420 = vpop.permute.xlu0 %419
      %421 = vrot.lane.b32.xlu0 %v310, 4
      %v422 = vpop.permute.xlu0 %421
      %423 = vrot.lane.b32.xlu0 %v311, 4
      %v424 = vpop.permute.xlu0 %423
      %425 = vrot.lane.b32.xlu0 %v312, 4
      %v426 = vpop.permute.xlu0 %425
      %427 = vrot.lane.b32.xlu0 %v313, 4
      %v428 = vpop.permute.xlu0 %427
      %429 = vrot.lane.b32.xlu0 %v314, 4
      %v430 = vpop.permute.xlu0 %429
      %431 = vrot.lane.b32.xlu0 %v315, 4
      %v432 = vpop.permute.xlu0 %431
      %433 = vrot.lane.b32.xlu0 %v316, 4
      %v434 = vpop.permute.xlu0 %433
      %435 = vrot.lane.b32.xlu0 %v317, 4
      %v436 = vpop.permute.xlu0 %435
      %437 = vrot.lane.b32.xlu0 %v318, 4
      %v438 = vpop.permute.xlu0 %437
      %439 = vrot.lane.b32.xlu0 %v319, 4
      %v440 = vpop.permute.xlu0 %439
      %441 = vrot.lane.b32.xlu0 %v320, 4
      %v442 = vpop.permute.xlu0 %441
      %443 = vrot.lane.b32.xlu0 %v321, 4
      %v444 = vpop.permute.xlu0 %443
      %445 = vrot.lane.b32.xlu0 %v322, 4
      %v446 = vpop.permute.xlu0 %445
      %447 = vrot.lane.b32.xlu0 %v323, 4
      %v448 = vpop.permute.xlu0 %447
      %449 = vrot.lane.b32.xlu0 %v324, 4
      %v450 = vpop.permute.xlu0 %449
      %451 = vrot.lane.b32.xlu0 %v325, 4
      %v452 = vpop.permute.xlu0 %451
      %453 = vrot.lane.b32.xlu0 %v326, 4
      %v454 = vpop.permute.xlu0 %453
      %455 = vrot.lane.b32.xlu0 %v327, 4
      %v456 = vpop.permute.xlu0 %455
      %457 = vrot.lane.b32.xlu0 %v328, 4
      %v458 = vpop.permute.xlu0 %457
      %459 = vrot.lane.b32.xlu0 %v329, 4
      %v460 = vpop.permute.xlu0 %459
      %461 = vrot.lane.b32.xlu0 %v330, 4
      %v462 = vpop.permute.xlu0 %461
      %463 = vrot.lane.b32.xlu0 %v331, 4
      %v464 = vpop.permute.xlu0 %463
      %465 = vrot.lane.b32.xlu0 %v332, 4
      %v466 = vpop.permute.xlu0 %465
      %467 = vrot.lane.b32.xlu0 %v333, 4
      %v468 = vpop.permute.xlu0 %467
      %469 = vrot.lane.b32.xlu0 %v334, 4
      %v470 = vpop.permute.xlu0 %469
      %471 = vrot.lane.b32.xlu0 %v335, 4
      %v472 = vpop.permute.xlu0 %471
      %473 = vrot.lane.b32.xlu0 %v336, 4
      %v474 = vpop.permute.xlu0 %473
      %475 = vrot.lane.b32.xlu0 %v337, 4
      %v476 = vpop.permute.xlu0 %475
      %477 = vrot.lane.b32.xlu0 %v338, 4
      %v478 = vpop.permute.xlu0 %477
      %479 = vrot.lane.b32.xlu0 %v339, 4
      %v480 = vpop.permute.xlu0 %479
      %481 = vrot.lane.b32.xlu0 %v340, 4
      %v482 = vpop.permute.xlu0 %481
      %483 = vrot.lane.b32.xlu0 %v341, 4
      %v484 = vpop.permute.xlu0 %483
      %485 = vrot.lane.b32.xlu0 %v342, 4
      %v486 = vpop.permute.xlu0 %485
      %vm535 = vcmask 64544
      %536 = vst.msk [vmem:[#allocation2] sm:$0xff] %vm535, %v392
      %537 = vst.msk [vmem:[#allocation2 + $0x8] sm:$0xff] %vm535, %v394
      %538 = vst.msk [vmem:[#allocation2 + $0x10] sm:$0xff] %vm535, %v396
      %539 = vst.msk [vmem:[#allocation2 + $0x18] sm:$0xff] %vm535, %v398
      %540 = vst.msk [vmem:[#allocation2 + $0x20] sm:$0xff] %vm535, %v400
      %541 = vst.msk [vmem:[#allocation2 + $0x28] sm:$0xff] %vm535, %v402
      %542 = vst.msk [vmem:[#allocation2 + $0x30] sm:$0xff] %vm535, %v404
      %543 = vst.msk [vmem:[#allocation2 + $0x38] sm:$0xff] %vm535, %v406
      %544 = vst.msk [vmem:[#allocation2 + $0x40] sm:$0xff] %vm535, %v408
      %545 = vst.msk [vmem:[#allocation2 + $0x48] sm:$0xff] %vm535, %v410
      %546 = vst.msk [vmem:[#allocation2 + $0x50] sm:$0xff] %vm535, %v412
      %547 = vst.msk [vmem:[#allocation2 + $0x58] sm:$0xff] %vm535, %v414
      %548 = vst.msk [vmem:[#allocation2 + $0x60] sm:$0xff] %vm535, %v416
      %549 = vst.msk [vmem:[#allocation2 + $0x68] sm:$0xff] %vm535, %v418
      %550 = vst.msk [vmem:[#allocation2 + $0x70] sm:$0xff] %vm535, %v420
      %551 = vst.msk [vmem:[#allocation2 + $0x78] sm:$0xff] %vm535, %v422
      %552 = vst.msk [vmem:[#allocation2 + $0x80] sm:$0xff] %vm535, %v424
      %553 = vst.msk [vmem:[#allocation2 + $0x88] sm:$0xff] %vm535, %v426
      %554 = vst.msk [vmem:[#allocation2 + $0x90] sm:$0xff] %vm535, %v428
      %555 = vst.msk [vmem:[#allocation2 + $0x98] sm:$0xff] %vm535, %v430
      %556 = vst.msk [vmem:[#allocation2 + $0xa0] sm:$0xff] %vm535, %v432
      %557 = vst.msk [vmem:[#allocation2 + $0xa8] sm:$0xff] %vm535, %v434
      %558 = vst.msk [vmem:[#allocation2 + $0xb0] sm:$0xff] %vm535, %v436
      %559 = vst.msk [vmem:[#allocation2 + $0xb8] sm:$0xff] %vm535, %v438
      %560 = vst.msk [vmem:[#allocation2 + $0xc0] sm:$0xff] %vm535, %v440
      %561 = vst.msk [vmem:[#allocation2 + $0xc8] sm:$0xff] %vm535, %v442
      %562 = vst.msk [vmem:[#allocation2 + $0xd0] sm:$0xff] %vm535, %v444
      %563 = vst.msk [vmem:[#allocation2 + $0xd8] sm:$0xff] %vm535, %v446
      %564 = vst.msk [vmem:[#allocation2 + $0xe0] sm:$0xff] %vm535, %v448
      %565 = vst.msk [vmem:[#allocation2 + $0xe8] sm:$0xff] %vm535, %v450
      %566 = vst.msk [vmem:[#allocation2 + $0xf0] sm:$0xff] %vm535, %v452
      %567 = vst.msk [vmem:[#allocation2 + $0xf8] sm:$0xff] %vm535, %v454
      %568 = vst.msk [vmem:[#allocation2 + $0x100] sm:$0xff] %vm535, %v456
      %569 = vst.msk [vmem:[#allocation2 + $0x108] sm:$0xff] %vm535, %v458
      %570 = vst.msk [vmem:[#allocation2 + $0x110] sm:$0xff] %vm535, %v460
      %571 = vst.msk [vmem:[#allocation2 + $0x118] sm:$0xff] %vm535, %v462
      %572 = vst.msk [vmem:[#allocation2 + $0x120] sm:$0xff] %vm535, %v464
      %573 = vst.msk [vmem:[#allocation2 + $0x128] sm:$0xff] %vm535, %v466
      %574 = vst.msk [vmem:[#allocation2 + $0x130] sm:$0xff] %vm535, %v468
      %575 = vst.msk [vmem:[#allocation2 + $0x138] sm:$0xff] %vm535, %v470
      %576 = vst.msk [vmem:[#allocation2 + $0x140] sm:$0xff] %vm535, %v472
      %577 = vst.msk [vmem:[#allocation2 + $0x148] sm:$0xff] %vm535, %v474
      %578 = vst.msk [vmem:[#allocation2 + $0x150] sm:$0xff] %vm535, %v476
      %579 = vst.msk [vmem:[#allocation2 + $0x158] sm:$0xff] %vm535, %v478
      %580 = vst.msk [vmem:[#allocation2 + $0x160] sm:$0xff] %vm535, %v480
      %581 = vst.msk [vmem:[#allocation2 + $0x168] sm:$0xff] %vm535, %v482
      %582 = vst.msk [vmem:[#allocation2 + $0x170] sm:$0xff] %vm535, %v484
      %583 = vst.msk [vmem:[#allocation2 + $0x178] sm:$0xff] %vm535, %v486
      %s584 = sadd.s32 %s194, 2
      %s585 = scalar_lea.vmem %s183, %s584
      %v586 = vld [vmem:[%s585] sm:$0xff]
      %v587 = vld [vmem:[%s585 + $0x8] sm:$0xff]
      %v588 = vld [vmem:[%s585 + $0x10] sm:$0xff]
      %v589 = vld [vmem:[%s585 + $0x18] sm:$0xff]
      %v590 = vld [vmem:[%s585 + $0x20] sm:$0xff]
      %v591 = vld [vmem:[%s585 + $0x28] sm:$0xff]
      %v592 = vld [vmem:[%s585 + $0x30] sm:$0xff]
      %v593 = vld [vmem:[%s585 + $0x38] sm:$0xff]
      %v594 = vld [vmem:[%s585 + $0x40] sm:$0xff]
      %v595 = vld [vmem:[%s585 + $0x48] sm:$0xff]
      %v596 = vld [vmem:[%s585 + $0x50] sm:$0xff]
      %v597 = vld [vmem:[%s585 + $0x58] sm:$0xff]
      %v598 = vld [vmem:[%s585 + $0x60] sm:$0xff]
      %v599 = vld [vmem:[%s585 + $0x68] sm:$0xff]
      %v600 = vld [vmem:[%s585 + $0x70] sm:$0xff]
      %v601 = vld [vmem:[%s585 + $0x78] sm:$0xff]
      %v602 = vld [vmem:[%s585 + $0x80] sm:$0xff]
      %v603 = vld [vmem:[%s585 + $0x88] sm:$0xff]
      %v604 = vld [vmem:[%s585 + $0x90] sm:$0xff]
      %v605 = vld [vmem:[%s585 + $0x98] sm:$0xff]
      %v606 = vld [vmem:[%s585 + $0xa0] sm:$0xff]
      %v607 = vld [vmem:[%s585 + $0xa8] sm:$0xff]
      %v608 = vld [vmem:[%s585 + $0xb0] sm:$0xff]
      %v609 = vld [vmem:[%s585 + $0xb8] sm:$0xff]
      %v610 = vld [vmem:[%s585 + $0xc0] sm:$0xff]
      %v611 = vld [vmem:[%s585 + $0xc8] sm:$0xff]
      %v612 = vld [vmem:[%s585 + $0xd0] sm:$0xff]
      %v613 = vld [vmem:[%s585 + $0xd8] sm:$0xff]
      %v614 = vld [vmem:[%s585 + $0xe0] sm:$0xff]
      %v615 = vld [vmem:[%s585 + $0xe8] sm:$0xff]
      %v616 = vld [vmem:[%s585 + $0xf0] sm:$0xff]
      %v617 = vld [vmem:[%s585 + $0xf8] sm:$0xff]
      %v618 = vld [vmem:[%s585 + $0x100] sm:$0xff]
      %v619 = vld [vmem:[%s585 + $0x108] sm:$0xff]
      %v620 = vld [vmem:[%s585 + $0x110] sm:$0xff]
      %v621 = vld [vmem:[%s585 + $0x118] sm:$0xff]
      %v622 = vld [vmem:[%s585 + $0x120] sm:$0xff]
      %v623 = vld [vmem:[%s585 + $0x128] sm:$0xff]
      %v624 = vld [vmem:[%s585 + $0x130] sm:$0xff]
      %v625 = vld [vmem:[%s585 + $0x138] sm:$0xff]
      %v626 = vld [vmem:[%s585 + $0x140] sm:$0xff]
      %v627 = vld [vmem:[%s585 + $0x148] sm:$0xff]
      %v628 = vld [vmem:[%s585 + $0x150] sm:$0xff]
      %v629 = vld [vmem:[%s585 + $0x158] sm:$0xff]
      %v630 = vld [vmem:[%s585 + $0x160] sm:$0xff]
      %v631 = vld [vmem:[%s585 + $0x168] sm:$0xff]
      %v632 = vld [vmem:[%s585 + $0x170] sm:$0xff]
      %v633 = vld [vmem:[%s585 + $0x178] sm:$0xff]
      %682 = vrot.lane.b32.xlu0 %v586, 8
      %v683 = vpop.permute.xlu0 %682
      %684 = vrot.lane.b32.xlu0 %v587, 8
      %v685 = vpop.permute.xlu0 %684
      %686 = vrot.lane.b32.xlu0 %v588, 8
      %v687 = vpop.permute.xlu0 %686
      %688 = vrot.lane.b32.xlu0 %v589, 8
      %v689 = vpop.permute.xlu0 %688
      %690 = vrot.lane.b32.xlu0 %v590, 8
      %v691 = vpop.permute.xlu0 %690
      %692 = vrot.lane.b32.xlu0 %v591, 8
      %v693 = vpop.permute.xlu0 %692
      %694 = vrot.lane.b32.xlu0 %v592, 8
      %v695 = vpop.permute.xlu0 %694
      %696 = vrot.lane.b32.xlu0 %v593, 8
      %v697 = vpop.permute.xlu0 %696
      %698 = vrot.lane.b32.xlu0 %v594, 8
      %v699 = vpop.permute.xlu0 %698
      %700 = vrot.lane.b32.xlu0 %v595, 8
      %v701 = vpop.permute.xlu0 %700
      %702 = vrot.lane.b32.xlu0 %v596, 8
      %v703 = vpop.permute.xlu0 %702
      %704 = vrot.lane.b32.xlu0 %v597, 8
      %v705 = vpop.permute.xlu0 %704
      %706 = vrot.lane.b32.xlu0 %v598, 8
      %v707 = vpop.permute.xlu0 %706
      %708 = vrot.lane.b32.xlu0 %v599, 8
      %v709 = vpop.permute.xlu0 %708
      %710 = vrot.lane.b32.xlu0 %v600, 8
      %v711 = vpop.permute.xlu0 %710
      %712 = vrot.lane.b32.xlu0 %v601, 8
      %v713 = vpop.permute.xlu0 %712
      %714 = vrot.lane.b32.xlu0 %v602, 8
      %v715 = vpop.permute.xlu0 %714
      %716 = vrot.lane.b32.xlu0 %v603, 8
      %v717 = vpop.permute.xlu0 %716
      %718 = vrot.lane.b32.xlu0 %v604, 8
      %v719 = vpop.permute.xlu0 %718
      %720 = vrot.lane.b32.xlu0 %v605, 8
      %v721 = vpop.permute.xlu0 %720
      %722 = vrot.lane.b32.xlu0 %v606, 8
      %v723 = vpop.permute.xlu0 %722
      %724 = vrot.lane.b32.xlu0 %v607, 8
      %v725 = vpop.permute.xlu0 %724
      %726 = vrot.lane.b32.xlu0 %v608, 8
      %v727 = vpop.permute.xlu0 %726
      %728 = vrot.lane.b32.xlu0 %v609, 8
      %v729 = vpop.permute.xlu0 %728
      %730 = vrot.lane.b32.xlu0 %v610, 8
      %v731 = vpop.permute.xlu0 %730
      %732 = vrot.lane.b32.xlu0 %v611, 8
      %v733 = vpop.permute.xlu0 %732
      %734 = vrot.lane.b32.xlu0 %v612, 8
      %v735 = vpop.permute.xlu0 %734
      %736 = vrot.lane.b32.xlu0 %v613, 8
      %v737 = vpop.permute.xlu0 %736
      %738 = vrot.lane.b32.xlu0 %v614, 8
      %v739 = vpop.permute.xlu0 %738
      %740 = vrot.lane.b32.xlu0 %v615, 8
      %v741 = vpop.permute.xlu0 %740
      %742 = vrot.lane.b32.xlu0 %v616, 8
      %v743 = vpop.permute.xlu0 %742
      %744 = vrot.lane.b32.xlu0 %v617, 8
      %v745 = vpop.permute.xlu0 %744
      %746 = vrot.lane.b32.xlu0 %v618, 8
      %v747 = vpop.permute.xlu0 %746
      %748 = vrot.lane.b32.xlu0 %v619, 8
      %v749 = vpop.permute.xlu0 %748
      %750 = vrot.lane.b32.xlu0 %v620, 8
      %v751 = vpop.permute.xlu0 %750
      %752 = vrot.lane.b32.xlu0 %v621, 8
      %v753 = vpop.permute.xlu0 %752
      %754 = vrot.lane.b32.xlu0 %v622, 8
      %v755 = vpop.permute.xlu0 %754
      %756 = vrot.lane.b32.xlu0 %v623, 8
      %v757 = vpop.permute.xlu0 %756
      %758 = vrot.lane.b32.xlu0 %v624, 8
      %v759 = vpop.permute.xlu0 %758
      %760 = vrot.lane.b32.xlu0 %v625, 8
      %v761 = vpop.permute.xlu0 %760
      %762 = vrot.lane.b32.xlu0 %v626, 8
      %v763 = vpop.permute.xlu0 %762
      %764 = vrot.lane.b32.xlu0 %v627, 8
      %v765 = vpop.permute.xlu0 %764
      %766 = vrot.lane.b32.xlu0 %v628, 8
      %v767 = vpop.permute.xlu0 %766
      %768 = vrot.lane.b32.xlu0 %v629, 8
      %v769 = vpop.permute.xlu0 %768
      %770 = vrot.lane.b32.xlu0 %v630, 8
      %v771 = vpop.permute.xlu0 %770
      %772 = vrot.lane.b32.xlu0 %v631, 8
      %v773 = vpop.permute.xlu0 %772
      %774 = vrot.lane.b32.xlu0 %v632, 8
      %v775 = vpop.permute.xlu0 %774
      %776 = vrot.lane.b32.xlu0 %v633, 8
      %v777 = vpop.permute.xlu0 %776
      %vm826 = vcmask 97344
      %827 = vst.msk [vmem:[#allocation2] sm:$0xff] %vm826, %v683
      %828 = vst.msk [vmem:[#allocation2 + $0x8] sm:$0xff] %vm826, %v685
      %829 = vst.msk [vmem:[#allocation2 + $0x10] sm:$0xff] %vm826, %v687
      %830 = vst.msk [vmem:[#allocation2 + $0x18] sm:$0xff] %vm826, %v689
      %831 = vst.msk [vmem:[#allocation2 + $0x20] sm:$0xff] %vm826, %v691
      %832 = vst.msk [vmem:[#allocation2 + $0x28] sm:$0xff] %vm826, %v693
      %833 = vst.msk [vmem:[#allocation2 + $0x30] sm:$0xff] %vm826, %v695
      %834 = vst.msk [vmem:[#allocation2 + $0x38] sm:$0xff] %vm826, %v697
      %835 = vst.msk [vmem:[#allocation2 + $0x40] sm:$0xff] %vm826, %v699
      %836 = vst.msk [vmem:[#allocation2 + $0x48] sm:$0xff] %vm826, %v701
      %837 = vst.msk [vmem:[#allocation2 + $0x50] sm:$0xff] %vm826, %v703
      %838 = vst.msk [vmem:[#allocation2 + $0x58] sm:$0xff] %vm826, %v705
      %839 = vst.msk [vmem:[#allocation2 + $0x60] sm:$0xff] %vm826, %v707
      %840 = vst.msk [vmem:[#allocation2 + $0x68] sm:$0xff] %vm826, %v709
      %841 = vst.msk [vmem:[#allocation2 + $0x70] sm:$0xff] %vm826, %v711
      %842 = vst.msk [vmem:[#allocation2 + $0x78] sm:$0xff] %vm826, %v713
      %843 = vst.msk [vmem:[#allocation2 + $0x80] sm:$0xff] %vm826, %v715
      %844 = vst.msk [vmem:[#allocation2 + $0x88] sm:$0xff] %vm826, %v717
      %845 = vst.msk [vmem:[#allocation2 + $0x90] sm:$0xff] %vm826, %v719
      %846 = vst.msk [vmem:[#allocation2 + $0x98] sm:$0xff] %vm826, %v721
      %847 = vst.msk [vmem:[#allocation2 + $0xa0] sm:$0xff] %vm826, %v723
      %848 = vst.msk [vmem:[#allocation2 + $0xa8] sm:$0xff] %vm826, %v725
      %849 = vst.msk [vmem:[#allocation2 + $0xb0] sm:$0xff] %vm826, %v727
      %850 = vst.msk [vmem:[#allocation2 + $0xb8] sm:$0xff] %vm826, %v729
      %851 = vst.msk [vmem:[#allocation2 + $0xc0] sm:$0xff] %vm826, %v731
      %852 = vst.msk [vmem:[#allocation2 + $0xc8] sm:$0xff] %vm826, %v733
      %853 = vst.msk [vmem:[#allocation2 + $0xd0] sm:$0xff] %vm826, %v735
      %854 = vst.msk [vmem:[#allocation2 + $0xd8] sm:$0xff] %vm826, %v737
      %855 = vst.msk [vmem:[#allocation2 + $0xe0] sm:$0xff] %vm826, %v739
      %856 = vst.msk [vmem:[#allocation2 + $0xe8] sm:$0xff] %vm826, %v741
      %857 = vst.msk [vmem:[#allocation2 + $0xf0] sm:$0xff] %vm826, %v743
      %858 = vst.msk [vmem:[#allocation2 + $0xf8] sm:$0xff] %vm826, %v745
      %859 = vst.msk [vmem:[#allocation2 + $0x100] sm:$0xff] %vm826, %v747
      %860 = vst.msk [vmem:[#allocation2 + $0x108] sm:$0xff] %vm826, %v749
      %861 = vst.msk [vmem:[#allocation2 + $0x110] sm:$0xff] %vm826, %v751
      %862 = vst.msk [vmem:[#allocation2 + $0x118] sm:$0xff] %vm826, %v753
      %863 = vst.msk [vmem:[#allocation2 + $0x120] sm:$0xff] %vm826, %v755
      %864 = vst.msk [vmem:[#allocation2 + $0x128] sm:$0xff] %vm826, %v757
      %865 = vst.msk [vmem:[#allocation2 + $0x130] sm:$0xff] %vm826, %v759
      %866 = vst.msk [vmem:[#allocation2 + $0x138] sm:$0xff] %vm826, %v761
      %867 = vst.msk [vmem:[#allocation2 + $0x140] sm:$0xff] %vm826, %v763
      %868 = vst.msk [vmem:[#allocation2 + $0x148] sm:$0xff] %vm826, %v765
      %869 = vst.msk [vmem:[#allocation2 + $0x150] sm:$0xff] %vm826, %v767
      %870 = vst.msk [vmem:[#allocation2 + $0x158] sm:$0xff] %vm826, %v769
      %871 = vst.msk [vmem:[#allocation2 + $0x160] sm:$0xff] %vm826, %v771
      %872 = vst.msk [vmem:[#allocation2 + $0x168] sm:$0xff] %vm826, %v773
      %873 = vst.msk [vmem:[#allocation2 + $0x170] sm:$0xff] %vm826, %v775
      %874 = vst.msk [vmem:[#allocation2 + $0x178] sm:$0xff] %vm826, %v777
      %s875 = sadd.s32 %s194, 18
      %s876 = scalar_lea.vmem %s183, %s875
      %v877 = vld [vmem:[%s876] sm:$0xff]
      %v878 = vld [vmem:[%s876 + $0x8] sm:$0xff]
      %v879 = vld [vmem:[%s876 + $0x10] sm:$0xff]
      %v880 = vld [vmem:[%s876 + $0x18] sm:$0xff]
      %v881 = vld [vmem:[%s876 + $0x20] sm:$0xff]
      %v882 = vld [vmem:[%s876 + $0x28] sm:$0xff]
      %v883 = vld [vmem:[%s876 + $0x30] sm:$0xff]
      %v884 = vld [vmem:[%s876 + $0x38] sm:$0xff]
      %v885 = vld [vmem:[%s876 + $0x40] sm:$0xff]
      %v886 = vld [vmem:[%s876 + $0x48] sm:$0xff]
      %v887 = vld [vmem:[%s876 + $0x50] sm:$0xff]
      %v888 = vld [vmem:[%s876 + $0x58] sm:$0xff]
      %v889 = vld [vmem:[%s876 + $0x60] sm:$0xff]
      %v890 = vld [vmem:[%s876 + $0x68] sm:$0xff]
      %v891 = vld [vmem:[%s876 + $0x70] sm:$0xff]
      %v892 = vld [vmem:[%s876 + $0x78] sm:$0xff]
      %v893 = vld [vmem:[%s876 + $0x80] sm:$0xff]
      %v894 = vld [vmem:[%s876 + $0x88] sm:$0xff]
      %v895 = vld [vmem:[%s876 + $0x90] sm:$0xff]
      %v896 = vld [vmem:[%s876 + $0x98] sm:$0xff]
      %v897 = vld [vmem:[%s876 + $0xa0] sm:$0xff]
      %v898 = vld [vmem:[%s876 + $0xa8] sm:$0xff]
      %v899 = vld [vmem:[%s876 + $0xb0] sm:$0xff]
      %v900 = vld [vmem:[%s876 + $0xb8] sm:$0xff]
      %v901 = vld [vmem:[%s876 + $0xc0] sm:$0xff]
      %v902 = vld [vmem:[%s876 + $0xc8] sm:$0xff]
      %v903 = vld [vmem:[%s876 + $0xd0] sm:$0xff]
      %v904 = vld [vmem:[%s876 + $0xd8] sm:$0xff]
      %v905 = vld [vmem:[%s876 + $0xe0] sm:$0xff]
      %v906 = vld [vmem:[%s876 + $0xe8] sm:$0xff]
      %v907 = vld [vmem:[%s876 + $0xf0] sm:$0xff]
      %v908 = vld [vmem:[%s876 + $0xf8] sm:$0xff]
      %v909 = vld [vmem:[%s876 + $0x100] sm:$0xff]
      %v910 = vld [vmem:[%s876 + $0x108] sm:$0xff]
      %v911 = vld [vmem:[%s876 + $0x110] sm:$0xff]
      %v912 = vld [vmem:[%s876 + $0x118] sm:$0xff]
      %v913 = vld [vmem:[%s876 + $0x120] sm:$0xff]
      %v914 = vld [vmem:[%s876 + $0x128] sm:$0xff]
      %v915 = vld [vmem:[%s876 + $0x130] sm:$0xff]
      %v916 = vld [vmem:[%s876 + $0x138] sm:$0xff]
      %v917 = vld [vmem:[%s876 + $0x140] sm:$0xff]
      %v918 = vld [vmem:[%s876 + $0x148] sm:$0xff]
      %v919 = vld [vmem:[%s876 + $0x150] sm:$0xff]
      %v920 = vld [vmem:[%s876 + $0x158] sm:$0xff]
      %v921 = vld [vmem:[%s876 + $0x160] sm:$0xff]
      %v922 = vld [vmem:[%s876 + $0x168] sm:$0xff]
      %v923 = vld [vmem:[%s876 + $0x170] sm:$0xff]
      %v924 = vld [vmem:[%s876 + $0x178] sm:$0xff]
      %973 = vrot.lane.b32.xlu0 %v877, 12
      %v974 = vpop.permute.xlu0 %973
      %975 = vrot.lane.b32.xlu0 %v878, 12
      %v976 = vpop.permute.xlu0 %975
      %977 = vrot.lane.b32.xlu0 %v879, 12
      %v978 = vpop.permute.xlu0 %977
      %979 = vrot.lane.b32.xlu0 %v880, 12
      %v980 = vpop.permute.xlu0 %979
      %981 = vrot.lane.b32.xlu0 %v881, 12
      %v982 = vpop.permute.xlu0 %981
      %983 = vrot.lane.b32.xlu0 %v882, 12
      %v984 = vpop.permute.xlu0 %983
      %985 = vrot.lane.b32.xlu0 %v883, 12
      %v986 = vpop.permute.xlu0 %985
      %987 = vrot.lane.b32.xlu0 %v884, 12
      %v988 = vpop.permute.xlu0 %987
      %989 = vrot.lane.b32.xlu0 %v885, 12
      %v990 = vpop.permute.xlu0 %989
      %991 = vrot.lane.b32.xlu0 %v886, 12
      %v992 = vpop.permute.xlu0 %991
      %993 = vrot.lane.b32.xlu0 %v887, 12
      %v994 = vpop.permute.xlu0 %993
      %995 = vrot.lane.b32.xlu0 %v888, 12
      %v996 = vpop.permute.xlu0 %995
      %997 = vrot.lane.b32.xlu0 %v889, 12
      %v998 = vpop.permute.xlu0 %997
      %999 = vrot.lane.b32.xlu0 %v890, 12
      %v1000 = vpop.permute.xlu0 %999
      %1001 = vrot.lane.b32.xlu0 %v891, 12
      %v1002 = vpop.permute.xlu0 %1001
      %1003 = vrot.lane.b32.xlu0 %v892, 12
      %v1004 = vpop.permute.xlu0 %1003
      %1005 = vrot.lane.b32.xlu0 %v893, 12
      %v1006 = vpop.permute.xlu0 %1005
      %1007 = vrot.lane.b32.xlu0 %v894, 12
      %v1008 = vpop.permute.xlu0 %1007
      %1009 = vrot.lane.b32.xlu0 %v895, 12
      %v1010 = vpop.permute.xlu0 %1009
      %1011 = vrot.lane.b32.xlu0 %v896, 12
      %v1012 = vpop.permute.xlu0 %1011
      %1013 = vrot.lane.b32.xlu0 %v897, 12
      %v1014 = vpop.permute.xlu0 %1013
      %1015 = vrot.lane.b32.xlu0 %v898, 12
      %v1016 = vpop.permute.xlu0 %1015
      %1017 = vrot.lane.b32.xlu0 %v899, 12
      %v1018 = vpop.permute.xlu0 %1017
      %1019 = vrot.lane.b32.xlu0 %v900, 12
      %v1020 = vpop.permute.xlu0 %1019
      %1021 = vrot.lane.b32.xlu0 %v901, 12
      %v1022 = vpop.permute.xlu0 %1021
      %1023 = vrot.lane.b32.xlu0 %v902, 12
      %v1024 = vpop.permute.xlu0 %1023
      %1025 = vrot.lane.b32.xlu0 %v903, 12
      %v1026 = vpop.permute.xlu0 %1025
      %1027 = vrot.lane.b32.xlu0 %v904, 12
      %v1028 = vpop.permute.xlu0 %1027
      %1029 = vrot.lane.b32.xlu0 %v905, 12
      %v1030 = vpop.permute.xlu0 %1029
      %1031 = vrot.lane.b32.xlu0 %v906, 12
      %v1032 = vpop.permute.xlu0 %1031
      %1033 = vrot.lane.b32.xlu0 %v907, 12
      %v1034 = vpop.permute.xlu0 %1033
      %1035 = vrot.lane.b32.xlu0 %v908, 12
      %v1036 = vpop.permute.xlu0 %1035
      %1037 = vrot.lane.b32.xlu0 %v909, 12
      %v1038 = vpop.permute.xlu0 %1037
      %1039 = vrot.lane.b32.xlu0 %v910, 12
      %v1040 = vpop.permute.xlu0 %1039
      %1041 = vrot.lane.b32.xlu0 %v911, 12
      %v1042 = vpop.permute.xlu0 %1041
      %1043 = vrot.lane.b32.xlu0 %v912, 12
      %v1044 = vpop.permute.xlu0 %1043
      %1045 = vrot.lane.b32.xlu0 %v913, 12
      %v1046 = vpop.permute.xlu0 %1045
      %1047 = vrot.lane.b32.xlu0 %v914, 12
      %v1048 = vpop.permute.xlu0 %1047
      %1049 = vrot.lane.b32.xlu0 %v915, 12
      %v1050 = vpop.permute.xlu0 %1049
      %1051 = vrot.lane.b32.xlu0 %v916, 12
      %v1052 = vpop.permute.xlu0 %1051
      %1053 = vrot.lane.b32.xlu0 %v917, 12
      %v1054 = vpop.permute.xlu0 %1053
      %1055 = vrot.lane.b32.xlu0 %v918, 12
      %v1056 = vpop.permute.xlu0 %1055
      %1057 = vrot.lane.b32.xlu0 %v919, 12
      %v1058 = vpop.permute.xlu0 %1057
      %1059 = vrot.lane.b32.xlu0 %v920, 12
      %v1060 = vpop.permute.xlu0 %1059
      %1061 = vrot.lane.b32.xlu0 %v921, 12
      %v1062 = vpop.permute.xlu0 %1061
      %1063 = vrot.lane.b32.xlu0 %v922, 12
      %v1064 = vpop.permute.xlu0 %1063
      %1065 = vrot.lane.b32.xlu0 %v923, 12
      %v1066 = vpop.permute.xlu0 %1065
      %1067 = vrot.lane.b32.xlu0 %v924, 12
      %v1068 = vpop.permute.xlu0 %1067
      %vm1117 = vcmask 130144
      %1118 = vst.msk [vmem:[#allocation2] sm:$0xff] %vm1117, %v974
      %1119 = vst.msk [vmem:[#allocation2 + $0x8] sm:$0xff] %vm1117, %v976
      %1120 = vst.msk [vmem:[#allocation2 + $0x10] sm:$0xff] %vm1117, %v978
      %1121 = vst.msk [vmem:[#allocation2 + $0x18] sm:$0xff] %vm1117, %v980
      %1122 = vst.msk [vmem:[#allocation2 + $0x20] sm:$0xff] %vm1117, %v982
      %1123 = vst.msk [vmem:[#allocation2 + $0x28] sm:$0xff] %vm1117, %v984
      %1124 = vst.msk [vmem:[#allocation2 + $0x30] sm:$0xff] %vm1117, %v986
      %1125 = vst.msk [vmem:[#allocation2 + $0x38] sm:$0xff] %vm1117, %v988
      %1126 = vst.msk [vmem:[#allocation2 + $0x40] sm:$0xff] %vm1117, %v990
      %1127 = vst.msk [vmem:[#allocation2 + $0x48] sm:$0xff] %vm1117, %v992
      %1128 = vst.msk [vmem:[#allocation2 + $0x50] sm:$0xff] %vm1117, %v994
      %1129 = vst.msk [vmem:[#allocation2 + $0x58] sm:$0xff] %vm1117, %v996
      %1130 = vst.msk [vmem:[#allocation2 + $0x60] sm:$0xff] %vm1117, %v998
      %1131 = vst.msk [vmem:[#allocation2 + $0x68] sm:$0xff] %vm1117, %v1000
      %1132 = vst.msk [vmem:[#allocation2 + $0x70] sm:$0xff] %vm1117, %v1002
      %1133 = vst.msk [vmem:[#allocation2 + $0x78] sm:$0xff] %vm1117, %v1004
      %1134 = vst.msk [vmem:[#allocation2 + $0x80] sm:$0xff] %vm1117, %v1006
      %1135 = vst.msk [vmem:[#allocation2 + $0x88] sm:$0xff] %vm1117, %v1008
      %1136 = vst.msk [vmem:[#allocation2 + $0x90] sm:$0xff] %vm1117, %v1010
      %1137 = vst.msk [vmem:[#allocation2 + $0x98] sm:$0xff] %vm1117, %v1012
      %1138 = vst.msk [vmem:[#allocation2 + $0xa0] sm:$0xff] %vm1117, %v1014
      %1139 = vst.msk [vmem:[#allocation2 + $0xa8] sm:$0xff] %vm1117, %v1016
      %1140 = vst.msk [vmem:[#allocation2 + $0xb0] sm:$0xff] %vm1117, %v1018
      %1141 = vst.msk [vmem:[#allocation2 + $0xb8] sm:$0xff] %vm1117, %v1020
      %1142 = vst.msk [vmem:[#allocation2 + $0xc0] sm:$0xff] %vm1117, %v1022
      %1143 = vst.msk [vmem:[#allocation2 + $0xc8] sm:$0xff] %vm1117, %v1024
      %1144 = vst.msk [vmem:[#allocation2 + $0xd0] sm:$0xff] %vm1117, %v1026
      %1145 = vst.msk [vmem:[#allocation2 + $0xd8] sm:$0xff] %vm1117, %v1028
      %1146 = vst.msk [vmem:[#allocation2 + $0xe0] sm:$0xff] %vm1117, %v1030
      %1147 = vst.msk [vmem:[#allocation2 + $0xe8] sm:$0xff] %vm1117, %v1032
      %1148 = vst.msk [vmem:[#allocation2 + $0xf0] sm:$0xff] %vm1117, %v1034
      %1149 = vst.msk [vmem:[#allocation2 + $0xf8] sm:$0xff] %vm1117, %v1036
      %1150 = vst.msk [vmem:[#allocation2 + $0x100] sm:$0xff] %vm1117, %v1038
      %1151 = vst.msk [vmem:[#allocation2 + $0x108] sm:$0xff] %vm1117, %v1040
      %1152 = vst.msk [vmem:[#allocation2 + $0x110] sm:$0xff] %vm1117, %v1042
      %1153 = vst.msk [vmem:[#allocation2 + $0x118] sm:$0xff] %vm1117, %v1044
      %1154 = vst.msk [vmem:[#allocation2 + $0x120] sm:$0xff] %vm1117, %v1046
      %1155 = vst.msk [vmem:[#allocation2 + $0x128] sm:$0xff] %vm1117, %v1048
      %1156 = vst.msk [vmem:[#allocation2 + $0x130] sm:$0xff] %vm1117, %v1050
      %1157 = vst.msk [vmem:[#allocation2 + $0x138] sm:$0xff] %vm1117, %v1052
      %1158 = vst.msk [vmem:[#allocation2 + $0x140] sm:$0xff] %vm1117, %v1054
      %1159 = vst.msk [vmem:[#allocation2 + $0x148] sm:$0xff] %vm1117, %v1056
      %1160 = vst.msk [vmem:[#allocation2 + $0x150] sm:$0xff] %vm1117, %v1058
      %1161 = vst.msk [vmem:[#allocation2 + $0x158] sm:$0xff] %vm1117, %v1060
      %1162 = vst.msk [vmem:[#allocation2 + $0x160] sm:$0xff] %vm1117, %v1062
      %1163 = vst.msk [vmem:[#allocation2 + $0x168] sm:$0xff] %vm1117, %v1064
      %1164 = vst.msk [vmem:[#allocation2 + $0x170] sm:$0xff] %vm1117, %v1066
      %1165 = vst.msk [vmem:[#allocation2 + $0x178] sm:$0xff] %vm1117, %v1068
      %s1166 = sadd.s32 %s194, 19
      %s1167 = scalar_lea.vmem %s183, %s1166
      %v1168 = vld [vmem:[%s1167] sm:$0xff]
      %v1169 = vld [vmem:[%s1167 + $0x8] sm:$0xff]
      %v1170 = vld [vmem:[%s1167 + $0x10] sm:$0xff]
      %v1171 = vld [vmem:[%s1167 + $0x18] sm:$0xff]
      %v1172 = vld [vmem:[%s1167 + $0x20] sm:$0xff]
      %v1173 = vld [vmem:[%s1167 + $0x28] sm:$0xff]
      %v1174 = vld [vmem:[%s1167 + $0x30] sm:$0xff]
      %v1175 = vld [vmem:[%s1167 + $0x38] sm:$0xff]
      %v1176 = vld [vmem:[%s1167 + $0x40] sm:$0xff]
      %v1177 = vld [vmem:[%s1167 + $0x48] sm:$0xff]
      %v1178 = vld [vmem:[%s1167 + $0x50] sm:$0xff]
      %v1179 = vld [vmem:[%s1167 + $0x58] sm:$0xff]
      %v1180 = vld [vmem:[%s1167 + $0x60] sm:$0xff]
      %v1181 = vld [vmem:[%s1167 + $0x68] sm:$0xff]
      %v1182 = vld [vmem:[%s1167 + $0x70] sm:$0xff]
      %v1183 = vld [vmem:[%s1167 + $0x78] sm:$0xff]
      %v1184 = vld [vmem:[%s1167 + $0x80] sm:$0xff]
      %v1185 = vld [vmem:[%s1167 + $0x88] sm:$0xff]
      %v1186 = vld [vmem:[%s1167 + $0x90] sm:$0xff]
      %v1187 = vld [vmem:[%s1167 + $0x98] sm:$0xff]
      %v1188 = vld [vmem:[%s1167 + $0xa0] sm:$0xff]
      %v1189 = vld [vmem:[%s1167 + $0xa8] sm:$0xff]
      %v1190 = vld [vmem:[%s1167 + $0xb0] sm:$0xff]
      %v1191 = vld [vmem:[%s1167 + $0xb8] sm:$0xff]
      %v1192 = vld [vmem:[%s1167 + $0xc0] sm:$0xff]
      %v1193 = vld [vmem:[%s1167 + $0xc8] sm:$0xff]
      %v1194 = vld [vmem:[%s1167 + $0xd0] sm:$0xff]
      %v1195 = vld [vmem:[%s1167 + $0xd8] sm:$0xff]
      %v1196 = vld [vmem:[%s1167 + $0xe0] sm:$0xff]
      %v1197 = vld [vmem:[%s1167 + $0xe8] sm:$0xff]
      %v1198 = vld [vmem:[%s1167 + $0xf0] sm:$0xff]
      %v1199 = vld [vmem:[%s1167 + $0xf8] sm:$0xff]
      %v1200 = vld [vmem:[%s1167 + $0x100] sm:$0xff]
      %v1201 = vld [vmem:[%s1167 + $0x108] sm:$0xff]
      %v1202 = vld [vmem:[%s1167 + $0x110] sm:$0xff]
      %v1203 = vld [vmem:[%s1167 + $0x118] sm:$0xff]
      %v1204 = vld [vmem:[%s1167 + $0x120] sm:$0xff]
      %v1205 = vld [vmem:[%s1167 + $0x128] sm:$0xff]
      %v1206 = vld [vmem:[%s1167 + $0x130] sm:$0xff]
      %v1207 = vld [vmem:[%s1167 + $0x138] sm:$0xff]
      %v1208 = vld [vmem:[%s1167 + $0x140] sm:$0xff]
      %v1209 = vld [vmem:[%s1167 + $0x148] sm:$0xff]
      %v1210 = vld [vmem:[%s1167 + $0x150] sm:$0xff]
      %v1211 = vld [vmem:[%s1167 + $0x158] sm:$0xff]
      %v1212 = vld [vmem:[%s1167 + $0x160] sm:$0xff]
      %v1213 = vld [vmem:[%s1167 + $0x168] sm:$0xff]
      %v1214 = vld [vmem:[%s1167 + $0x170] sm:$0xff]
      %v1215 = vld [vmem:[%s1167 + $0x178] sm:$0xff]
      %1264 = vrot.lane.b32.xlu0 %v1168, 16
      %v1265 = vpop.permute.xlu0 %1264
      %1266 = vrot.lane.b32.xlu0 %v1169, 16
      %v1267 = vpop.permute.xlu0 %1266
      %1268 = vrot.lane.b32.xlu0 %v1170, 16
      %v1269 = vpop.permute.xlu0 %1268
      %1270 = vrot.lane.b32.xlu0 %v1171, 16
      %v1271 = vpop.permute.xlu0 %1270
      %1272 = vrot.lane.b32.xlu0 %v1172, 16
      %v1273 = vpop.permute.xlu0 %1272
      %1274 = vrot.lane.b32.xlu0 %v1173, 16
      %v1275 = vpop.permute.xlu0 %1274
      %1276 = vrot.lane.b32.xlu0 %v1174, 16
      %v1277 = vpop.permute.xlu0 %1276
      %1278 = vrot.lane.b32.xlu0 %v1175, 16
      %v1279 = vpop.permute.xlu0 %1278
      %1280 = vrot.lane.b32.xlu0 %v1176, 16
      %v1281 = vpop.permute.xlu0 %1280
      %1282 = vrot.lane.b32.xlu0 %v1177, 16
      %v1283 = vpop.permute.xlu0 %1282
      %1284 = vrot.lane.b32.xlu0 %v1178, 16
      %v1285 = vpop.permute.xlu0 %1284
      %1286 = vrot.lane.b32.xlu0 %v1179, 16
      %v1287 = vpop.permute.xlu0 %1286
      %1288 = vrot.lane.b32.xlu0 %v1180, 16
      %v1289 = vpop.permute.xlu0 %1288
      %1290 = vrot.lane.b32.xlu0 %v1181, 16
      %v1291 = vpop.permute.xlu0 %1290
      %1292 = vrot.lane.b32.xlu0 %v1182, 16
      %v1293 = vpop.permute.xlu0 %1292
      %1294 = vrot.lane.b32.xlu0 %v1183, 16
      %v1295 = vpop.permute.xlu0 %1294
      %1296 = vrot.lane.b32.xlu0 %v1184, 16
      %v1297 = vpop.permute.xlu0 %1296
      %1298 = vrot.lane.b32.xlu0 %v1185, 16
      %v1299 = vpop.permute.xlu0 %1298
      %1300 = vrot.lane.b32.xlu0 %v1186, 16
      %v1301 = vpop.permute.xlu0 %1300
      %1302 = vrot.lane.b32.xlu0 %v1187, 16
      %v1303 = vpop.permute.xlu0 %1302
      %1304 = vrot.lane.b32.xlu0 %v1188, 16
      %v1305 = vpop.permute.xlu0 %1304
      %1306 = vrot.lane.b32.xlu0 %v1189, 16
      %v1307 = vpop.permute.xlu0 %1306
      %1308 = vrot.lane.b32.xlu0 %v1190, 16
      %v1309 = vpop.permute.xlu0 %1308
      %1310 = vrot.lane.b32.xlu0 %v1191, 16
      %v1311 = vpop.permute.xlu0 %1310
      %1312 = vrot.lane.b32.xlu0 %v1192, 16
      %v1313 = vpop.permute.xlu0 %1312
      %1314 = vrot.lane.b32.xlu0 %v1193, 16
      %v1315 = vpop.permute.xlu0 %1314
      %1316 = vrot.lane.b32.xlu0 %v1194, 16
      %v1317 = vpop.permute.xlu0 %1316
      %1318 = vrot.lane.b32.xlu0 %v1195, 16
      %v1319 = vpop.permute.xlu0 %1318
      %1320 = vrot.lane.b32.xlu0 %v1196, 16
      %v1321 = vpop.permute.xlu0 %1320
      %1322 = vrot.lane.b32.xlu0 %v1197, 16
      %v1323 = vpop.permute.xlu0 %1322
      %1324 = vrot.lane.b32.xlu0 %v1198, 16
      %v1325 = vpop.permute.xlu0 %1324
      %1326 = vrot.lane.b32.xlu0 %v1199, 16
      %v1327 = vpop.permute.xlu0 %1326
      %1328 = vrot.lane.b32.xlu0 %v1200, 16
      %v1329 = vpop.permute.xlu0 %1328
      %1330 = vrot.lane.b32.xlu0 %v1201, 16
      %v1331 = vpop.permute.xlu0 %1330
      %1332 = vrot.lane.b32.xlu0 %v1202, 16
      %v1333 = vpop.permute.xlu0 %1332
      %1334 = vrot.lane.b32.xlu0 %v1203, 16
      %v1335 = vpop.permute.xlu0 %1334
      %1336 = vrot.lane.b32.xlu0 %v1204, 16
      %v1337 = vpop.permute.xlu0 %1336
      %1338 = vrot.lane.b32.xlu0 %v1205, 16
      %v1339 = vpop.permute.xlu0 %1338
      %1340 = vrot.lane.b32.xlu0 %v1206, 16
      %v1341 = vpop.permute.xlu0 %1340
      %1342 = vrot.lane.b32.xlu0 %v1207, 16
      %v1343 = vpop.permute.xlu0 %1342
      %1344 = vrot.lane.b32.xlu0 %v1208, 16
      %v1345 = vpop.permute.xlu0 %1344
      %1346 = vrot.lane.b32.xlu0 %v1209, 16
      %v1347 = vpop.permute.xlu0 %1346
      %1348 = vrot.lane.b32.xlu0 %v1210, 16
      %v1349 = vpop.permute.xlu0 %1348
      %1350 = vrot.lane.b32.xlu0 %v1211, 16
      %v1351 = vpop.permute.xlu0 %1350
      %1352 = vrot.lane.b32.xlu0 %v1212, 16
      %v1353 = vpop.permute.xlu0 %1352
      %1354 = vrot.lane.b32.xlu0 %v1213, 16
      %v1355 = vpop.permute.xlu0 %1354
      %1356 = vrot.lane.b32.xlu0 %v1214, 16
      %v1357 = vpop.permute.xlu0 %1356
      %1358 = vrot.lane.b32.xlu0 %v1215, 16
      %v1359 = vpop.permute.xlu0 %1358
      %vm1408 = vcmask 162944
      %1409 = vst.msk [vmem:[#allocation2] sm:$0xff] %vm1408, %v1265
      %1410 = vst.msk [vmem:[#allocation2 + $0x8] sm:$0xff] %vm1408, %v1267
      %1411 = vst.msk [vmem:[#allocation2 + $0x10] sm:$0xff] %vm1408, %v1269
      %1412 = vst.msk [vmem:[#allocation2 + $0x18] sm:$0xff] %vm1408, %v1271
      %1413 = vst.msk [vmem:[#allocation2 + $0x20] sm:$0xff] %vm1408, %v1273
      %1414 = vst.msk [vmem:[#allocation2 + $0x28] sm:$0xff] %vm1408, %v1275
      %1415 = vst.msk [vmem:[#allocation2 + $0x30] sm:$0xff] %vm1408, %v1277
      %1416 = vst.msk [vmem:[#allocation2 + $0x38] sm:$0xff] %vm1408, %v1279
      %1417 = vst.msk [vmem:[#allocation2 + $0x40] sm:$0xff] %vm1408, %v1281
      %1418 = vst.msk [vmem:[#allocation2 + $0x48] sm:$0xff] %vm1408, %v1283
      %1419 = vst.msk [vmem:[#allocation2 + $0x50] sm:$0xff] %vm1408, %v1285
      %1420 = vst.msk [vmem:[#allocation2 + $0x58] sm:$0xff] %vm1408, %v1287
      %1421 = vst.msk [vmem:[#allocation2 + $0x60] sm:$0xff] %vm1408, %v1289
      %1422 = vst.msk [vmem:[#allocation2 + $0x68] sm:$0xff] %vm1408, %v1291
      %1423 = vst.msk [vmem:[#allocation2 + $0x70] sm:$0xff] %vm1408, %v1293
      %1424 = vst.msk [vmem:[#allocation2 + $0x78] sm:$0xff] %vm1408, %v1295
      %1425 = vst.msk [vmem:[#allocation2 + $0x80] sm:$0xff] %vm1408, %v1297
      %1426 = vst.msk [vmem:[#allocation2 + $0x88] sm:$0xff] %vm1408, %v1299
      %1427 = vst.msk [vmem:[#allocation2 + $0x90] sm:$0xff] %vm1408, %v1301
      %1428 = vst.msk [vmem:[#allocation2 + $0x98] sm:$0xff] %vm1408, %v1303
      %1429 = vst.msk [vmem:[#allocation2 + $0xa0] sm:$0xff] %vm1408, %v1305
      %1430 = vst.msk [vmem:[#allocation2 + $0xa8] sm:$0xff] %vm1408, %v1307
      %1431 = vst.msk [vmem:[#allocation2 + $0xb0] sm:$0xff] %vm1408, %v1309
      %1432 = vst.msk [vmem:[#allocation2 + $0xb8] sm:$0xff] %vm1408, %v1311
      %1433 = vst.msk [vmem:[#allocation2 + $0xc0] sm:$0xff] %vm1408, %v1313
      %1434 = vst.msk [vmem:[#allocation2 + $0xc8] sm:$0xff] %vm1408, %v1315
      %1435 = vst.msk [vmem:[#allocation2 + $0xd0] sm:$0xff] %vm1408, %v1317
      %1436 = vst.msk [vmem:[#allocation2 + $0xd8] sm:$0xff] %vm1408, %v1319
      %1437 = vst.msk [vmem:[#allocation2 + $0xe0] sm:$0xff] %vm1408, %v1321
      %1438 = vst.msk [vmem:[#allocation2 + $0xe8] sm:$0xff] %vm1408, %v1323
      %1439 = vst.msk [vmem:[#allocation2 + $0xf0] sm:$0xff] %vm1408, %v1325
      %1440 = vst.msk [vmem:[#allocation2 + $0xf8] sm:$0xff] %vm1408, %v1327
      %1441 = vst.msk [vmem:[#allocation2 + $0x100] sm:$0xff] %vm1408, %v1329
      %1442 = vst.msk [vmem:[#allocation2 + $0x108] sm:$0xff] %vm1408, %v1331
      %1443 = vst.msk [vmem:[#allocation2 + $0x110] sm:$0xff] %vm1408, %v1333
      %1444 = vst.msk [vmem:[#allocation2 + $0x118] sm:$0xff] %vm1408, %v1335
      %1445 = vst.msk [vmem:[#allocation2 + $0x120] sm:$0xff] %vm1408, %v1337
      %1446 = vst.msk [vmem:[#allocation2 + $0x128] sm:$0xff] %vm1408, %v1339
      %1447 = vst.msk [vmem:[#allocation2 + $0x130] sm:$0xff] %vm1408, %v1341
      %1448 = vst.msk [vmem:[#allocation2 + $0x138] sm:$0xff] %vm1408, %v1343
      %1449 = vst.msk [vmem:[#allocation2 + $0x140] sm:$0xff] %vm1408, %v1345
      %1450 = vst.msk [vmem:[#allocation2 + $0x148] sm:$0xff] %vm1408, %v1347
      %1451 = vst.msk [vmem:[#allocation2 + $0x150] sm:$0xff] %vm1408, %v1349
      %1452 = vst.msk [vmem:[#allocation2 + $0x158] sm:$0xff] %vm1408, %v1351
      %1453 = vst.msk [vmem:[#allocation2 + $0x160] sm:$0xff] %vm1408, %v1353
      %1454 = vst.msk [vmem:[#allocation2 + $0x168] sm:$0xff] %vm1408, %v1355
      %1455 = vst.msk [vmem:[#allocation2 + $0x170] sm:$0xff] %vm1408, %v1357
      %1456 = vst.msk [vmem:[#allocation2 + $0x178] sm:$0xff] %vm1408, %v1359
      %s1457 = sadd.s32 %s194, 20
      %s1458 = scalar_lea.vmem %s183, %s1457
      %v1459 = vld [vmem:[%s1458] sm:$0xff]
      %v1460 = vld [vmem:[%s1458 + $0x8] sm:$0xff]
      %v1461 = vld [vmem:[%s1458 + $0x10] sm:$0xff]
      %v1462 = vld [vmem:[%s1458 + $0x18] sm:$0xff]
      %v1463 = vld [vmem:[%s1458 + $0x20] sm:$0xff]
      %v1464 = vld [vmem:[%s1458 + $0x28] sm:$0xff]
      %v1465 = vld [vmem:[%s1458 + $0x30] sm:$0xff]
      %v1466 = vld [vmem:[%s1458 + $0x38] sm:$0xff]
      %v1467 = vld [vmem:[%s1458 + $0x40] sm:$0xff]
      %v1468 = vld [vmem:[%s1458 + $0x48] sm:$0xff]
      %v1469 = vld [vmem:[%s1458 + $0x50] sm:$0xff]
      %v1470 = vld [vmem:[%s1458 + $0x58] sm:$0xff]
      %v1471 = vld [vmem:[%s1458 + $0x60] sm:$0xff]
      %v1472 = vld [vmem:[%s1458 + $0x68] sm:$0xff]
      %v1473 = vld [vmem:[%s1458 + $0x70] sm:$0xff]
      %v1474 = vld [vmem:[%s1458 + $0x78] sm:$0xff]
      %v1475 = vld [vmem:[%s1458 + $0x80] sm:$0xff]
      %v1476 = vld [vmem:[%s1458 + $0x88] sm:$0xff]
      %v1477 = vld [vmem:[%s1458 + $0x90] sm:$0xff]
      %v1478 = vld [vmem:[%s1458 + $0x98] sm:$0xff]
      %v1479 = vld [vmem:[%s1458 + $0xa0] sm:$0xff]
      %v1480 = vld [vmem:[%s1458 + $0xa8] sm:$0xff]
      %v1481 = vld [vmem:[%s1458 + $0xb0] sm:$0xff]
      %v1482 = vld [vmem:[%s1458 + $0xb8] sm:$0xff]
      %v1483 = vld [vmem:[%s1458 + $0xc0] sm:$0xff]
      %v1484 = vld [vmem:[%s1458 + $0xc8] sm:$0xff]
      %v1485 = vld [vmem:[%s1458 + $0xd0] sm:$0xff]
      %v1486 = vld [vmem:[%s1458 + $0xd8] sm:$0xff]
      %v1487 = vld [vmem:[%s1458 + $0xe0] sm:$0xff]
      %v1488 = vld [vmem:[%s1458 + $0xe8] sm:$0xff]
      %v1489 = vld [vmem:[%s1458 + $0xf0] sm:$0xff]
      %v1490 = vld [vmem:[%s1458 + $0xf8] sm:$0xff]
      %v1491 = vld [vmem:[%s1458 + $0x100] sm:$0xff]
      %v1492 = vld [vmem:[%s1458 + $0x108] sm:$0xff]
      %v1493 = vld [vmem:[%s1458 + $0x110] sm:$0xff]
      %v1494 = vld [vmem:[%s1458 + $0x118] sm:$0xff]
      %v1495 = vld [vmem:[%s1458 + $0x120] sm:$0xff]
      %v1496 = vld [vmem:[%s1458 + $0x128] sm:$0xff]
      %v1497 = vld [vmem:[%s1458 + $0x130] sm:$0xff]
      %v1498 = vld [vmem:[%s1458 + $0x138] sm:$0xff]
      %v1499 = vld [vmem:[%s1458 + $0x140] sm:$0xff]
      %v1500 = vld [vmem:[%s1458 + $0x148] sm:$0xff]
      %v1501 = vld [vmem:[%s1458 + $0x150] sm:$0xff]
      %v1502 = vld [vmem:[%s1458 + $0x158] sm:$0xff]
      %v1503 = vld [vmem:[%s1458 + $0x160] sm:$0xff]
      %v1504 = vld [vmem:[%s1458 + $0x168] sm:$0xff]
      %v1505 = vld [vmem:[%s1458 + $0x170] sm:$0xff]
      %v1506 = vld [vmem:[%s1458 + $0x178] sm:$0xff]
      %1555 = vrot.lane.b32.xlu0 %v1459, 20
      %v1556 = vpop.permute.xlu0 %1555
      %1557 = vrot.lane.b32.xlu0 %v1460, 20
      %v1558 = vpop.permute.xlu0 %1557
      %1559 = vrot.lane.b32.xlu0 %v1461, 20
      %v1560 = vpop.permute.xlu0 %1559
      %1561 = vrot.lane.b32.xlu0 %v1462, 20
      %v1562 = vpop.permute.xlu0 %1561
      %1563 = vrot.lane.b32.xlu0 %v1463, 20
      %v1564 = vpop.permute.xlu0 %1563
      %1565 = vrot.lane.b32.xlu0 %v1464, 20
      %v1566 = vpop.permute.xlu0 %1565
      %1567 = vrot.lane.b32.xlu0 %v1465, 20
      %v1568 = vpop.permute.xlu0 %1567
      %1569 = vrot.lane.b32.xlu0 %v1466, 20
      %v1570 = vpop.permute.xlu0 %1569
      %1571 = vrot.lane.b32.xlu0 %v1467, 20
      %v1572 = vpop.permute.xlu0 %1571
      %1573 = vrot.lane.b32.xlu0 %v1468, 20
      %v1574 = vpop.permute.xlu0 %1573
      %1575 = vrot.lane.b32.xlu0 %v1469, 20
      %v1576 = vpop.permute.xlu0 %1575
      %1577 = vrot.lane.b32.xlu0 %v1470, 20
      %v1578 = vpop.permute.xlu0 %1577
      %1579 = vrot.lane.b32.xlu0 %v1471, 20
      %v1580 = vpop.permute.xlu0 %1579
      %1581 = vrot.lane.b32.xlu0 %v1472, 20
      %v1582 = vpop.permute.xlu0 %1581
      %1583 = vrot.lane.b32.xlu0 %v1473, 20
      %v1584 = vpop.permute.xlu0 %1583
      %1585 = vrot.lane.b32.xlu0 %v1474, 20
      %v1586 = vpop.permute.xlu0 %1585
      %1587 = vrot.lane.b32.xlu0 %v1475, 20
      %v1588 = vpop.permute.xlu0 %1587
      %1589 = vrot.lane.b32.xlu0 %v1476, 20
      %v1590 = vpop.permute.xlu0 %1589
      %1591 = vrot.lane.b32.xlu0 %v1477, 20
      %v1592 = vpop.permute.xlu0 %1591
      %1593 = vrot.lane.b32.xlu0 %v1478, 20
      %v1594 = vpop.permute.xlu0 %1593
      %1595 = vrot.lane.b32.xlu0 %v1479, 20
      %v1596 = vpop.permute.xlu0 %1595
      %1597 = vrot.lane.b32.xlu0 %v1480, 20
      %v1598 = vpop.permute.xlu0 %1597
      %1599 = vrot.lane.b32.xlu0 %v1481, 20
      %v1600 = vpop.permute.xlu0 %1599
      %1601 = vrot.lane.b32.xlu0 %v1482, 20
      %v1602 = vpop.permute.xlu0 %1601
      %1603 = vrot.lane.b32.xlu0 %v1483, 20
      %v1604 = vpop.permute.xlu0 %1603
      %1605 = vrot.lane.b32.xlu0 %v1484, 20
      %v1606 = vpop.permute.xlu0 %1605
      %1607 = vrot.lane.b32.xlu0 %v1485, 20
      %v1608 = vpop.permute.xlu0 %1607
      %1609 = vrot.lane.b32.xlu0 %v1486, 20
      %v1610 = vpop.permute.xlu0 %1609
      %1611 = vrot.lane.b32.xlu0 %v1487, 20
      %v1612 = vpop.permute.xlu0 %1611
      %1613 = vrot.lane.b32.xlu0 %v1488, 20
      %v1614 = vpop.permute.xlu0 %1613
      %1615 = vrot.lane.b32.xlu0 %v1489, 20
      %v1616 = vpop.permute.xlu0 %1615
      %1617 = vrot.lane.b32.xlu0 %v1490, 20
      %v1618 = vpop.permute.xlu0 %1617
      %1619 = vrot.lane.b32.xlu0 %v1491, 20
      %v1620 = vpop.permute.xlu0 %1619
      %1621 = vrot.lane.b32.xlu0 %v1492, 20
      %v1622 = vpop.permute.xlu0 %1621
      %1623 = vrot.lane.b32.xlu0 %v1493, 20
      %v1624 = vpop.permute.xlu0 %1623
      %1625 = vrot.lane.b32.xlu0 %v1494, 20
      %v1626 = vpop.permute.xlu0 %1625
      %1627 = vrot.lane.b32.xlu0 %v1495, 20
      %v1628 = vpop.permute.xlu0 %1627
      %1629 = vrot.lane.b32.xlu0 %v1496, 20
      %v1630 = vpop.permute.xlu0 %1629
      %1631 = vrot.lane.b32.xlu0 %v1497, 20
      %v1632 = vpop.permute.xlu0 %1631
      %1633 = vrot.lane.b32.xlu0 %v1498, 20
      %v1634 = vpop.permute.xlu0 %1633
      %1635 = vrot.lane.b32.xlu0 %v1499, 20
      %v1636 = vpop.permute.xlu0 %1635
      %1637 = vrot.lane.b32.xlu0 %v1500, 20
      %v1638 = vpop.permute.xlu0 %1637
      %1639 = vrot.lane.b32.xlu0 %v1501, 20
      %v1640 = vpop.permute.xlu0 %1639
      %1641 = vrot.lane.b32.xlu0 %v1502, 20
      %v1642 = vpop.permute.xlu0 %1641
      %1643 = vrot.lane.b32.xlu0 %v1503, 20
      %v1644 = vpop.permute.xlu0 %1643
      %1645 = vrot.lane.b32.xlu0 %v1504, 20
      %v1646 = vpop.permute.xlu0 %1645
      %1647 = vrot.lane.b32.xlu0 %v1505, 20
      %v1648 = vpop.permute.xlu0 %1647
      %1649 = vrot.lane.b32.xlu0 %v1506, 20
      %v1650 = vpop.permute.xlu0 %1649
      %vm1699 = vcmask 195744
      %1700 = vst.msk [vmem:[#allocation2] sm:$0xff] %vm1699, %v1556
      %1701 = vst.msk [vmem:[#allocation2 + $0x8] sm:$0xff] %vm1699, %v1558
      %1702 = vst.msk [vmem:[#allocation2 + $0x10] sm:$0xff] %vm1699, %v1560
      %1703 = vst.msk [vmem:[#allocation2 + $0x18] sm:$0xff] %vm1699, %v1562
      %1704 = vst.msk [vmem:[#allocation2 + $0x20] sm:$0xff] %vm1699, %v1564
      %1705 = vst.msk [vmem:[#allocation2 + $0x28] sm:$0xff] %vm1699, %v1566
      %1706 = vst.msk [vmem:[#allocation2 + $0x30] sm:$0xff] %vm1699, %v1568
      %1707 = vst.msk [vmem:[#allocation2 + $0x38] sm:$0xff] %vm1699, %v1570
      %1708 = vst.msk [vmem:[#allocation2 + $0x40] sm:$0xff] %vm1699, %v1572
      %1709 = vst.msk [vmem:[#allocation2 + $0x48] sm:$0xff] %vm1699, %v1574
      %1710 = vst.msk [vmem:[#allocation2 + $0x50] sm:$0xff] %vm1699, %v1576
      %1711 = vst.msk [vmem:[#allocation2 + $0x58] sm:$0xff] %vm1699, %v1578
      %1712 = vst.msk [vmem:[#allocation2 + $0x60] sm:$0xff] %vm1699, %v1580
      %1713 = vst.msk [vmem:[#allocation2 + $0x68] sm:$0xff] %vm1699, %v1582
      %1714 = vst.msk [vmem:[#allocation2 + $0x70] sm:$0xff] %vm1699, %v1584
      %1715 = vst.msk [vmem:[#allocation2 + $0x78] sm:$0xff] %vm1699, %v1586
      %1716 = vst.msk [vmem:[#allocation2 + $0x80] sm:$0xff] %vm1699, %v1588
      %1717 = vst.msk [vmem:[#allocation2 + $0x88] sm:$0xff] %vm1699, %v1590
      %1718 = vst.msk [vmem:[#allocation2 + $0x90] sm:$0xff] %vm1699, %v1592
      %1719 = vst.msk [vmem:[#allocation2 + $0x98] sm:$0xff] %vm1699, %v1594
      %1720 = vst.msk [vmem:[#allocation2 + $0xa0] sm:$0xff] %vm1699, %v1596
      %1721 = vst.msk [vmem:[#allocation2 + $0xa8] sm:$0xff] %vm1699, %v1598
      %1722 = vst.msk [vmem:[#allocation2 + $0xb0] sm:$0xff] %vm1699, %v1600
      %1723 = vst.msk [vmem:[#allocation2 + $0xb8] sm:$0xff] %vm1699, %v1602
      %1724 = vst.msk [vmem:[#allocation2 + $0xc0] sm:$0xff] %vm1699, %v1604
      %1725 = vst.msk [vmem:[#allocation2 + $0xc8] sm:$0xff] %vm1699, %v1606
      %1726 = vst.msk [vmem:[#allocation2 + $0xd0] sm:$0xff] %vm1699, %v1608
      %1727 = vst.msk [vmem:[#allocation2 + $0xd8] sm:$0xff] %vm1699, %v1610
      %1728 = vst.msk [vmem:[#allocation2 + $0xe0] sm:$0xff] %vm1699, %v1612
      %1729 = vst.msk [vmem:[#allocation2 + $0xe8] sm:$0xff] %vm1699, %v1614
      %1730 = vst.msk [vmem:[#allocation2 + $0xf0] sm:$0xff] %vm1699, %v1616
      %1731 = vst.msk [vmem:[#allocation2 + $0xf8] sm:$0xff] %vm1699, %v1618
      %1732 = vst.msk [vmem:[#allocation2 + $0x100] sm:$0xff] %vm1699, %v1620
      %1733 = vst.msk [vmem:[#allocation2 + $0x108] sm:$0xff] %vm1699, %v1622
      %1734 = vst.msk [vmem:[#allocation2 + $0x110] sm:$0xff] %vm1699, %v1624
      %1735 = vst.msk [vmem:[#allocation2 + $0x118] sm:$0xff] %vm1699, %v1626
      %1736 = vst.msk [vmem:[#allocation2 + $0x120] sm:$0xff] %vm1699, %v1628
      %1737 = vst.msk [vmem:[#allocation2 + $0x128] sm:$0xff] %vm1699, %v1630
      %1738 = vst.msk [vmem:[#allocation2 + $0x130] sm:$0xff] %vm1699, %v1632
      %1739 = vst.msk [vmem:[#allocation2 + $0x138] sm:$0xff] %vm1699, %v1634
      %1740 = vst.msk [vmem:[#allocation2 + $0x140] sm:$0xff] %vm1699, %v1636
      %1741 = vst.msk [vmem:[#allocation2 + $0x148] sm:$0xff] %vm1699, %v1638
      %1742 = vst.msk [vmem:[#allocation2 + $0x150] sm:$0xff] %vm1699, %v1640
      %1743 = vst.msk [vmem:[#allocation2 + $0x158] sm:$0xff] %vm1699, %v1642
      %1744 = vst.msk [vmem:[#allocation2 + $0x160] sm:$0xff] %vm1699, %v1644
      %1745 = vst.msk [vmem:[#allocation2 + $0x168] sm:$0xff] %vm1699, %v1646
      %1746 = vst.msk [vmem:[#allocation2 + $0x170] sm:$0xff] %vm1699, %v1648
      %1747 = vst.msk [vmem:[#allocation2 + $0x178] sm:$0xff] %vm1699, %v1650
      %s1748 = sadd.s32 %s194, 36
      %s1749 = scalar_lea.vmem %s183, %s1748
      %v1750 = vld [vmem:[%s1749] sm:$0xff]
      %v1751 = vld [vmem:[%s1749 + $0x8] sm:$0xff]
      %v1752 = vld [vmem:[%s1749 + $0x10] sm:$0xff]
      %v1753 = vld [vmem:[%s1749 + $0x18] sm:$0xff]
      %v1754 = vld [vmem:[%s1749 + $0x20] sm:$0xff]
      %v1755 = vld [vmem:[%s1749 + $0x28] sm:$0xff]
      %v1756 = vld [vmem:[%s1749 + $0x30] sm:$0xff]
      %v1757 = vld [vmem:[%s1749 + $0x38] sm:$0xff]
      %v1758 = vld [vmem:[%s1749 + $0x40] sm:$0xff]
      %v1759 = vld [vmem:[%s1749 + $0x48] sm:$0xff]
      %v1760 = vld [vmem:[%s1749 + $0x50] sm:$0xff]
      %v1761 = vld [vmem:[%s1749 + $0x58] sm:$0xff]
      %v1762 = vld [vmem:[%s1749 + $0x60] sm:$0xff]
      %v1763 = vld [vmem:[%s1749 + $0x68] sm:$0xff]
      %v1764 = vld [vmem:[%s1749 + $0x70] sm:$0xff]
      %v1765 = vld [vmem:[%s1749 + $0x78] sm:$0xff]
      %v1766 = vld [vmem:[%s1749 + $0x80] sm:$0xff]
      %v1767 = vld [vmem:[%s1749 + $0x88] sm:$0xff]
      %v1768 = vld [vmem:[%s1749 + $0x90] sm:$0xff]
      %v1769 = vld [vmem:[%s1749 + $0x98] sm:$0xff]
      %v1770 = vld [vmem:[%s1749 + $0xa0] sm:$0xff]
      %v1771 = vld [vmem:[%s1749 + $0xa8] sm:$0xff]
      %v1772 = vld [vmem:[%s1749 + $0xb0] sm:$0xff]
      %v1773 = vld [vmem:[%s1749 + $0xb8] sm:$0xff]
      %v1774 = vld [vmem:[%s1749 + $0xc0] sm:$0xff]
      %v1775 = vld [vmem:[%s1749 + $0xc8] sm:$0xff]
      %v1776 = vld [vmem:[%s1749 + $0xd0] sm:$0xff]
      %v1777 = vld [vmem:[%s1749 + $0xd8] sm:$0xff]
      %v1778 = vld [vmem:[%s1749 + $0xe0] sm:$0xff]
      %v1779 = vld [vmem:[%s1749 + $0xe8] sm:$0xff]
      %v1780 = vld [vmem:[%s1749 + $0xf0] sm:$0xff]
      %v1781 = vld [vmem:[%s1749 + $0xf8] sm:$0xff]
      %v1782 = vld [vmem:[%s1749 + $0x100] sm:$0xff]
      %v1783 = vld [vmem:[%s1749 + $0x108] sm:$0xff]
      %v1784 = vld [vmem:[%s1749 + $0x110] sm:$0xff]
      %v1785 = vld [vmem:[%s1749 + $0x118] sm:$0xff]
      %v1786 = vld [vmem:[%s1749 + $0x120] sm:$0xff]
      %v1787 = vld [vmem:[%s1749 + $0x128] sm:$0xff]
      %v1788 = vld [vmem:[%s1749 + $0x130] sm:$0xff]
      %v1789 = vld [vmem:[%s1749 + $0x138] sm:$0xff]
      %v1790 = vld [vmem:[%s1749 + $0x140] sm:$0xff]
      %v1791 = vld [vmem:[%s1749 + $0x148] sm:$0xff]
      %v1792 = vld [vmem:[%s1749 + $0x150] sm:$0xff]
      %v1793 = vld [vmem:[%s1749 + $0x158] sm:$0xff]
      %v1794 = vld [vmem:[%s1749 + $0x160] sm:$0xff]
      %v1795 = vld [vmem:[%s1749 + $0x168] sm:$0xff]
      %v1796 = vld [vmem:[%s1749 + $0x170] sm:$0xff]
      %v1797 = vld [vmem:[%s1749 + $0x178] sm:$0xff]
      %1846 = vrot.lane.b32.xlu0 %v1750, 24
      %v1847 = vpop.permute.xlu0 %1846
      %1848 = vrot.lane.b32.xlu0 %v1751, 24
      %v1849 = vpop.permute.xlu0 %1848
      %1850 = vrot.lane.b32.xlu0 %v1752, 24
      %v1851 = vpop.permute.xlu0 %1850
      %1852 = vrot.lane.b32.xlu0 %v1753, 24
      %v1853 = vpop.permute.xlu0 %1852
      %1854 = vrot.lane.b32.xlu0 %v1754, 24
      %v1855 = vpop.permute.xlu0 %1854
      %1856 = vrot.lane.b32.xlu0 %v1755, 24
      %v1857 = vpop.permute.xlu0 %1856
      %1858 = vrot.lane.b32.xlu0 %v1756, 24
      %v1859 = vpop.permute.xlu0 %1858
      %1860 = vrot.lane.b32.xlu0 %v1757, 24
      %v1861 = vpop.permute.xlu0 %1860
      %1862 = vrot.lane.b32.xlu0 %v1758, 24
      %v1863 = vpop.permute.xlu0 %1862
      %1864 = vrot.lane.b32.xlu0 %v1759, 24
      %v1865 = vpop.permute.xlu0 %1864
      %1866 = vrot.lane.b32.xlu0 %v1760, 24
      %v1867 = vpop.permute.xlu0 %1866
      %1868 = vrot.lane.b32.xlu0 %v1761, 24
      %v1869 = vpop.permute.xlu0 %1868
      %1870 = vrot.lane.b32.xlu0 %v1762, 24
      %v1871 = vpop.permute.xlu0 %1870
      %1872 = vrot.lane.b32.xlu0 %v1763, 24
      %v1873 = vpop.permute.xlu0 %1872
      %1874 = vrot.lane.b32.xlu0 %v1764, 24
      %v1875 = vpop.permute.xlu0 %1874
      %1876 = vrot.lane.b32.xlu0 %v1765, 24
      %v1877 = vpop.permute.xlu0 %1876
      %1878 = vrot.lane.b32.xlu0 %v1766, 24
      %v1879 = vpop.permute.xlu0 %1878
      %1880 = vrot.lane.b32.xlu0 %v1767, 24
      %v1881 = vpop.permute.xlu0 %1880
      %1882 = vrot.lane.b32.xlu0 %v1768, 24
      %v1883 = vpop.permute.xlu0 %1882
      %1884 = vrot.lane.b32.xlu0 %v1769, 24
      %v1885 = vpop.permute.xlu0 %1884
      %1886 = vrot.lane.b32.xlu0 %v1770, 24
      %v1887 = vpop.permute.xlu0 %1886
      %1888 = vrot.lane.b32.xlu0 %v1771, 24
      %v1889 = vpop.permute.xlu0 %1888
      %1890 = vrot.lane.b32.xlu0 %v1772, 24
      %v1891 = vpop.permute.xlu0 %1890
      %1892 = vrot.lane.b32.xlu0 %v1773, 24
      %v1893 = vpop.permute.xlu0 %1892
      %1894 = vrot.lane.b32.xlu0 %v1774, 24
      %v1895 = vpop.permute.xlu0 %1894
      %1896 = vrot.lane.b32.xlu0 %v1775, 24
      %v1897 = vpop.permute.xlu0 %1896
      %1898 = vrot.lane.b32.xlu0 %v1776, 24
      %v1899 = vpop.permute.xlu0 %1898
      %1900 = vrot.lane.b32.xlu0 %v1777, 24
      %v1901 = vpop.permute.xlu0 %1900
      %1902 = vrot.lane.b32.xlu0 %v1778, 24
      %v1903 = vpop.permute.xlu0 %1902
      %1904 = vrot.lane.b32.xlu0 %v1779, 24
      %v1905 = vpop.permute.xlu0 %1904
      %1906 = vrot.lane.b32.xlu0 %v1780, 24
      %v1907 = vpop.permute.xlu0 %1906
      %1908 = vrot.lane.b32.xlu0 %v1781, 24
      %v1909 = vpop.permute.xlu0 %1908
      %1910 = vrot.lane.b32.xlu0 %v1782, 24
      %v1911 = vpop.permute.xlu0 %1910
      %1912 = vrot.lane.b32.xlu0 %v1783, 24
      %v1913 = vpop.permute.xlu0 %1912
      %1914 = vrot.lane.b32.xlu0 %v1784, 24
      %v1915 = vpop.permute.xlu0 %1914
      %1916 = vrot.lane.b32.xlu0 %v1785, 24
      %v1917 = vpop.permute.xlu0 %1916
      %1918 = vrot.lane.b32.xlu0 %v1786, 24
      %v1919 = vpop.permute.xlu0 %1918
      %1920 = vrot.lane.b32.xlu0 %v1787, 24
      %v1921 = vpop.permute.xlu0 %1920
      %1922 = vrot.lane.b32.xlu0 %v1788, 24
      %v1923 = vpop.permute.xlu0 %1922
      %1924 = vrot.lane.b32.xlu0 %v1789, 24
      %v1925 = vpop.permute.xlu0 %1924
      %1926 = vrot.lane.b32.xlu0 %v1790, 24
      %v1927 = vpop.permute.xlu0 %1926
      %1928 = vrot.lane.b32.xlu0 %v1791, 24
      %v1929 = vpop.permute.xlu0 %1928
      %1930 = vrot.lane.b32.xlu0 %v1792, 24
      %v1931 = vpop.permute.xlu0 %1930
      %1932 = vrot.lane.b32.xlu0 %v1793, 24
      %v1933 = vpop.permute.xlu0 %1932
      %1934 = vrot.lane.b32.xlu0 %v1794, 24
      %v1935 = vpop.permute.xlu0 %1934
      %1936 = vrot.lane.b32.xlu0 %v1795, 24
      %v1937 = vpop.permute.xlu0 %1936
      %1938 = vrot.lane.b32.xlu0 %v1796, 24
      %v1939 = vpop.permute.xlu0 %1938
      %1940 = vrot.lane.b32.xlu0 %v1797, 24
      %v1941 = vpop.permute.xlu0 %1940
      %vm1990 = vcmask 228544
      %1991 = vst.msk [vmem:[#allocation2] sm:$0xff] %vm1990, %v1847
      %1992 = vst.msk [vmem:[#allocation2 + $0x8] sm:$0xff] %vm1990, %v1849
      %1993 = vst.msk [vmem:[#allocation2 + $0x10] sm:$0xff] %vm1990, %v1851
      %1994 = vst.msk [vmem:[#allocation2 + $0x18] sm:$0xff] %vm1990, %v1853
      %1995 = vst.msk [vmem:[#allocation2 + $0x20] sm:$0xff] %vm1990, %v1855
      %1996 = vst.msk [vmem:[#allocation2 + $0x28] sm:$0xff] %vm1990, %v1857
      %1997 = vst.msk [vmem:[#allocation2 + $0x30] sm:$0xff] %vm1990, %v1859
      %1998 = vst.msk [vmem:[#allocation2 + $0x38] sm:$0xff] %vm1990, %v1861
      %1999 = vst.msk [vmem:[#allocation2 + $0x40] sm:$0xff] %vm1990, %v1863
      %2000 = vst.msk [vmem:[#allocation2 + $0x48] sm:$0xff] %vm1990, %v1865
      %2001 = vst.msk [vmem:[#allocation2 + $0x50] sm:$0xff] %vm1990, %v1867
      %2002 = vst.msk [vmem:[#allocation2 + $0x58] sm:$0xff] %vm1990, %v1869
      %2003 = vst.msk [vmem:[#allocation2 + $0x60] sm:$0xff] %vm1990, %v1871
      %2004 = vst.msk [vmem:[#allocation2 + $0x68] sm:$0xff] %vm1990, %v1873
      %2005 = vst.msk [vmem:[#allocation2 + $0x70] sm:$0xff] %vm1990, %v1875
      %2006 = vst.msk [vmem:[#allocation2 + $0x78] sm:$0xff] %vm1990, %v1877
      %2007 = vst.msk [vmem:[#allocation2 + $0x80] sm:$0xff] %vm1990, %v1879
      %2008 = vst.msk [vmem:[#allocation2 + $0x88] sm:$0xff] %vm1990, %v1881
      %2009 = vst.msk [vmem:[#allocation2 + $0x90] sm:$0xff] %vm1990, %v1883
      %2010 = vst.msk [vmem:[#allocation2 + $0x98] sm:$0xff] %vm1990, %v1885
      %2011 = vst.msk [vmem:[#allocation2 + $0xa0] sm:$0xff] %vm1990, %v1887
      %2012 = vst.msk [vmem:[#allocation2 + $0xa8] sm:$0xff] %vm1990, %v1889
      %2013 = vst.msk [vmem:[#allocation2 + $0xb0] sm:$0xff] %vm1990, %v1891
      %2014 = vst.msk [vmem:[#allocation2 + $0xb8] sm:$0xff] %vm1990, %v1893
      %2015 = vst.msk [vmem:[#allocation2 + $0xc0] sm:$0xff] %vm1990, %v1895
      %2016 = vst.msk [vmem:[#allocation2 + $0xc8] sm:$0xff] %vm1990, %v1897
      %2017 = vst.msk [vmem:[#allocation2 + $0xd0] sm:$0xff] %vm1990, %v1899
      %2018 = vst.msk [vmem:[#allocation2 + $0xd8] sm:$0xff] %vm1990, %v1901
      %2019 = vst.msk [vmem:[#allocation2 + $0xe0] sm:$0xff] %vm1990, %v1903
      %2020 = vst.msk [vmem:[#allocation2 + $0xe8] sm:$0xff] %vm1990, %v1905
      %2021 = vst.msk [vmem:[#allocation2 + $0xf0] sm:$0xff] %vm1990, %v1907
      %2022 = vst.msk [vmem:[#allocation2 + $0xf8] sm:$0xff] %vm1990, %v1909
      %2023 = vst.msk [vmem:[#allocation2 + $0x100] sm:$0xff] %vm1990, %v1911
      %2024 = vst.msk [vmem:[#allocation2 + $0x108] sm:$0xff] %vm1990, %v1913
      %2025 = vst.msk [vmem:[#allocation2 + $0x110] sm:$0xff] %vm1990, %v1915
      %2026 = vst.msk [vmem:[#allocation2 + $0x118] sm:$0xff] %vm1990, %v1917
      %2027 = vst.msk [vmem:[#allocation2 + $0x120] sm:$0xff] %vm1990, %v1919
      %2028 = vst.msk [vmem:[#allocation2 + $0x128] sm:$0xff] %vm1990, %v1921
      %2029 = vst.msk [vmem:[#allocation2 + $0x130] sm:$0xff] %vm1990, %v1923
      %2030 = vst.msk [vmem:[#allocation2 + $0x138] sm:$0xff] %vm1990, %v1925
      %2031 = vst.msk [vmem:[#allocation2 + $0x140] sm:$0xff] %vm1990, %v1927
      %2032 = vst.msk [vmem:[#allocation2 + $0x148] sm:$0xff] %vm1990, %v1929
      %2033 = vst.msk [vmem:[#allocation2 + $0x150] sm:$0xff] %vm1990, %v1931
      %2034 = vst.msk [vmem:[#allocation2 + $0x158] sm:$0xff] %vm1990, %v1933
      %2035 = vst.msk [vmem:[#allocation2 + $0x160] sm:$0xff] %vm1990, %v1935
      %2036 = vst.msk [vmem:[#allocation2 + $0x168] sm:$0xff] %vm1990, %v1937
      %2037 = vst.msk [vmem:[#allocation2 + $0x170] sm:$0xff] %vm1990, %v1939
      %2038 = vst.msk [vmem:[#allocation2 + $0x178] sm:$0xff] %vm1990, %v1941
      %s2039 = sadd.s32 %s194, 37
      %s2040 = scalar_lea.vmem %s183, %s2039
      %v2041 = vld [vmem:[%s2040] sm:$0xff]
      %v2042 = vld [vmem:[%s2040 + $0x8] sm:$0xff]
      %v2043 = vld [vmem:[%s2040 + $0x10] sm:$0xff]
      %v2044 = vld [vmem:[%s2040 + $0x18] sm:$0xff]
      %v2045 = vld [vmem:[%s2040 + $0x20] sm:$0xff]
      %v2046 = vld [vmem:[%s2040 + $0x28] sm:$0xff]
      %v2047 = vld [vmem:[%s2040 + $0x30] sm:$0xff]
      %v2048 = vld [vmem:[%s2040 + $0x38] sm:$0xff]
      %v2049 = vld [vmem:[%s2040 + $0x40] sm:$0xff]
      %v2050 = vld [vmem:[%s2040 + $0x48] sm:$0xff]
      %v2051 = vld [vmem:[%s2040 + $0x50] sm:$0xff]
      %v2052 = vld [vmem:[%s2040 + $0x58] sm:$0xff]
      %v2053 = vld [vmem:[%s2040 + $0x60] sm:$0xff]
      %v2054 = vld [vmem:[%s2040 + $0x68] sm:$0xff]
      %v2055 = vld [vmem:[%s2040 + $0x70] sm:$0xff]
      %v2056 = vld [vmem:[%s2040 + $0x78] sm:$0xff]
      %v2057 = vld [vmem:[%s2040 + $0x80] sm:$0xff]
      %v2058 = vld [vmem:[%s2040 + $0x88] sm:$0xff]
      %v2059 = vld [vmem:[%s2040 + $0x90] sm:$0xff]
      %v2060 = vld [vmem:[%s2040 + $0x98] sm:$0xff]
      %v2061 = vld [vmem:[%s2040 + $0xa0] sm:$0xff]
      %v2062 = vld [vmem:[%s2040 + $0xa8] sm:$0xff]
      %v2063 = vld [vmem:[%s2040 + $0xb0] sm:$0xff]
      %v2064 = vld [vmem:[%s2040 + $0xb8] sm:$0xff]
      %v2065 = vld [vmem:[%s2040 + $0xc0] sm:$0xff]
      %v2066 = vld [vmem:[%s2040 + $0xc8] sm:$0xff]
      %v2067 = vld [vmem:[%s2040 + $0xd0] sm:$0xff]
      %v2068 = vld [vmem:[%s2040 + $0xd8] sm:$0xff]
      %v2069 = vld [vmem:[%s2040 + $0xe0] sm:$0xff]
      %v2070 = vld [vmem:[%s2040 + $0xe8] sm:$0xff]
      %v2071 = vld [vmem:[%s2040 + $0xf0] sm:$0xff]
      %v2072 = vld [vmem:[%s2040 + $0xf8] sm:$0xff]
      %v2073 = vld [vmem:[%s2040 + $0x100] sm:$0xff]
      %v2074 = vld [vmem:[%s2040 + $0x108] sm:$0xff]
      %v2075 = vld [vmem:[%s2040 + $0x110] sm:$0xff]
      %v2076 = vld [vmem:[%s2040 + $0x118] sm:$0xff]
      %v2077 = vld [vmem:[%s2040 + $0x120] sm:$0xff]
      %v2078 = vld [vmem:[%s2040 + $0x128] sm:$0xff]
      %v2079 = vld [vmem:[%s2040 + $0x130] sm:$0xff]
      %v2080 = vld [vmem:[%s2040 + $0x138] sm:$0xff]
      %v2081 = vld [vmem:[%s2040 + $0x140] sm:$0xff]
      %v2082 = vld [vmem:[%s2040 + $0x148] sm:$0xff]
      %v2083 = vld [vmem:[%s2040 + $0x150] sm:$0xff]
      %v2084 = vld [vmem:[%s2040 + $0x158] sm:$0xff]
      %v2085 = vld [vmem:[%s2040 + $0x160] sm:$0xff]
      %v2086 = vld [vmem:[%s2040 + $0x168] sm:$0xff]
      %v2087 = vld [vmem:[%s2040 + $0x170] sm:$0xff]
      %v2088 = vld [vmem:[%s2040 + $0x178] sm:$0xff]
      %2137 = vrot.lane.b32.xlu0 %v2041, 28
      %v2138 = vpop.permute.xlu0 %2137
      %2139 = vrot.lane.b32.xlu0 %v2042, 28
      %v2140 = vpop.permute.xlu0 %2139
      %2141 = vrot.lane.b32.xlu0 %v2043, 28
      %v2142 = vpop.permute.xlu0 %2141
      %2143 = vrot.lane.b32.xlu0 %v2044, 28
      %v2144 = vpop.permute.xlu0 %2143
      %2145 = vrot.lane.b32.xlu0 %v2045, 28
      %v2146 = vpop.permute.xlu0 %2145
      %2147 = vrot.lane.b32.xlu0 %v2046, 28
      %v2148 = vpop.permute.xlu0 %2147
      %2149 = vrot.lane.b32.xlu0 %v2047, 28
      %v2150 = vpop.permute.xlu0 %2149
      %2151 = vrot.lane.b32.xlu0 %v2048, 28
      %v2152 = vpop.permute.xlu0 %2151
      %2153 = vrot.lane.b32.xlu0 %v2049, 28
      %v2154 = vpop.permute.xlu0 %2153
      %2155 = vrot.lane.b32.xlu0 %v2050, 28
      %v2156 = vpop.permute.xlu0 %2155
      %2157 = vrot.lane.b32.xlu0 %v2051, 28
      %v2158 = vpop.permute.xlu0 %2157
      %2159 = vrot.lane.b32.xlu0 %v2052, 28
      %v2160 = vpop.permute.xlu0 %2159
      %2161 = vrot.lane.b32.xlu0 %v2053, 28
      %v2162 = vpop.permute.xlu0 %2161
      %2163 = vrot.lane.b32.xlu0 %v2054, 28
      %v2164 = vpop.permute.xlu0 %2163
      %2165 = vrot.lane.b32.xlu0 %v2055, 28
      %v2166 = vpop.permute.xlu0 %2165
      %2167 = vrot.lane.b32.xlu0 %v2056, 28
      %v2168 = vpop.permute.xlu0 %2167
      %2169 = vrot.lane.b32.xlu0 %v2057, 28
      %v2170 = vpop.permute.xlu0 %2169
      %2171 = vrot.lane.b32.xlu0 %v2058, 28
      %v2172 = vpop.permute.xlu0 %2171
      %2173 = vrot.lane.b32.xlu0 %v2059, 28
      %v2174 = vpop.permute.xlu0 %2173
      %2175 = vrot.lane.b32.xlu0 %v2060, 28
      %v2176 = vpop.permute.xlu0 %2175
      %2177 = vrot.lane.b32.xlu0 %v2061, 28
      %v2178 = vpop.permute.xlu0 %2177
      %2179 = vrot.lane.b32.xlu0 %v2062, 28
      %v2180 = vpop.permute.xlu0 %2179
      %2181 = vrot.lane.b32.xlu0 %v2063, 28
      %v2182 = vpop.permute.xlu0 %2181
      %2183 = vrot.lane.b32.xlu0 %v2064, 28
      %v2184 = vpop.permute.xlu0 %2183
      %2185 = vrot.lane.b32.xlu0 %v2065, 28
      %v2186 = vpop.permute.xlu0 %2185
      %2187 = vrot.lane.b32.xlu0 %v2066, 28
      %v2188 = vpop.permute.xlu0 %2187
      %2189 = vrot.lane.b32.xlu0 %v2067, 28
      %v2190 = vpop.permute.xlu0 %2189
      %2191 = vrot.lane.b32.xlu0 %v2068, 28
      %v2192 = vpop.permute.xlu0 %2191
      %2193 = vrot.lane.b32.xlu0 %v2069, 28
      %v2194 = vpop.permute.xlu0 %2193
      %2195 = vrot.lane.b32.xlu0 %v2070, 28
      %v2196 = vpop.permute.xlu0 %2195
      %2197 = vrot.lane.b32.xlu0 %v2071, 28
      %v2198 = vpop.permute.xlu0 %2197
      %2199 = vrot.lane.b32.xlu0 %v2072, 28
      %v2200 = vpop.permute.xlu0 %2199
      %2201 = vrot.lane.b32.xlu0 %v2073, 28
      %v2202 = vpop.permute.xlu0 %2201
      %2203 = vrot.lane.b32.xlu0 %v2074, 28
      %v2204 = vpop.permute.xlu0 %2203
      %2205 = vrot.lane.b32.xlu0 %v2075, 28
      %v2206 = vpop.permute.xlu0 %2205
      %2207 = vrot.lane.b32.xlu0 %v2076, 28
      %v2208 = vpop.permute.xlu0 %2207
      %2209 = vrot.lane.b32.xlu0 %v2077, 28
      %v2210 = vpop.permute.xlu0 %2209
      %2211 = vrot.lane.b32.xlu0 %v2078, 28
      %v2212 = vpop.permute.xlu0 %2211
      %2213 = vrot.lane.b32.xlu0 %v2079, 28
      %v2214 = vpop.permute.xlu0 %2213
      %2215 = vrot.lane.b32.xlu0 %v2080, 28
      %v2216 = vpop.permute.xlu0 %2215
      %2217 = vrot.lane.b32.xlu0 %v2081, 28
      %v2218 = vpop.permute.xlu0 %2217
      %2219 = vrot.lane.b32.xlu0 %v2082, 28
      %v2220 = vpop.permute.xlu0 %2219
      %2221 = vrot.lane.b32.xlu0 %v2083, 28
      %v2222 = vpop.permute.xlu0 %2221
      %2223 = vrot.lane.b32.xlu0 %v2084, 28
      %v2224 = vpop.permute.xlu0 %2223
      %2225 = vrot.lane.b32.xlu0 %v2085, 28
      %v2226 = vpop.permute.xlu0 %2225
      %2227 = vrot.lane.b32.xlu0 %v2086, 28
      %v2228 = vpop.permute.xlu0 %2227
      %2229 = vrot.lane.b32.xlu0 %v2087, 28
      %v2230 = vpop.permute.xlu0 %2229
      %2231 = vrot.lane.b32.xlu0 %v2088, 28
      %v2232 = vpop.permute.xlu0 %2231
      %vm2281 = vcmask 261344
      %2282 = vst.msk [vmem:[#allocation2] sm:$0xff] %vm2281, %v2138
      %2283 = vst.msk [vmem:[#allocation2 + $0x8] sm:$0xff] %vm2281, %v2140
      %2284 = vst.msk [vmem:[#allocation2 + $0x10] sm:$0xff] %vm2281, %v2142
      %2285 = vst.msk [vmem:[#allocation2 + $0x18] sm:$0xff] %vm2281, %v2144
      %2286 = vst.msk [vmem:[#allocation2 + $0x20] sm:$0xff] %vm2281, %v2146
      %2287 = vst.msk [vmem:[#allocation2 + $0x28] sm:$0xff] %vm2281, %v2148
      %2288 = vst.msk [vmem:[#allocation2 + $0x30] sm:$0xff] %vm2281, %v2150
      %2289 = vst.msk [vmem:[#allocation2 + $0x38] sm:$0xff] %vm2281, %v2152
      %2290 = vst.msk [vmem:[#allocation2 + $0x40] sm:$0xff] %vm2281, %v2154
      %2291 = vst.msk [vmem:[#allocation2 + $0x48] sm:$0xff] %vm2281, %v2156
      %2292 = vst.msk [vmem:[#allocation2 + $0x50] sm:$0xff] %vm2281, %v2158
      %2293 = vst.msk [vmem:[#allocation2 + $0x58] sm:$0xff] %vm2281, %v2160
      %2294 = vst.msk [vmem:[#allocation2 + $0x60] sm:$0xff] %vm2281, %v2162
      %2295 = vst.msk [vmem:[#allocation2 + $0x68] sm:$0xff] %vm2281, %v2164
      %2296 = vst.msk [vmem:[#allocation2 + $0x70] sm:$0xff] %vm2281, %v2166
      %2297 = vst.msk [vmem:[#allocation2 + $0x78] sm:$0xff] %vm2281, %v2168
      %2298 = vst.msk [vmem:[#allocation2 + $0x80] sm:$0xff] %vm2281, %v2170
      %2299 = vst.msk [vmem:[#allocation2 + $0x88] sm:$0xff] %vm2281, %v2172
      %2300 = vst.msk [vmem:[#allocation2 + $0x90] sm:$0xff] %vm2281, %v2174
      %2301 = vst.msk [vmem:[#allocation2 + $0x98] sm:$0xff] %vm2281, %v2176
      %2302 = vst.msk [vmem:[#allocation2 + $0xa0] sm:$0xff] %vm2281, %v2178
      %2303 = vst.msk [vmem:[#allocation2 + $0xa8] sm:$0xff] %vm2281, %v2180
      %2304 = vst.msk [vmem:[#allocation2 + $0xb0] sm:$0xff] %vm2281, %v2182
      %2305 = vst.msk [vmem:[#allocation2 + $0xb8] sm:$0xff] %vm2281, %v2184
      %2306 = vst.msk [vmem:[#allocation2 + $0xc0] sm:$0xff] %vm2281, %v2186
      %2307 = vst.msk [vmem:[#allocation2 + $0xc8] sm:$0xff] %vm2281, %v2188
      %2308 = vst.msk [vmem:[#allocation2 + $0xd0] sm:$0xff] %vm2281, %v2190
      %2309 = vst.msk [vmem:[#allocation2 + $0xd8] sm:$0xff] %vm2281, %v2192
      %2310 = vst.msk [vmem:[#allocation2 + $0xe0] sm:$0xff] %vm2281, %v2194
      %2311 = vst.msk [vmem:[#allocation2 + $0xe8] sm:$0xff] %vm2281, %v2196
      %2312 = vst.msk [vmem:[#allocation2 + $0xf0] sm:$0xff] %vm2281, %v2198
      %2313 = vst.msk [vmem:[#allocation2 + $0xf8] sm:$0xff] %vm2281, %v2200
      %2314 = vst.msk [vmem:[#allocation2 + $0x100] sm:$0xff] %vm2281, %v2202
      %2315 = vst.msk [vmem:[#allocation2 + $0x108] sm:$0xff] %vm2281, %v2204
      %2316 = vst.msk [vmem:[#allocation2 + $0x110] sm:$0xff] %vm2281, %v2206
      %2317 = vst.msk [vmem:[#allocation2 + $0x118] sm:$0xff] %vm2281, %v2208
      %2318 = vst.msk [vmem:[#allocation2 + $0x120] sm:$0xff] %vm2281, %v2210
      %2319 = vst.msk [vmem:[#allocation2 + $0x128] sm:$0xff] %vm2281, %v2212
      %2320 = vst.msk [vmem:[#allocation2 + $0x130] sm:$0xff] %vm2281, %v2214
      %2321 = vst.msk [vmem:[#allocation2 + $0x138] sm:$0xff] %vm2281, %v2216
      %2322 = vst.msk [vmem:[#allocation2 + $0x140] sm:$0xff] %vm2281, %v2218
      %2323 = vst.msk [vmem:[#allocation2 + $0x148] sm:$0xff] %vm2281, %v2220
      %2324 = vst.msk [vmem:[#allocation2 + $0x150] sm:$0xff] %vm2281, %v2222
      %2325 = vst.msk [vmem:[#allocation2 + $0x158] sm:$0xff] %vm2281, %v2224
      %2326 = vst.msk [vmem:[#allocation2 + $0x160] sm:$0xff] %vm2281, %v2226
      %2327 = vst.msk [vmem:[#allocation2 + $0x168] sm:$0xff] %vm2281, %v2228
      %2328 = vst.msk [vmem:[#allocation2 + $0x170] sm:$0xff] %vm2281, %v2230
      %2329 = vst.msk [vmem:[#allocation2 + $0x178] sm:$0xff] %vm2281, %v2232
      %s2330 = sadd.s32 %s194, 38
      %s2331 = scalar_lea.vmem %s183, %s2330
      %v2332 = vld [vmem:[%s2331] sm:$0xff]
      %v2333 = vld [vmem:[%s2331 + $0x8] sm:$0xff]
      %v2334 = vld [vmem:[%s2331 + $0x10] sm:$0xff]
      %v2335 = vld [vmem:[%s2331 + $0x18] sm:$0xff]
      %v2336 = vld [vmem:[%s2331 + $0x20] sm:$0xff]
      %v2337 = vld [vmem:[%s2331 + $0x28] sm:$0xff]
      %v2338 = vld [vmem:[%s2331 + $0x30] sm:$0xff]
      %v2339 = vld [vmem:[%s2331 + $0x38] sm:$0xff]
      %v2340 = vld [vmem:[%s2331 + $0x40] sm:$0xff]
      %v2341 = vld [vmem:[%s2331 + $0x48] sm:$0xff]
      %v2342 = vld [vmem:[%s2331 + $0x50] sm:$0xff]
      %v2343 = vld [vmem:[%s2331 + $0x58] sm:$0xff]
      %v2344 = vld [vmem:[%s2331 + $0x60] sm:$0xff]
      %v2345 = vld [vmem:[%s2331 + $0x68] sm:$0xff]
      %v2346 = vld [vmem:[%s2331 + $0x70] sm:$0xff]
      %v2347 = vld [vmem:[%s2331 + $0x78] sm:$0xff]
      %v2348 = vld [vmem:[%s2331 + $0x80] sm:$0xff]
      %v2349 = vld [vmem:[%s2331 + $0x88] sm:$0xff]
      %v2350 = vld [vmem:[%s2331 + $0x90] sm:$0xff]
      %v2351 = vld [vmem:[%s2331 + $0x98] sm:$0xff]
      %v2352 = vld [vmem:[%s2331 + $0xa0] sm:$0xff]
      %v2353 = vld [vmem:[%s2331 + $0xa8] sm:$0xff]
      %v2354 = vld [vmem:[%s2331 + $0xb0] sm:$0xff]
      %v2355 = vld [vmem:[%s2331 + $0xb8] sm:$0xff]
      %v2356 = vld [vmem:[%s2331 + $0xc0] sm:$0xff]
      %v2357 = vld [vmem:[%s2331 + $0xc8] sm:$0xff]
      %v2358 = vld [vmem:[%s2331 + $0xd0] sm:$0xff]
      %v2359 = vld [vmem:[%s2331 + $0xd8] sm:$0xff]
      %v2360 = vld [vmem:[%s2331 + $0xe0] sm:$0xff]
      %v2361 = vld [vmem:[%s2331 + $0xe8] sm:$0xff]
      %v2362 = vld [vmem:[%s2331 + $0xf0] sm:$0xff]
      %v2363 = vld [vmem:[%s2331 + $0xf8] sm:$0xff]
      %v2364 = vld [vmem:[%s2331 + $0x100] sm:$0xff]
      %v2365 = vld [vmem:[%s2331 + $0x108] sm:$0xff]
      %v2366 = vld [vmem:[%s2331 + $0x110] sm:$0xff]
      %v2367 = vld [vmem:[%s2331 + $0x118] sm:$0xff]
      %v2368 = vld [vmem:[%s2331 + $0x120] sm:$0xff]
      %v2369 = vld [vmem:[%s2331 + $0x128] sm:$0xff]
      %v2370 = vld [vmem:[%s2331 + $0x130] sm:$0xff]
      %v2371 = vld [vmem:[%s2331 + $0x138] sm:$0xff]
      %v2372 = vld [vmem:[%s2331 + $0x140] sm:$0xff]
      %v2373 = vld [vmem:[%s2331 + $0x148] sm:$0xff]
      %v2374 = vld [vmem:[%s2331 + $0x150] sm:$0xff]
      %v2375 = vld [vmem:[%s2331 + $0x158] sm:$0xff]
      %v2376 = vld [vmem:[%s2331 + $0x160] sm:$0xff]
      %v2377 = vld [vmem:[%s2331 + $0x168] sm:$0xff]
      %v2378 = vld [vmem:[%s2331 + $0x170] sm:$0xff]
      %v2379 = vld [vmem:[%s2331 + $0x178] sm:$0xff]
      %2428 = vrot.lane.b32.xlu0 %v2332, 32
      %v2429 = vpop.permute.xlu0 %2428
      %2430 = vrot.lane.b32.xlu0 %v2333, 32
      %v2431 = vpop.permute.xlu0 %2430
      %2432 = vrot.lane.b32.xlu0 %v2334, 32
      %v2433 = vpop.permute.xlu0 %2432
      %2434 = vrot.lane.b32.xlu0 %v2335, 32
      %v2435 = vpop.permute.xlu0 %2434
      %2436 = vrot.lane.b32.xlu0 %v2336, 32
      %v2437 = vpop.permute.xlu0 %2436
      %2438 = vrot.lane.b32.xlu0 %v2337, 32
      %v2439 = vpop.permute.xlu0 %2438
      %2440 = vrot.lane.b32.xlu0 %v2338, 32
      %v2441 = vpop.permute.xlu0 %2440
      %2442 = vrot.lane.b32.xlu0 %v2339, 32
      %v2443 = vpop.permute.xlu0 %2442
      %2444 = vrot.lane.b32.xlu0 %v2340, 32
      %v2445 = vpop.permute.xlu0 %2444
      %2446 = vrot.lane.b32.xlu0 %v2341, 32
      %v2447 = vpop.permute.xlu0 %2446
      %2448 = vrot.lane.b32.xlu0 %v2342, 32
      %v2449 = vpop.permute.xlu0 %2448
      %2450 = vrot.lane.b32.xlu0 %v2343, 32
      %v2451 = vpop.permute.xlu0 %2450
      %2452 = vrot.lane.b32.xlu0 %v2344, 32
      %v2453 = vpop.permute.xlu0 %2452
      %2454 = vrot.lane.b32.xlu0 %v2345, 32
      %v2455 = vpop.permute.xlu0 %2454
      %2456 = vrot.lane.b32.xlu0 %v2346, 32
      %v2457 = vpop.permute.xlu0 %2456
      %2458 = vrot.lane.b32.xlu0 %v2347, 32
      %v2459 = vpop.permute.xlu0 %2458
      %2460 = vrot.lane.b32.xlu0 %v2348, 32
      %v2461 = vpop.permute.xlu0 %2460
      %2462 = vrot.lane.b32.xlu0 %v2349, 32
      %v2463 = vpop.permute.xlu0 %2462
      %2464 = vrot.lane.b32.xlu0 %v2350, 32
      %v2465 = vpop.permute.xlu0 %2464
      %2466 = vrot.lane.b32.xlu0 %v2351, 32
      %v2467 = vpop.permute.xlu0 %2466
      %2468 = vrot.lane.b32.xlu0 %v2352, 32
      %v2469 = vpop.permute.xlu0 %2468
      %2470 = vrot.lane.b32.xlu0 %v2353, 32
      %v2471 = vpop.permute.xlu0 %2470
      %2472 = vrot.lane.b32.xlu0 %v2354, 32
      %v2473 = vpop.permute.xlu0 %2472
      %2474 = vrot.lane.b32.xlu0 %v2355, 32
      %v2475 = vpop.permute.xlu0 %2474
      %2476 = vrot.lane.b32.xlu0 %v2356, 32
      %v2477 = vpop.permute.xlu0 %2476
      %2478 = vrot.lane.b32.xlu0 %v2357, 32
      %v2479 = vpop.permute.xlu0 %2478
      %2480 = vrot.lane.b32.xlu0 %v2358, 32
      %v2481 = vpop.permute.xlu0 %2480
      %2482 = vrot.lane.b32.xlu0 %v2359, 32
      %v2483 = vpop.permute.xlu0 %2482
      %2484 = vrot.lane.b32.xlu0 %v2360, 32
      %v2485 = vpop.permute.xlu0 %2484
      %2486 = vrot.lane.b32.xlu0 %v2361, 32
      %v2487 = vpop.permute.xlu0 %2486
      %2488 = vrot.lane.b32.xlu0 %v2362, 32
      %v2489 = vpop.permute.xlu0 %2488
      %2490 = vrot.lane.b32.xlu0 %v2363, 32
      %v2491 = vpop.permute.xlu0 %2490
      %2492 = vrot.lane.b32.xlu0 %v2364, 32
      %v2493 = vpop.permute.xlu0 %2492
      %2494 = vrot.lane.b32.xlu0 %v2365, 32
      %v2495 = vpop.permute.xlu0 %2494
      %2496 = vrot.lane.b32.xlu0 %v2366, 32
      %v2497 = vpop.permute.xlu0 %2496
      %2498 = vrot.lane.b32.xlu0 %v2367, 32
      %v2499 = vpop.permute.xlu0 %2498
      %2500 = vrot.lane.b32.xlu0 %v2368, 32
      %v2501 = vpop.permute.xlu0 %2500
      %2502 = vrot.lane.b32.xlu0 %v2369, 32
      %v2503 = vpop.permute.xlu0 %2502
      %2504 = vrot.lane.b32.xlu0 %v2370, 32
      %v2505 = vpop.permute.xlu0 %2504
      %2506 = vrot.lane.b32.xlu0 %v2371, 32
      %v2507 = vpop.permute.xlu0 %2506
      %2508 = vrot.lane.b32.xlu0 %v2372, 32
      %v2509 = vpop.permute.xlu0 %2508
      %2510 = vrot.lane.b32.xlu0 %v2373, 32
      %v2511 = vpop.permute.xlu0 %2510
      %2512 = vrot.lane.b32.xlu0 %v2374, 32
      %v2513 = vpop.permute.xlu0 %2512
      %2514 = vrot.lane.b32.xlu0 %v2375, 32
      %v2515 = vpop.permute.xlu0 %2514
      %2516 = vrot.lane.b32.xlu0 %v2376, 32
      %v2517 = vpop.permute.xlu0 %2516
      %2518 = vrot.lane.b32.xlu0 %v2377, 32
      %v2519 = vpop.permute.xlu0 %2518
      %2520 = vrot.lane.b32.xlu0 %v2378, 32
      %v2521 = vpop.permute.xlu0 %2520
      %2522 = vrot.lane.b32.xlu0 %v2379, 32
      %v2523 = vpop.permute.xlu0 %2522
      %vm2572 = vcmask 294144
      %2573 = vst.msk [vmem:[#allocation2] sm:$0xff] %vm2572, %v2429
      %2574 = vst.msk [vmem:[#allocation2 + $0x8] sm:$0xff] %vm2572, %v2431
      %2575 = vst.msk [vmem:[#allocation2 + $0x10] sm:$0xff] %vm2572, %v2433
      %2576 = vst.msk [vmem:[#allocation2 + $0x18] sm:$0xff] %vm2572, %v2435
      %2577 = vst.msk [vmem:[#allocation2 + $0x20] sm:$0xff] %vm2572, %v2437
      %2578 = vst.msk [vmem:[#allocation2 + $0x28] sm:$0xff] %vm2572, %v2439
      %2579 = vst.msk [vmem:[#allocation2 + $0x30] sm:$0xff] %vm2572, %v2441
      %2580 = vst.msk [vmem:[#allocation2 + $0x38] sm:$0xff] %vm2572, %v2443
      %2581 = vst.msk [vmem:[#allocation2 + $0x40] sm:$0xff] %vm2572, %v2445
      %2582 = vst.msk [vmem:[#allocation2 + $0x48] sm:$0xff] %vm2572, %v2447
      %2583 = vst.msk [vmem:[#allocation2 + $0x50] sm:$0xff] %vm2572, %v2449
      %2584 = vst.msk [vmem:[#allocation2 + $0x58] sm:$0xff] %vm2572, %v2451
      %2585 = vst.msk [vmem:[#allocation2 + $0x60] sm:$0xff] %vm2572, %v2453
      %2586 = vst.msk [vmem:[#allocation2 + $0x68] sm:$0xff] %vm2572, %v2455
      %2587 = vst.msk [vmem:[#allocation2 + $0x70] sm:$0xff] %vm2572, %v2457
      %2588 = vst.msk [vmem:[#allocation2 + $0x78] sm:$0xff] %vm2572, %v2459
      %2589 = vst.msk [vmem:[#allocation2 + $0x80] sm:$0xff] %vm2572, %v2461
      %2590 = vst.msk [vmem:[#allocation2 + $0x88] sm:$0xff] %vm2572, %v2463
      %2591 = vst.msk [vmem:[#allocation2 + $0x90] sm:$0xff] %vm2572, %v2465
      %2592 = vst.msk [vmem:[#allocation2 + $0x98] sm:$0xff] %vm2572, %v2467
      %2593 = vst.msk [vmem:[#allocation2 + $0xa0] sm:$0xff] %vm2572, %v2469
      %2594 = vst.msk [vmem:[#allocation2 + $0xa8] sm:$0xff] %vm2572, %v2471
      %2595 = vst.msk [vmem:[#allocation2 + $0xb0] sm:$0xff] %vm2572, %v2473
      %2596 = vst.msk [vmem:[#allocation2 + $0xb8] sm:$0xff] %vm2572, %v2475
      %2597 = vst.msk [vmem:[#allocation2 + $0xc0] sm:$0xff] %vm2572, %v2477
      %2598 = vst.msk [vmem:[#allocation2 + $0xc8] sm:$0xff] %vm2572, %v2479
      %2599 = vst.msk [vmem:[#allocation2 + $0xd0] sm:$0xff] %vm2572, %v2481
      %2600 = vst.msk [vmem:[#allocation2 + $0xd8] sm:$0xff] %vm2572, %v2483
      %2601 = vst.msk [vmem:[#allocation2 + $0xe0] sm:$0xff] %vm2572, %v2485
      %2602 = vst.msk [vmem:[#allocation2 + $0xe8] sm:$0xff] %vm2572, %v2487
      %2603 = vst.msk [vmem:[#allocation2 + $0xf0] sm:$0xff] %vm2572, %v2489
      %2604 = vst.msk [vmem:[#allocation2 + $0xf8] sm:$0xff] %vm2572, %v2491
      %2605 = vst.msk [vmem:[#allocation2 + $0x100] sm:$0xff] %vm2572, %v2493
      %2606 = vst.msk [vmem:[#allocation2 + $0x108] sm:$0xff] %vm2572, %v2495
      %2607 = vst.msk [vmem:[#allocation2 + $0x110] sm:$0xff] %vm2572, %v2497
      %2608 = vst.msk [vmem:[#allocation2 + $0x118] sm:$0xff] %vm2572, %v2499
      %2609 = vst.msk [vmem:[#allocation2 + $0x120] sm:$0xff] %vm2572, %v2501
      %2610 = vst.msk [vmem:[#allocation2 + $0x128] sm:$0xff] %vm2572, %v2503
      %2611 = vst.msk [vmem:[#allocation2 + $0x130] sm:$0xff] %vm2572, %v2505
      %2612 = vst.msk [vmem:[#allocation2 + $0x138] sm:$0xff] %vm2572, %v2507
      %2613 = vst.msk [vmem:[#allocation2 + $0x140] sm:$0xff] %vm2572, %v2509
      %2614 = vst.msk [vmem:[#allocation2 + $0x148] sm:$0xff] %vm2572, %v2511
      %2615 = vst.msk [vmem:[#allocation2 + $0x150] sm:$0xff] %vm2572, %v2513
      %2616 = vst.msk [vmem:[#allocation2 + $0x158] sm:$0xff] %vm2572, %v2515
      %2617 = vst.msk [vmem:[#allocation2 + $0x160] sm:$0xff] %vm2572, %v2517
      %2618 = vst.msk [vmem:[#allocation2 + $0x168] sm:$0xff] %vm2572, %v2519
      %2619 = vst.msk [vmem:[#allocation2 + $0x170] sm:$0xff] %vm2572, %v2521
      %2620 = vst.msk [vmem:[#allocation2 + $0x178] sm:$0xff] %vm2572, %v2523
      %v2621 = vld [vmem:[%s0] sm:$0xff]
      %v2622 = vld [vmem:[#allocation2] sm:$0xff]
      %v2623 = vld [vmem:[#allocation2 + $0x8] sm:$0xff]
      %v2624 = vld [vmem:[#allocation2 + $0x10] sm:$0xff]
      %v2625 = vld [vmem:[#allocation2 + $0x18] sm:$0xff]
      %v2626 = vld [vmem:[#allocation2 + $0x20] sm:$0xff]
      %v2627 = vld [vmem:[#allocation2 + $0x28] sm:$0xff]
      %v2628 = vld [vmem:[#allocation2 + $0x30] sm:$0xff]
      %v2629 = vld [vmem:[#allocation2 + $0x38] sm:$0xff]
      %v2630 = vld [vmem:[#allocation2 + $0x40] sm:$0xff]
      %v2631 = vld [vmem:[#allocation2 + $0x48] sm:$0xff]
      %v2632 = vld [vmem:[#allocation2 + $0x50] sm:$0xff]
      %v2633 = vld [vmem:[#allocation2 + $0x58] sm:$0xff]
      %v2634 = vld [vmem:[#allocation2 + $0x60] sm:$0xff]
      %v2635 = vld [vmem:[#allocation2 + $0x68] sm:$0xff]
      %v2636 = vld [vmem:[#allocation2 + $0x70] sm:$0xff]
      %v2637 = vld [vmem:[#allocation2 + $0x78] sm:$0xff]
      %v2638 = vld [vmem:[#allocation2 + $0x80] sm:$0xff]
      %v2639 = vld [vmem:[#allocation2 + $0x88] sm:$0xff]
      %v2640 = vld [vmem:[#allocation2 + $0x90] sm:$0xff]
      %v2641 = vld [vmem:[#allocation2 + $0x98] sm:$0xff]
      %v2642 = vld [vmem:[#allocation2 + $0xa0] sm:$0xff]
      %v2643 = vld [vmem:[#allocation2 + $0xa8] sm:$0xff]
      %v2644 = vld [vmem:[#allocation2 + $0xb0] sm:$0xff]
      %v2645 = vld [vmem:[#allocation2 + $0xb8] sm:$0xff]
      %v2646 = vld [vmem:[#allocation2 + $0xc0] sm:$0xff]
      %v2647 = vld [vmem:[#allocation2 + $0xc8] sm:$0xff]
      %v2648 = vld [vmem:[#allocation2 + $0xd0] sm:$0xff]
      %v2649 = vld [vmem:[#allocation2 + $0xd8] sm:$0xff]
      %v2650 = vld [vmem:[#allocation2 + $0xe0] sm:$0xff]
      %v2651 = vld [vmem:[#allocation2 + $0xe8] sm:$0xff]
      %v2652 = vld [vmem:[#allocation2 + $0xf0] sm:$0xff]
      %v2653 = vld [vmem:[#allocation2 + $0xf8] sm:$0xff]
      %v2654 = vld [vmem:[#allocation2 + $0x100] sm:$0xff]
      %v2655 = vld [vmem:[#allocation2 + $0x108] sm:$0xff]
      %v2656 = vld [vmem:[#allocation2 + $0x110] sm:$0xff]
      %v2657 = vld [vmem:[#allocation2 + $0x118] sm:$0xff]
      %v2658 = vld [vmem:[#allocation2 + $0x120] sm:$0xff]
      %v2659 = vld [vmem:[#allocation2 + $0x128] sm:$0xff]
      %v2660 = vld [vmem:[#allocation2 + $0x130] sm:$0xff]
      %v2661 = vld [vmem:[#allocation2 + $0x138] sm:$0xff]
      %v2662 = vld [vmem:[#allocation2 + $0x140] sm:$0xff]
      %v2663 = vld [vmem:[#allocation2 + $0x148] sm:$0xff]
      %v2664 = vld [vmem:[#allocation2 + $0x150] sm:$0xff]
      %v2665 = vld [vmem:[#allocation2 + $0x158] sm:$0xff]
      %v2666 = vld [vmem:[#allocation2 + $0x160] sm:$0xff]
      %v2667 = vld [vmem:[#allocation2 + $0x168] sm:$0xff]
      %v2668 = vld [vmem:[#allocation2 + $0x170] sm:$0xff]
      %v2669 = vld [vmem:[#allocation2 + $0x178] sm:$0xff]
      %v2670 = vld [vmem:[%s1] sm:$0xff]
      %2672 = vset.pattern.permute.xlu0 0
      %2673 = vperm.xlu0 %2672, %v2670
      %v2674 = vpop.permute.xlu0 %2673
      %vm2676 = vcmask 293888
      %v2678 = vsel %vm2676, %v2621, 0
      %v2681 = vsel %vm2676, %v2622, 0
      %v2684 = vsel %vm2676, %v2623, 0
      %v2687 = vsel %vm2676, %v2624, 0
      %v2690 = vsel %vm2676, %v2625, 0
      %v2693 = vsel %vm2676, %v2626, 0
      %v2696 = vsel %vm2676, %v2627, 0
      %v2699 = vsel %vm2676, %v2628, 0
      %v2702 = vsel %vm2676, %v2629, 0
      %v2705 = vsel %vm2676, %v2630, 0
      %v2708 = vsel %vm2676, %v2631, 0
      %v2711 = vsel %vm2676, %v2632, 0
      %v2714 = vsel %vm2676, %v2633, 0
      %v2717 = vsel %vm2676, %v2634, 0
      %v2720 = vsel %vm2676, %v2635, 0
      %v2723 = vsel %vm2676, %v2636, 0
      %v2726 = vsel %vm2676, %v2637, 0
      %v2729 = vsel %vm2676, %v2638, 0
      %v2732 = vsel %vm2676, %v2639, 0
      %v2735 = vsel %vm2676, %v2640, 0
      %v2738 = vsel %vm2676, %v2641, 0
      %v2741 = vsel %vm2676, %v2642, 0
      %v2744 = vsel %vm2676, %v2643, 0
      %v2747 = vsel %vm2676, %v2644, 0
      %v2750 = vsel %vm2676, %v2645, 0
      %v2753 = vsel %vm2676, %v2646, 0
      %v2756 = vsel %vm2676, %v2647, 0
      %v2759 = vsel %vm2676, %v2648, 0
      %v2762 = vsel %vm2676, %v2649, 0
      %v2765 = vsel %vm2676, %v2650, 0
      %v2768 = vsel %vm2676, %v2651, 0
      %v2771 = vsel %vm2676, %v2652, 0
      %v2774 = vsel %vm2676, %v2653, 0
      %v2777 = vsel %vm2676, %v2654, 0
      %v2780 = vsel %vm2676, %v2655, 0
      %v2783 = vsel %vm2676, %v2656, 0
      %v2786 = vsel %vm2676, %v2657, 0
      %v2789 = vsel %vm2676, %v2658, 0
      %v2792 = vsel %vm2676, %v2659, 0
      %v2795 = vsel %vm2676, %v2660, 0
      %v2798 = vsel %vm2676, %v2661, 0
      %v2801 = vsel %vm2676, %v2662, 0
      %v2804 = vsel %vm2676, %v2663, 0
      %v2807 = vsel %vm2676, %v2664, 0
      %v2810 = vsel %vm2676, %v2665, 0
      %v2813 = vsel %vm2676, %v2666, 0
      %v2816 = vsel %vm2676, %v2667, 0
      %v2819 = vsel %vm2676, %v2668, 0
      %v2822 = vsel %vm2676, %v2669, 0
      %2824 = vmatprep.subr.mxu0 0.0
      %v2825 = vand.u32 %v2681, 4294901760
      %2826 = vmatpush1.xpose.msra.mxu0 %v2825
      %2827 = vmatprep.subr.mxu0 0.0
      %v2828 = vand.u32 %v2684, 4294901760
      %2829 = vmatpush1.xpose.msra.mxu0 %v2828
      %2830 = vmatprep.subr.mxu0 0.0
      %v2831 = vand.u32 %v2687, 4294901760
      %2832 = vmatpush1.xpose.msra.mxu0 %v2831
      %2833 = vmatprep.subr.mxu0 0.0
      %v2834 = vand.u32 %v2690, 4294901760
      %2835 = vmatpush1.xpose.msra.mxu0 %v2834
      %2836 = vmatprep.subr.mxu0 0.0
      %v2837 = vand.u32 %v2693, 4294901760
      %2838 = vmatpush1.xpose.msra.mxu0 %v2837
      %2839 = vmatprep.subr.mxu0 0.0
      %v2840 = vand.u32 %v2696, 4294901760
      %2841 = vmatpush1.xpose.msra.mxu0 %v2840
      %2842 = vmatprep.subr.mxu0 0.0
      %v2843 = vand.u32 %v2699, 4294901760
      %2844 = vmatpush1.xpose.msra.mxu0 %v2843
      %2845 = vmatprep.subr.mxu0 0.0
      %v2846 = vand.u32 %v2702, 4294901760
      %2847 = vmatpush1.xpose.msra.mxu0 %v2846
      %2848 = vmatprep.subr.mxu0 0.0
      %v2849 = vand.u32 %v2705, 4294901760
      %2850 = vmatpush1.xpose.msra.mxu0 %v2849
      %2851 = vmatprep.subr.mxu0 0.0
      %v2852 = vand.u32 %v2708, 4294901760
      %2853 = vmatpush1.xpose.msra.mxu0 %v2852
      %2854 = vmatprep.subr.mxu0 0.0
      %v2855 = vand.u32 %v2711, 4294901760
      %2856 = vmatpush1.xpose.msra.mxu0 %v2855
      %2857 = vmatprep.subr.mxu0 0.0
      %v2858 = vand.u32 %v2714, 4294901760
      %2859 = vmatpush1.xpose.msra.mxu0 %v2858
      %2860 = vmatprep.subr.mxu0 0.0
      %v2861 = vand.u32 %v2717, 4294901760
      %2862 = vmatpush1.xpose.msra.mxu0 %v2861
      %2863 = vmatprep.subr.mxu0 0.0
      %v2864 = vand.u32 %v2720, 4294901760
      %2865 = vmatpush1.xpose.msra.mxu0 %v2864
      %2866 = vmatprep.subr.mxu0 0.0
      %v2867 = vand.u32 %v2723, 4294901760
      %2868 = vmatpush1.xpose.msra.mxu0 %v2867
      %2869 = vmatprep.subr.mxu0 0.0
      %v2870 = vand.u32 %v2726, 4294901760
      %2871 = vmatpush1.xpose.msra.mxu0 %v2870
      %2872 = vmatprep.subr.mxu0 0.0
      %v2873 = vand.u32 %v2729, 4294901760
      %2874 = vmatpush1.xpose.msra.mxu0 %v2873
      %2875 = vmatprep.subr.mxu0 0.0
      %v2876 = vand.u32 %v2732, 4294901760
      %2877 = vmatpush1.xpose.msra.mxu0 %v2876
      %2878 = vmatprep.subr.mxu0 0.0
      %v2879 = vand.u32 %v2735, 4294901760
      %2880 = vmatpush1.xpose.msra.mxu0 %v2879
      %2881 = vmatprep.subr.mxu0 0.0
      %v2882 = vand.u32 %v2738, 4294901760
      %2883 = vmatpush1.xpose.msra.mxu0 %v2882
      %2884 = vmatprep.subr.mxu0 0.0
      %v2885 = vand.u32 %v2741, 4294901760
      %2886 = vmatpush1.xpose.msra.mxu0 %v2885
      %2887 = vmatprep.subr.mxu0 0.0
      %v2888 = vand.u32 %v2744, 4294901760
      %2889 = vmatpush1.xpose.msra.mxu0 %v2888
      %2890 = vmatprep.subr.mxu0 0.0
      %v2891 = vand.u32 %v2747, 4294901760
      %2892 = vmatpush1.xpose.msra.mxu0 %v2891
      %2893 = vmatprep.subr.mxu0 0.0
      %v2894 = vand.u32 %v2750, 4294901760
      %2895 = vmatpush1.xpose.msra.mxu0 %v2894
      %2896 = vmatprep.subr.mxu0 0.0
      %v2897 = vand.u32 %v2753, 4294901760
      %2898 = vmatpush1.xpose.msra.mxu0 %v2897
      %2899 = vmatprep.subr.mxu0 0.0
      %v2900 = vand.u32 %v2756, 4294901760
      %2901 = vmatpush1.xpose.msra.mxu0 %v2900
      %2902 = vmatprep.subr.mxu0 0.0
      %v2903 = vand.u32 %v2759, 4294901760
      %2904 = vmatpush1.xpose.msra.mxu0 %v2903
      %2905 = vmatprep.subr.mxu0 0.0
      %v2906 = vand.u32 %v2762, 4294901760
      %2907 = vmatpush1.xpose.msra.mxu0 %v2906
      %2908 = vmatprep.subr.mxu0 0.0
      %v2909 = vand.u32 %v2765, 4294901760
      %2910 = vmatpush1.xpose.msra.mxu0 %v2909
      %2911 = vmatprep.subr.mxu0 0.0
      %v2912 = vand.u32 %v2768, 4294901760
      %2913 = vmatpush1.xpose.msra.mxu0 %v2912
      %2914 = vmatprep.subr.mxu0 0.0
      %v2915 = vand.u32 %v2771, 4294901760
      %2916 = vmatpush1.xpose.msra.mxu0 %v2915
      %2917 = vmatprep.subr.mxu0 0.0
      %v2918 = vand.u32 %v2774, 4294901760
      %2919 = vmatpush1.xpose.msra.mxu0 %v2918
      %2920 = vmatprep.mubr.f32.mxu0 0.0
      %v2921 = vand.u32 %v2678, 4294901760
      %v2922 = vsub.f32 %v2678, %v2921
      %v2923 = vand.u32 %v2922, 4294901760
      %v2924 = vsub.f32 %v2922, %v2923
      %v2925 = vand.u32 %v2924, 4294901760
      %2926 = vmatmul.mubr.f32.gmra.mrb[0].mxu0 %v2925
      %v2927 = vpop.f32.mrb[0].mxu0
      %v2928 = vadd.f32 %v2674, %v2927
      %v2929 = vpop.f32.mrb[0].mxu0
      %v2930 = vadd.f32 %v2674, %v2929
      %2931 = vdwg.mxu0
      %2932 = vmatprep.subr.mxu0 0.0
      %v2933 = vand.u32 %v2681, 4294901760
      %v2934 = vsub.f32 %v2681, %v2933
      %v2935 = vand.u32 %v2934, 4294901760
      %v2936 = vsub.f32 %v2934, %v2935
      %v2937 = vand.u32 %v2936, 4294901760
      %2938 = vmatpush1.xpose.msra.mxu0 %v2937
      %2939 = vmatprep.subr.mxu0 0.0
      %v2940 = vand.u32 %v2684, 4294901760
      %v2941 = vsub.f32 %v2684, %v2940
      %v2942 = vand.u32 %v2941, 4294901760
      %v2943 = vsub.f32 %v2941, %v2942
      %v2944 = vand.u32 %v2943, 4294901760
      %2945 = vmatpush1.xpose.msra.mxu0 %v2944
      %2946 = vmatprep.subr.mxu0 0.0
      %v2947 = vand.u32 %v2687, 4294901760
      %v2948 = vsub.f32 %v2687, %v2947
      %v2949 = vand.u32 %v2948, 4294901760
      %v2950 = vsub.f32 %v2948, %v2949
      %v2951 = vand.u32 %v2950, 4294901760
      %2952 = vmatpush1.xpose.msra.mxu0 %v2951
      %2953 = vmatprep.subr.mxu0 0.0
      %v2954 = vand.u32 %v2690, 4294901760
      %v2955 = vsub.f32 %v2690, %v2954
      %v2956 = vand.u32 %v2955, 4294901760
      %v2957 = vsub.f32 %v2955, %v2956
      %v2958 = vand.u32 %v2957, 4294901760
      %2959 = vmatpush1.xpose.msra.mxu0 %v2958
      %2960 = vmatprep.subr.mxu0 0.0
      %v2961 = vand.u32 %v2693, 4294901760
      %v2962 = vsub.f32 %v2693, %v2961
      %v2963 = vand.u32 %v2962, 4294901760
      %v2964 = vsub.f32 %v2962, %v2963
      %v2965 = vand.u32 %v2964, 4294901760
      %2966 = vmatpush1.xpose.msra.mxu0 %v2965
      %2967 = vmatprep.subr.mxu0 0.0
      %v2968 = vand.u32 %v2696, 4294901760
      %v2969 = vsub.f32 %v2696, %v2968
      %v2970 = vand.u32 %v2969, 4294901760
      %v2971 = vsub.f32 %v2969, %v2970
      %v2972 = vand.u32 %v2971, 4294901760
      %2973 = vmatpush1.xpose.msra.mxu0 %v2972
      %2974 = vmatprep.subr.mxu0 0.0
      %v2975 = vand.u32 %v2699, 4294901760
      %v2976 = vsub.f32 %v2699, %v2975
      %v2977 = vand.u32 %v2976, 4294901760
      %v2978 = vsub.f32 %v2976, %v2977
      %v2979 = vand.u32 %v2978, 4294901760
      %2980 = vmatpush1.xpose.msra.mxu0 %v2979
      %2981 = vmatprep.subr.mxu0 0.0
      %v2982 = vand.u32 %v2702, 4294901760
      %v2983 = vsub.f32 %v2702, %v2982
      %v2984 = vand.u32 %v2983, 4294901760
      %v2985 = vsub.f32 %v2983, %v2984
      %v2986 = vand.u32 %v2985, 4294901760
      %2987 = vmatpush1.xpose.msra.mxu0 %v2986
      %2988 = vmatprep.subr.mxu0 0.0
      %v2989 = vand.u32 %v2705, 4294901760
      %v2990 = vsub.f32 %v2705, %v2989
      %v2991 = vand.u32 %v2990, 4294901760
      %v2992 = vsub.f32 %v2990, %v2991
      %v2993 = vand.u32 %v2992, 4294901760
      %2994 = vmatpush1.xpose.msra.mxu0 %v2993
      %2995 = vmatprep.subr.mxu0 0.0
      %v2996 = vand.u32 %v2708, 4294901760
      %v2997 = vsub.f32 %v2708, %v2996
      %v2998 = vand.u32 %v2997, 4294901760
      %v2999 = vsub.f32 %v2997, %v2998
      %v3000 = vand.u32 %v2999, 4294901760
      %3001 = vmatpush1.xpose.msra.mxu0 %v3000
      %3002 = vmatprep.subr.mxu0 0.0
      %v3003 = vand.u32 %v2711, 4294901760
      %v3004 = vsub.f32 %v2711, %v3003
      %v3005 = vand.u32 %v3004, 4294901760
      %v3006 = vsub.f32 %v3004, %v3005
      %v3007 = vand.u32 %v3006, 4294901760
      %3008 = vmatpush1.xpose.msra.mxu0 %v3007
      %3009 = vmatprep.subr.mxu0 0.0
      %v3010 = vand.u32 %v2714, 4294901760
      %v3011 = vsub.f32 %v2714, %v3010
      %v3012 = vand.u32 %v3011, 4294901760
      %v3013 = vsub.f32 %v3011, %v3012
      %v3014 = vand.u32 %v3013, 4294901760
      %3015 = vmatpush1.xpose.msra.mxu0 %v3014
      %3016 = vmatprep.subr.mxu0 0.0
      %v3017 = vand.u32 %v2717, 4294901760
      %v3018 = vsub.f32 %v2717, %v3017
      %v3019 = vand.u32 %v3018, 4294901760
      %v3020 = vsub.f32 %v3018, %v3019
      %v3021 = vand.u32 %v3020, 4294901760
      %3022 = vmatpush1.xpose.msra.mxu0 %v3021
      %3023 = vmatprep.subr.mxu0 0.0
      %v3024 = vand.u32 %v2720, 4294901760
      %v3025 = vsub.f32 %v2720, %v3024
      %v3026 = vand.u32 %v3025, 4294901760
      %v3027 = vsub.f32 %v3025, %v3026
      %v3028 = vand.u32 %v3027, 4294901760
      %3029 = vmatpush1.xpose.msra.mxu0 %v3028
      %3030 = vmatprep.subr.mxu0 0.0
      %v3031 = vand.u32 %v2723, 4294901760
      %v3032 = vsub.f32 %v2723, %v3031
      %v3033 = vand.u32 %v3032, 4294901760
      %v3034 = vsub.f32 %v3032, %v3033
      %v3035 = vand.u32 %v3034, 4294901760
      %3036 = vmatpush1.xpose.msra.mxu0 %v3035
      %3037 = vmatprep.subr.mxu0 0.0
      %v3038 = vand.u32 %v2726, 4294901760
      %v3039 = vsub.f32 %v2726, %v3038
      %v3040 = vand.u32 %v3039, 4294901760
      %v3041 = vsub.f32 %v3039, %v3040
      %v3042 = vand.u32 %v3041, 4294901760
      %3043 = vmatpush1.xpose.msra.mxu0 %v3042
      %3044 = vmatprep.subr.mxu0 0.0
      %v3045 = vand.u32 %v2729, 4294901760
      %v3046 = vsub.f32 %v2729, %v3045
      %v3047 = vand.u32 %v3046, 4294901760
      %v3048 = vsub.f32 %v3046, %v3047
      %v3049 = vand.u32 %v3048, 4294901760
      %3050 = vmatpush1.xpose.msra.mxu0 %v3049
      %3051 = vmatprep.subr.mxu0 0.0
      %v3052 = vand.u32 %v2732, 4294901760
      %v3053 = vsub.f32 %v2732, %v3052
      %v3054 = vand.u32 %v3053, 4294901760
      %v3055 = vsub.f32 %v3053, %v3054
      %v3056 = vand.u32 %v3055, 4294901760
      %3057 = vmatpush1.xpose.msra.mxu0 %v3056
      %3058 = vmatprep.subr.mxu0 0.0
      %v3059 = vand.u32 %v2735, 4294901760
      %v3060 = vsub.f32 %v2735, %v3059
      %v3061 = vand.u32 %v3060, 4294901760
      %v3062 = vsub.f32 %v3060, %v3061
      %v3063 = vand.u32 %v3062, 4294901760
      %3064 = vmatpush1.xpose.msra.mxu0 %v3063
      %3065 = vmatprep.subr.mxu0 0.0
      %v3066 = vand.u32 %v2738, 4294901760
      %v3067 = vsub.f32 %v2738, %v3066
      %v3068 = vand.u32 %v3067, 4294901760
      %v3069 = vsub.f32 %v3067, %v3068
      %v3070 = vand.u32 %v3069, 4294901760
      %3071 = vmatpush1.xpose.msra.mxu0 %v3070
      %3072 = vmatprep.subr.mxu0 0.0
      %v3073 = vand.u32 %v2741, 4294901760
      %v3074 = vsub.f32 %v2741, %v3073
      %v3075 = vand.u32 %v3074, 4294901760
      %v3076 = vsub.f32 %v3074, %v3075
      %v3077 = vand.u32 %v3076, 4294901760
      %3078 = vmatpush1.xpose.msra.mxu0 %v3077
      %3079 = vmatprep.subr.mxu0 0.0
      %v3080 = vand.u32 %v2744, 4294901760
      %v3081 = vsub.f32 %v2744, %v3080
      %v3082 = vand.u32 %v3081, 4294901760
      %v3083 = vsub.f32 %v3081, %v3082
      %v3084 = vand.u32 %v3083, 4294901760
      %3085 = vmatpush1.xpose.msra.mxu0 %v3084
      %3086 = vmatprep.subr.mxu0 0.0
      %v3087 = vand.u32 %v2747, 4294901760
      %v3088 = vsub.f32 %v2747, %v3087
      %v3089 = vand.u32 %v3088, 4294901760
      %v3090 = vsub.f32 %v3088, %v3089
      %v3091 = vand.u32 %v3090, 4294901760
      %3092 = vmatpush1.xpose.msra.mxu0 %v3091
      %3093 = vmatprep.subr.mxu0 0.0
      %v3094 = vand.u32 %v2750, 4294901760
      %v3095 = vsub.f32 %v2750, %v3094
      %v3096 = vand.u32 %v3095, 4294901760
      %v3097 = vsub.f32 %v3095, %v3096
      %v3098 = vand.u32 %v3097, 4294901760
      %3099 = vmatpush1.xpose.msra.mxu0 %v3098
      %3100 = vmatprep.subr.mxu0 0.0
      %v3101 = vand.u32 %v2753, 4294901760
      %v3102 = vsub.f32 %v2753, %v3101
      %v3103 = vand.u32 %v3102, 4294901760
      %v3104 = vsub.f32 %v3102, %v3103
      %v3105 = vand.u32 %v3104, 4294901760
      %3106 = vmatpush1.xpose.msra.mxu0 %v3105
      %3107 = vmatprep.subr.mxu0 0.0
      %v3108 = vand.u32 %v2756, 4294901760
      %v3109 = vsub.f32 %v2756, %v3108
      %v3110 = vand.u32 %v3109, 4294901760
      %v3111 = vsub.f32 %v3109, %v3110
      %v3112 = vand.u32 %v3111, 4294901760
      %3113 = vmatpush1.xpose.msra.mxu0 %v3112
      %3114 = vmatprep.subr.mxu0 0.0
      %v3115 = vand.u32 %v2759, 4294901760
      %v3116 = vsub.f32 %v2759, %v3115
      %v3117 = vand.u32 %v3116, 4294901760
      %v3118 = vsub.f32 %v3116, %v3117
      %v3119 = vand.u32 %v3118, 4294901760
      %3120 = vmatpush1.xpose.msra.mxu0 %v3119
      %3121 = vmatprep.subr.mxu0 0.0
      %v3122 = vand.u32 %v2762, 4294901760
      %v3123 = vsub.f32 %v2762, %v3122
      %v3124 = vand.u32 %v3123, 4294901760
      %v3125 = vsub.f32 %v3123, %v3124
      %v3126 = vand.u32 %v3125, 4294901760
      %3127 = vmatpush1.xpose.msra.mxu0 %v3126
      %3128 = vmatprep.subr.mxu0 0.0
      %v3129 = vand.u32 %v2765, 4294901760
      %v3130 = vsub.f32 %v2765, %v3129
      %v3131 = vand.u32 %v3130, 4294901760
      %v3132 = vsub.f32 %v3130, %v3131
      %v3133 = vand.u32 %v3132, 4294901760
      %3134 = vmatpush1.xpose.msra.mxu0 %v3133
      %3135 = vmatprep.subr.mxu0 0.0
      %v3136 = vand.u32 %v2768, 4294901760
      %v3137 = vsub.f32 %v2768, %v3136
      %v3138 = vand.u32 %v3137, 4294901760
      %v3139 = vsub.f32 %v3137, %v3138
      %v3140 = vand.u32 %v3139, 4294901760
      %3141 = vmatpush1.xpose.msra.mxu0 %v3140
      %3142 = vmatprep.subr.mxu0 0.0
      %v3143 = vand.u32 %v2771, 4294901760
      %v3144 = vsub.f32 %v2771, %v3143
      %v3145 = vand.u32 %v3144, 4294901760
      %v3146 = vsub.f32 %v3144, %v3145
      %v3147 = vand.u32 %v3146, 4294901760
      %3148 = vmatpush1.xpose.msra.mxu0 %v3147
      %3149 = vmatprep.subr.mxu0 0.0
      %v3150 = vand.u32 %v2774, 4294901760
      %v3151 = vsub.f32 %v2774, %v3150
      %v3152 = vand.u32 %v3151, 4294901760
      %v3153 = vsub.f32 %v3151, %v3152
      %v3154 = vand.u32 %v3153, 4294901760
      %3155 = vmatpush1.xpose.msra.mxu0 %v3154
      %3156 = vmatprep.mubr.f32.mxu0 0.0
      %v3157 = vand.u32 %v2678, 4294901760
      %3158 = vmatmul.mubr.f32.gmra.mrb[0].mxu0 %v3157
      %v3159 = vpop.f32.mrb[0].mxu0
      %v3160 = vadd.f32 %v2928, %v3159
      %v3161 = vpop.f32.mrb[0].mxu0
      %v3162 = vadd.f32 %v2930, %v3161
      %3163 = vdwg.mxu0
      %3164 = vmatprep.subr.mxu0 0.0
      %v3165 = vand.u32 %v2681, 4294901760
      %v3166 = vsub.f32 %v2681, %v3165
      %3167 = vmatpush1.xpose.msra.mxu0 %v3166
      %3168 = vmatprep.subr.mxu0 0.0
      %v3169 = vand.u32 %v2684, 4294901760
      %v3170 = vsub.f32 %v2684, %v3169
      %3171 = vmatpush1.xpose.msra.mxu0 %v3170
      %3172 = vmatprep.subr.mxu0 0.0
      %v3173 = vand.u32 %v2687, 4294901760
      %v3174 = vsub.f32 %v2687, %v3173
      %3175 = vmatpush1.xpose.msra.mxu0 %v3174
      %3176 = vmatprep.subr.mxu0 0.0
      %v3177 = vand.u32 %v2690, 4294901760
      %v3178 = vsub.f32 %v2690, %v3177
      %3179 = vmatpush1.xpose.msra.mxu0 %v3178
      %3180 = vmatprep.subr.mxu0 0.0
      %v3181 = vand.u32 %v2693, 4294901760
      %v3182 = vsub.f32 %v2693, %v3181
      %3183 = vmatpush1.xpose.msra.mxu0 %v3182
      %3184 = vmatprep.subr.mxu0 0.0
      %v3185 = vand.u32 %v2696, 4294901760
      %v3186 = vsub.f32 %v2696, %v3185
      %3187 = vmatpush1.xpose.msra.mxu0 %v3186
      %3188 = vmatprep.subr.mxu0 0.0
      %v3189 = vand.u32 %v2699, 4294901760
      %v3190 = vsub.f32 %v2699, %v3189
      %3191 = vmatpush1.xpose.msra.mxu0 %v3190
      %3192 = vmatprep.subr.mxu0 0.0
      %v3193 = vand.u32 %v2702, 4294901760
      %v3194 = vsub.f32 %v2702, %v3193
      %3195 = vmatpush1.xpose.msra.mxu0 %v3194
      %3196 = vmatprep.subr.mxu0 0.0
      %v3197 = vand.u32 %v2705, 4294901760
      %v3198 = vsub.f32 %v2705, %v3197
      %3199 = vmatpush1.xpose.msra.mxu0 %v3198
      %3200 = vmatprep.subr.mxu0 0.0
      %v3201 = vand.u32 %v2708, 4294901760
      %v3202 = vsub.f32 %v2708, %v3201
      %3203 = vmatpush1.xpose.msra.mxu0 %v3202
      %3204 = vmatprep.subr.mxu0 0.0
      %v3205 = vand.u32 %v2711, 4294901760
      %v3206 = vsub.f32 %v2711, %v3205
      %3207 = vmatpush1.xpose.msra.mxu0 %v3206
      %3208 = vmatprep.subr.mxu0 0.0
      %v3209 = vand.u32 %v2714, 4294901760
      %v3210 = vsub.f32 %v2714, %v3209
      %3211 = vmatpush1.xpose.msra.mxu0 %v3210
      %3212 = vmatprep.subr.mxu0 0.0
      %v3213 = vand.u32 %v2717, 4294901760
      %v3214 = vsub.f32 %v2717, %v3213
      %3215 = vmatpush1.xpose.msra.mxu0 %v3214
      %3216 = vmatprep.subr.mxu0 0.0
      %v3217 = vand.u32 %v2720, 4294901760
      %v3218 = vsub.f32 %v2720, %v3217
      %3219 = vmatpush1.xpose.msra.mxu0 %v3218
      %3220 = vmatprep.subr.mxu0 0.0
      %v3221 = vand.u32 %v2723, 4294901760
      %v3222 = vsub.f32 %v2723, %v3221
      %3223 = vmatpush1.xpose.msra.mxu0 %v3222
      %3224 = vmatprep.subr.mxu0 0.0
      %v3225 = vand.u32 %v2726, 4294901760
      %v3226 = vsub.f32 %v2726, %v3225
      %3227 = vmatpush1.xpose.msra.mxu0 %v3226
      %3228 = vmatprep.subr.mxu0 0.0
      %v3229 = vand.u32 %v2729, 4294901760
      %v3230 = vsub.f32 %v2729, %v3229
      %3231 = vmatpush1.xpose.msra.mxu0 %v3230
      %3232 = vmatprep.subr.mxu0 0.0
      %v3233 = vand.u32 %v2732, 4294901760
      %v3234 = vsub.f32 %v2732, %v3233
      %3235 = vmatpush1.xpose.msra.mxu0 %v3234
      %3236 = vmatprep.subr.mxu0 0.0
      %v3237 = vand.u32 %v2735, 4294901760
      %v3238 = vsub.f32 %v2735, %v3237
      %3239 = vmatpush1.xpose.msra.mxu0 %v3238
      %3240 = vmatprep.subr.mxu0 0.0
      %v3241 = vand.u32 %v2738, 4294901760
      %v3242 = vsub.f32 %v2738, %v3241
      %3243 = vmatpush1.xpose.msra.mxu0 %v3242
      %3244 = vmatprep.subr.mxu0 0.0
      %v3245 = vand.u32 %v2741, 4294901760
      %v3246 = vsub.f32 %v2741, %v3245
      %3247 = vmatpush1.xpose.msra.mxu0 %v3246
      %3248 = vmatprep.subr.mxu0 0.0
      %v3249 = vand.u32 %v2744, 4294901760
      %v3250 = vsub.f32 %v2744, %v3249
      %3251 = vmatpush1.xpose.msra.mxu0 %v3250
      %3252 = vmatprep.subr.mxu0 0.0
      %v3253 = vand.u32 %v2747, 4294901760
      %v3254 = vsub.f32 %v2747, %v3253
      %3255 = vmatpush1.xpose.msra.mxu0 %v3254
      %3256 = vmatprep.subr.mxu0 0.0
      %v3257 = vand.u32 %v2750, 4294901760
      %v3258 = vsub.f32 %v2750, %v3257
      %3259 = vmatpush1.xpose.msra.mxu0 %v3258
      %3260 = vmatprep.subr.mxu0 0.0
      %v3261 = vand.u32 %v2753, 4294901760
      %v3262 = vsub.f32 %v2753, %v3261
      %3263 = vmatpush1.xpose.msra.mxu0 %v3262
      %3264 = vmatprep.subr.mxu0 0.0
      %v3265 = vand.u32 %v2756, 4294901760
      %v3266 = vsub.f32 %v2756, %v3265
      %3267 = vmatpush1.xpose.msra.mxu0 %v3266
      %3268 = vmatprep.subr.mxu0 0.0
      %v3269 = vand.u32 %v2759, 4294901760
      %v3270 = vsub.f32 %v2759, %v3269
      %3271 = vmatpush1.xpose.msra.mxu0 %v3270
      %3272 = vmatprep.subr.mxu0 0.0
      %v3273 = vand.u32 %v2762, 4294901760
      %v3274 = vsub.f32 %v2762, %v3273
      %3275 = vmatpush1.xpose.msra.mxu0 %v3274
      %3276 = vmatprep.subr.mxu0 0.0
      %v3277 = vand.u32 %v2765, 4294901760
      %v3278 = vsub.f32 %v2765, %v3277
      %3279 = vmatpush1.xpose.msra.mxu0 %v3278
      %3280 = vmatprep.subr.mxu0 0.0
      %v3281 = vand.u32 %v2768, 4294901760
      %v3282 = vsub.f32 %v2768, %v3281
      %3283 = vmatpush1.xpose.msra.mxu0 %v3282
      %3284 = vmatprep.subr.mxu0 0.0
      %v3285 = vand.u32 %v2771, 4294901760
      %v3286 = vsub.f32 %v2771, %v3285
      %3287 = vmatpush1.xpose.msra.mxu0 %v3286
      %3288 = vmatprep.subr.mxu0 0.0
      %v3289 = vand.u32 %v2774, 4294901760
      %v3290 = vsub.f32 %v2774, %v3289
      %3291 = vmatpush1.xpose.msra.mxu0 %v3290
      %3292 = vmatprep.mubr.f32.mxu0 0.0
      %v3293 = vand.u32 %v2678, 4294901760
      %v3294 = vsub.f32 %v2678, %v3293
      %3295 = vmatmul.mubr.f32.gmra.mrb[0].mxu0 %v3294
      %v3296 = vpop.f32.mrb[0].mxu0
      %v3297 = vadd.f32 %v3160, %v3296
      %v3298 = vpop.f32.mrb[0].mxu0
      %v3299 = vadd.f32 %v3162, %v3298
      %3300 = vdwg.mxu0
      %3301 = vmatprep.subr.mxu0 0.0
      %v3302 = vand.u32 %v2681, 4294901760
      %3303 = vmatpush1.xpose.msra.mxu0 %v3302
      %3304 = vmatprep.subr.mxu0 0.0
      %v3305 = vand.u32 %v2684, 4294901760
      %3306 = vmatpush1.xpose.msra.mxu0 %v3305
      %3307 = vmatprep.subr.mxu0 0.0
      %v3308 = vand.u32 %v2687, 4294901760
      %3309 = vmatpush1.xpose.msra.mxu0 %v3308
      %3310 = vmatprep.subr.mxu0 0.0
      %v3311 = vand.u32 %v2690, 4294901760
      %3312 = vmatpush1.xpose.msra.mxu0 %v3311
      %3313 = vmatprep.subr.mxu0 0.0
      %v3314 = vand.u32 %v2693, 4294901760
      %3315 = vmatpush1.xpose.msra.mxu0 %v3314
      %3316 = vmatprep.subr.mxu0 0.0
      %v3317 = vand.u32 %v2696, 4294901760
      %3318 = vmatpush1.xpose.msra.mxu0 %v3317
      %3319 = vmatprep.subr.mxu0 0.0
      %v3320 = vand.u32 %v2699, 4294901760
      %3321 = vmatpush1.xpose.msra.mxu0 %v3320
      %3322 = vmatprep.subr.mxu0 0.0
      %v3323 = vand.u32 %v2702, 4294901760
      %3324 = vmatpush1.xpose.msra.mxu0 %v3323
      %3325 = vmatprep.subr.mxu0 0.0
      %v3326 = vand.u32 %v2705, 4294901760
      %3327 = vmatpush1.xpose.msra.mxu0 %v3326
      %3328 = vmatprep.subr.mxu0 0.0
      %v3329 = vand.u32 %v2708, 4294901760
      %3330 = vmatpush1.xpose.msra.mxu0 %v3329
      %3331 = vmatprep.subr.mxu0 0.0
      %v3332 = vand.u32 %v2711, 4294901760
      %3333 = vmatpush1.xpose.msra.mxu0 %v3332
      %3334 = vmatprep.subr.mxu0 0.0
      %v3335 = vand.u32 %v2714, 4294901760
      %3336 = vmatpush1.xpose.msra.mxu0 %v3335
      %3337 = vmatprep.subr.mxu0 0.0
      %v3338 = vand.u32 %v2717, 4294901760
      %3339 = vmatpush1.xpose.msra.mxu0 %v3338
      %3340 = vmatprep.subr.mxu0 0.0
      %v3341 = vand.u32 %v2720, 4294901760
      %3342 = vmatpush1.xpose.msra.mxu0 %v3341
      %3343 = vmatprep.subr.mxu0 0.0
      %v3344 = vand.u32 %v2723, 4294901760
      %3345 = vmatpush1.xpose.msra.mxu0 %v3344
      %3346 = vmatprep.subr.mxu0 0.0
      %v3347 = vand.u32 %v2726, 4294901760
      %3348 = vmatpush1.xpose.msra.mxu0 %v3347
      %3349 = vmatprep.subr.mxu0 0.0
      %v3350 = vand.u32 %v2729, 4294901760
      %3351 = vmatpush1.xpose.msra.mxu0 %v3350
      %3352 = vmatprep.subr.mxu0 0.0
      %v3353 = vand.u32 %v2732, 4294901760
      %3354 = vmatpush1.xpose.msra.mxu0 %v3353
      %3355 = vmatprep.subr.mxu0 0.0
      %v3356 = vand.u32 %v2735, 4294901760
      %3357 = vmatpush1.xpose.msra.mxu0 %v3356
      %3358 = vmatprep.subr.mxu0 0.0
      %v3359 = vand.u32 %v2738, 4294901760
      %3360 = vmatpush1.xpose.msra.mxu0 %v3359
      %3361 = vmatprep.subr.mxu0 0.0
      %v3362 = vand.u32 %v2741, 4294901760
      %3363 = vmatpush1.xpose.msra.mxu0 %v3362
      %3364 = vmatprep.subr.mxu0 0.0
      %v3365 = vand.u32 %v2744, 4294901760
      %3366 = vmatpush1.xpose.msra.mxu0 %v3365
      %3367 = vmatprep.subr.mxu0 0.0
      %v3368 = vand.u32 %v2747, 4294901760
      %3369 = vmatpush1.xpose.msra.mxu0 %v3368
      %3370 = vmatprep.subr.mxu0 0.0
      %v3371 = vand.u32 %v2750, 4294901760
      %3372 = vmatpush1.xpose.msra.mxu0 %v3371
      %3373 = vmatprep.subr.mxu0 0.0
      %v3374 = vand.u32 %v2753, 4294901760
      %3375 = vmatpush1.xpose.msra.mxu0 %v3374
      %3376 = vmatprep.subr.mxu0 0.0
      %v3377 = vand.u32 %v2756, 4294901760
      %3378 = vmatpush1.xpose.msra.mxu0 %v3377
      %3379 = vmatprep.subr.mxu0 0.0
      %v3380 = vand.u32 %v2759, 4294901760
      %3381 = vmatpush1.xpose.msra.mxu0 %v3380
      %3382 = vmatprep.subr.mxu0 0.0
      %v3383 = vand.u32 %v2762, 4294901760
      %3384 = vmatpush1.xpose.msra.mxu0 %v3383
      %3385 = vmatprep.subr.mxu0 0.0
      %v3386 = vand.u32 %v2765, 4294901760
      %3387 = vmatpush1.xpose.msra.mxu0 %v3386
      %3388 = vmatprep.subr.mxu0 0.0
      %v3389 = vand.u32 %v2768, 4294901760
      %3390 = vmatpush1.xpose.msra.mxu0 %v3389
      %3391 = vmatprep.subr.mxu0 0.0
      %v3392 = vand.u32 %v2771, 4294901760
      %3393 = vmatpush1.xpose.msra.mxu0 %v3392
      %3394 = vmatprep.subr.mxu0 0.0
      %v3395 = vand.u32 %v2774, 4294901760
      %3396 = vmatpush1.xpose.msra.mxu0 %v3395
      %3397 = vmatprep.mubr.f32.mxu0 0.0
      %v3398 = vand.u32 %v2678, 4294901760
      %v3399 = vsub.f32 %v2678, %v3398
      %v3400 = vand.u32 %v3399, 4294901760
      %3401 = vmatmul.mubr.f32.gmra.mrb[0].mxu0 %v3400
      %v3402 = vpop.f32.mrb[0].mxu0
      %v3403 = vadd.f32 %v3297, %v3402
      %v3404 = vpop.f32.mrb[0].mxu0
      %v3405 = vadd.f32 %v3299, %v3404
      %3406 = vdwg.mxu0
      %3407 = vmatprep.subr.mxu0 0.0
      %v3408 = vand.u32 %v2681, 4294901760
      %v3409 = vsub.f32 %v2681, %v3408
      %v3410 = vand.u32 %v3409, 4294901760
      %3411 = vmatpush1.xpose.msra.mxu0 %v3410
      %3412 = vmatprep.subr.mxu0 0.0
      %v3413 = vand.u32 %v2684, 4294901760
      %v3414 = vsub.f32 %v2684, %v3413
      %v3415 = vand.u32 %v3414, 4294901760
      %3416 = vmatpush1.xpose.msra.mxu0 %v3415
      %3417 = vmatprep.subr.mxu0 0.0
      %v3418 = vand.u32 %v2687, 4294901760
      %v3419 = vsub.f32 %v2687, %v3418
      %v3420 = vand.u32 %v3419, 4294901760
      %3421 = vmatpush1.xpose.msra.mxu0 %v3420
      %3422 = vmatprep.subr.mxu0 0.0
      %v3423 = vand.u32 %v2690, 4294901760
      %v3424 = vsub.f32 %v2690, %v3423
      %v3425 = vand.u32 %v3424, 4294901760
      %3426 = vmatpush1.xpose.msra.mxu0 %v3425
      %3427 = vmatprep.subr.mxu0 0.0
      %v3428 = vand.u32 %v2693, 4294901760
      %v3429 = vsub.f32 %v2693, %v3428
      %v3430 = vand.u32 %v3429, 4294901760
      %3431 = vmatpush1.xpose.msra.mxu0 %v3430
      %3432 = vmatprep.subr.mxu0 0.0
      %v3433 = vand.u32 %v2696, 4294901760
      %v3434 = vsub.f32 %v2696, %v3433
      %v3435 = vand.u32 %v3434, 4294901760
      %3436 = vmatpush1.xpose.msra.mxu0 %v3435
      %3437 = vmatprep.subr.mxu0 0.0
      %v3438 = vand.u32 %v2699, 4294901760
      %v3439 = vsub.f32 %v2699, %v3438
      %v3440 = vand.u32 %v3439, 4294901760
      %3441 = vmatpush1.xpose.msra.mxu0 %v3440
      %3442 = vmatprep.subr.mxu0 0.0
      %v3443 = vand.u32 %v2702, 4294901760
      %v3444 = vsub.f32 %v2702, %v3443
      %v3445 = vand.u32 %v3444, 4294901760
      %3446 = vmatpush1.xpose.msra.mxu0 %v3445
      %3447 = vmatprep.subr.mxu0 0.0
      %v3448 = vand.u32 %v2705, 4294901760
      %v3449 = vsub.f32 %v2705, %v3448
      %v3450 = vand.u32 %v3449, 4294901760
      %3451 = vmatpush1.xpose.msra.mxu0 %v3450
      %3452 = vmatprep.subr.mxu0 0.0
      %v3453 = vand.u32 %v2708, 4294901760
      %v3454 = vsub.f32 %v2708, %v3453
      %v3455 = vand.u32 %v3454, 4294901760
      %3456 = vmatpush1.xpose.msra.mxu0 %v3455
      %3457 = vmatprep.subr.mxu0 0.0
      %v3458 = vand.u32 %v2711, 4294901760
      %v3459 = vsub.f32 %v2711, %v3458
      %v3460 = vand.u32 %v3459, 4294901760
      %3461 = vmatpush1.xpose.msra.mxu0 %v3460
      %3462 = vmatprep.subr.mxu0 0.0
      %v3463 = vand.u32 %v2714, 4294901760
      %v3464 = vsub.f32 %v2714, %v3463
      %v3465 = vand.u32 %v3464, 4294901760
      %3466 = vmatpush1.xpose.msra.mxu0 %v3465
      %3467 = vmatprep.subr.mxu0 0.0
      %v3468 = vand.u32 %v2717, 4294901760
      %v3469 = vsub.f32 %v2717, %v3468
      %v3470 = vand.u32 %v3469, 4294901760
      %3471 = vmatpush1.xpose.msra.mxu0 %v3470
      %3472 = vmatprep.subr.mxu0 0.0
      %v3473 = vand.u32 %v2720, 4294901760
      %v3474 = vsub.f32 %v2720, %v3473
      %v3475 = vand.u32 %v3474, 4294901760
      %3476 = vmatpush1.xpose.msra.mxu0 %v3475
      %3477 = vmatprep.subr.mxu0 0.0
      %v3478 = vand.u32 %v2723, 4294901760
      %v3479 = vsub.f32 %v2723, %v3478
      %v3480 = vand.u32 %v3479, 4294901760
      %3481 = vmatpush1.xpose.msra.mxu0 %v3480
      %3482 = vmatprep.subr.mxu0 0.0
      %v3483 = vand.u32 %v2726, 4294901760
      %v3484 = vsub.f32 %v2726, %v3483
      %v3485 = vand.u32 %v3484, 4294901760
      %3486 = vmatpush1.xpose.msra.mxu0 %v3485
      %3487 = vmatprep.subr.mxu0 0.0
      %v3488 = vand.u32 %v2729, 4294901760
      %v3489 = vsub.f32 %v2729, %v3488
      %v3490 = vand.u32 %v3489, 4294901760
      %3491 = vmatpush1.xpose.msra.mxu0 %v3490
      %3492 = vmatprep.subr.mxu0 0.0
      %v3493 = vand.u32 %v2732, 4294901760
      %v3494 = vsub.f32 %v2732, %v3493
      %v3495 = vand.u32 %v3494, 4294901760
      %3496 = vmatpush1.xpose.msra.mxu0 %v3495
      %3497 = vmatprep.subr.mxu0 0.0
      %v3498 = vand.u32 %v2735, 4294901760
      %v3499 = vsub.f32 %v2735, %v3498
      %v3500 = vand.u32 %v3499, 4294901760
      %3501 = vmatpush1.xpose.msra.mxu0 %v3500
      %3502 = vmatprep.subr.mxu0 0.0
      %v3503 = vand.u32 %v2738, 4294901760
      %v3504 = vsub.f32 %v2738, %v3503
      %v3505 = vand.u32 %v3504, 4294901760
      %3506 = vmatpush1.xpose.msra.mxu0 %v3505
      %3507 = vmatprep.subr.mxu0 0.0
      %v3508 = vand.u32 %v2741, 4294901760
      %v3509 = vsub.f32 %v2741, %v3508
      %v3510 = vand.u32 %v3509, 4294901760
      %3511 = vmatpush1.xpose.msra.mxu0 %v3510
      %3512 = vmatprep.subr.mxu0 0.0
      %v3513 = vand.u32 %v2744, 4294901760
      %v3514 = vsub.f32 %v2744, %v3513
      %v3515 = vand.u32 %v3514, 4294901760
      %3516 = vmatpush1.xpose.msra.mxu0 %v3515
      %3517 = vmatprep.subr.mxu0 0.0
      %v3518 = vand.u32 %v2747, 4294901760
      %v3519 = vsub.f32 %v2747, %v3518
      %v3520 = vand.u32 %v3519, 4294901760
      %3521 = vmatpush1.xpose.msra.mxu0 %v3520
      %3522 = vmatprep.subr.mxu0 0.0
      %v3523 = vand.u32 %v2750, 4294901760
      %v3524 = vsub.f32 %v2750, %v3523
      %v3525 = vand.u32 %v3524, 4294901760
      %3526 = vmatpush1.xpose.msra.mxu0 %v3525
      %3527 = vmatprep.subr.mxu0 0.0
      %v3528 = vand.u32 %v2753, 4294901760
      %v3529 = vsub.f32 %v2753, %v3528
      %v3530 = vand.u32 %v3529, 4294901760
      %3531 = vmatpush1.xpose.msra.mxu0 %v3530
      %3532 = vmatprep.subr.mxu0 0.0
      %v3533 = vand.u32 %v2756, 4294901760
      %v3534 = vsub.f32 %v2756, %v3533
      %v3535 = vand.u32 %v3534, 4294901760
      %3536 = vmatpush1.xpose.msra.mxu0 %v3535
      %3537 = vmatprep.subr.mxu0 0.0
      %v3538 = vand.u32 %v2759, 4294901760
      %v3539 = vsub.f32 %v2759, %v3538
      %v3540 = vand.u32 %v3539, 4294901760
      %3541 = vmatpush1.xpose.msra.mxu0 %v3540
      %3542 = vmatprep.subr.mxu0 0.0
      %v3543 = vand.u32 %v2762, 4294901760
      %v3544 = vsub.f32 %v2762, %v3543
      %v3545 = vand.u32 %v3544, 4294901760
      %3546 = vmatpush1.xpose.msra.mxu0 %v3545
      %3547 = vmatprep.subr.mxu0 0.0
      %v3548 = vand.u32 %v2765, 4294901760
      %v3549 = vsub.f32 %v2765, %v3548
      %v3550 = vand.u32 %v3549, 4294901760
      %3551 = vmatpush1.xpose.msra.mxu0 %v3550
      %3552 = vmatprep.subr.mxu0 0.0
      %v3553 = vand.u32 %v2768, 4294901760
      %v3554 = vsub.f32 %v2768, %v3553
      %v3555 = vand.u32 %v3554, 4294901760
      %3556 = vmatpush1.xpose.msra.mxu0 %v3555
      %3557 = vmatprep.subr.mxu0 0.0
      %v3558 = vand.u32 %v2771, 4294901760
      %v3559 = vsub.f32 %v2771, %v3558
      %v3560 = vand.u32 %v3559, 4294901760
      %3561 = vmatpush1.xpose.msra.mxu0 %v3560
      %3562 = vmatprep.subr.mxu0 0.0
      %v3563 = vand.u32 %v2774, 4294901760
      %v3564 = vsub.f32 %v2774, %v3563
      %v3565 = vand.u32 %v3564, 4294901760
      %3566 = vmatpush1.xpose.msra.mxu0 %v3565
      %3567 = vmatprep.mubr.f32.mxu0 0.0
      %v3568 = vand.u32 %v2678, 4294901760
      %3569 = vmatmul.mubr.f32.gmra.mrb[0].mxu0 %v3568
      %v3570 = vpop.f32.mrb[0].mxu0
      %v3571 = vadd.f32 %v3403, %v3570
      %v3572 = vpop.f32.mrb[0].mxu0
      %v3573 = vadd.f32 %v3405, %v3572
      %3574 = vdwg.mxu0
      %3575 = vmatprep.subr.mxu0 0.0
      %v3576 = vand.u32 %v2681, 4294901760
      %3577 = vmatpush1.xpose.msra.mxu0 %v3576
      %3578 = vmatprep.subr.mxu0 0.0
      %v3579 = vand.u32 %v2684, 4294901760
      %3580 = vmatpush1.xpose.msra.mxu0 %v3579
      %3581 = vmatprep.subr.mxu0 0.0
      %v3582 = vand.u32 %v2687, 4294901760
      %3583 = vmatpush1.xpose.msra.mxu0 %v3582
      %3584 = vmatprep.subr.mxu0 0.0
      %v3585 = vand.u32 %v2690, 4294901760
      %3586 = vmatpush1.xpose.msra.mxu0 %v3585
      %3587 = vmatprep.subr.mxu0 0.0
      %v3588 = vand.u32 %v2693, 4294901760
      %3589 = vmatpush1.xpose.msra.mxu0 %v3588
      %3590 = vmatprep.subr.mxu0 0.0
      %v3591 = vand.u32 %v2696, 4294901760
      %3592 = vmatpush1.xpose.msra.mxu0 %v3591
      %3593 = vmatprep.subr.mxu0 0.0
      %v3594 = vand.u32 %v2699, 4294901760
      %3595 = vmatpush1.xpose.msra.mxu0 %v3594
      %3596 = vmatprep.subr.mxu0 0.0
      %v3597 = vand.u32 %v2702, 4294901760
      %3598 = vmatpush1.xpose.msra.mxu0 %v3597
      %3599 = vmatprep.subr.mxu0 0.0
      %v3600 = vand.u32 %v2705, 4294901760
      %3601 = vmatpush1.xpose.msra.mxu0 %v3600
      %3602 = vmatprep.subr.mxu0 0.0
      %v3603 = vand.u32 %v2708, 4294901760
      %3604 = vmatpush1.xpose.msra.mxu0 %v3603
      %3605 = vmatprep.subr.mxu0 0.0
      %v3606 = vand.u32 %v2711, 4294901760
      %3607 = vmatpush1.xpose.msra.mxu0 %v3606
      %3608 = vmatprep.subr.mxu0 0.0
      %v3609 = vand.u32 %v2714, 4294901760
      %3610 = vmatpush1.xpose.msra.mxu0 %v3609
      %3611 = vmatprep.subr.mxu0 0.0
      %v3612 = vand.u32 %v2717, 4294901760
      %3613 = vmatpush1.xpose.msra.mxu0 %v3612
      %3614 = vmatprep.subr.mxu0 0.0
      %v3615 = vand.u32 %v2720, 4294901760
      %3616 = vmatpush1.xpose.msra.mxu0 %v3615
      %3617 = vmatprep.subr.mxu0 0.0
      %v3618 = vand.u32 %v2723, 4294901760
      %3619 = vmatpush1.xpose.msra.mxu0 %v3618
      %3620 = vmatprep.subr.mxu0 0.0
      %v3621 = vand.u32 %v2726, 4294901760
      %3622 = vmatpush1.xpose.msra.mxu0 %v3621
      %3623 = vmatprep.subr.mxu0 0.0
      %v3624 = vand.u32 %v2729, 4294901760
      %3625 = vmatpush1.xpose.msra.mxu0 %v3624
      %3626 = vmatprep.subr.mxu0 0.0
      %v3627 = vand.u32 %v2732, 4294901760
      %3628 = vmatpush1.xpose.msra.mxu0 %v3627
      %3629 = vmatprep.subr.mxu0 0.0
      %v3630 = vand.u32 %v2735, 4294901760
      %3631 = vmatpush1.xpose.msra.mxu0 %v3630
      %3632 = vmatprep.subr.mxu0 0.0
      %v3633 = vand.u32 %v2738, 4294901760
      %3634 = vmatpush1.xpose.msra.mxu0 %v3633
      %3635 = vmatprep.subr.mxu0 0.0
      %v3636 = vand.u32 %v2741, 4294901760
      %3637 = vmatpush1.xpose.msra.mxu0 %v3636
      %3638 = vmatprep.subr.mxu0 0.0
      %v3639 = vand.u32 %v2744, 4294901760
      %3640 = vmatpush1.xpose.msra.mxu0 %v3639
      %3641 = vmatprep.subr.mxu0 0.0
      %v3642 = vand.u32 %v2747, 4294901760
      %3643 = vmatpush1.xpose.msra.mxu0 %v3642
      %3644 = vmatprep.subr.mxu0 0.0
      %v3645 = vand.u32 %v2750, 4294901760
      %3646 = vmatpush1.xpose.msra.mxu0 %v3645
      %3647 = vmatprep.subr.mxu0 0.0
      %v3648 = vand.u32 %v2753, 4294901760
      %3649 = vmatpush1.xpose.msra.mxu0 %v3648
      %3650 = vmatprep.subr.mxu0 0.0
      %v3651 = vand.u32 %v2756, 4294901760
      %3652 = vmatpush1.xpose.msra.mxu0 %v3651
      %3653 = vmatprep.subr.mxu0 0.0
      %v3654 = vand.u32 %v2759, 4294901760
      %3655 = vmatpush1.xpose.msra.mxu0 %v3654
      %3656 = vmatprep.subr.mxu0 0.0
      %v3657 = vand.u32 %v2762, 4294901760
      %3658 = vmatpush1.xpose.msra.mxu0 %v3657
      %3659 = vmatprep.subr.mxu0 0.0
      %v3660 = vand.u32 %v2765, 4294901760
      %3661 = vmatpush1.xpose.msra.mxu0 %v3660
      %3662 = vmatprep.subr.mxu0 0.0
      %v3663 = vand.u32 %v2768, 4294901760
      %3664 = vmatpush1.xpose.msra.mxu0 %v3663
      %3665 = vmatprep.subr.mxu0 0.0
      %v3666 = vand.u32 %v2771, 4294901760
      %3667 = vmatpush1.xpose.msra.mxu0 %v3666
      %3668 = vmatprep.subr.mxu0 0.0
      %v3669 = vand.u32 %v2774, 4294901760
      %3670 = vmatpush1.xpose.msra.mxu0 %v3669
      %3671 = vmatprep.mubr.f32.mxu0 0.0
      %v3672 = vand.u32 %v2678, 4294901760
      %3673 = vmatmul.mubr.f32.gmra.mrb[0].mxu0 %v3672
      %v3674 = vpop.f32.mrb[0].mxu0
      %v3675 = vadd.f32 %v3571, %v3674
      %v3676 = vpop.f32.mrb[0].mxu0
      %v3677 = vadd.f32 %v3573, %v3676
      %3678 = vdwg.mxu0
      %3679 = vmatprep.subr.mxu0 0.0
      %v3680 = vand.u32 %v2777, 4294901760
      %3681 = vmatpush1.xpose.msra.mxu0 %v3680
      %3682 = vmatprep.subr.mxu0 0.0
      %v3683 = vand.u32 %v2780, 4294901760
      %3684 = vmatpush1.xpose.msra.mxu0 %v3683
      %3685 = vmatprep.subr.mxu0 0.0
      %v3686 = vand.u32 %v2783, 4294901760
      %3687 = vmatpush1.xpose.msra.mxu0 %v3686
      %3688 = vmatprep.subr.mxu0 0.0
      %v3689 = vand.u32 %v2786, 4294901760
      %3690 = vmatpush1.xpose.msra.mxu0 %v3689
      %3691 = vmatprep.subr.mxu0 0.0
      %v3692 = vand.u32 %v2789, 4294901760
      %3693 = vmatpush1.xpose.msra.mxu0 %v3692
      %3694 = vmatprep.subr.mxu0 0.0
      %v3695 = vand.u32 %v2792, 4294901760
      %3696 = vmatpush1.xpose.msra.mxu0 %v3695
      %3697 = vmatprep.subr.mxu0 0.0
      %v3698 = vand.u32 %v2795, 4294901760
      %3699 = vmatpush1.xpose.msra.mxu0 %v3698
      %3700 = vmatprep.subr.mxu0 0.0
      %v3701 = vand.u32 %v2798, 4294901760
      %3702 = vmatpush1.xpose.msra.mxu0 %v3701
      %3703 = vmatprep.subr.mxu0 0.0
      %v3704 = vand.u32 %v2801, 4294901760
      %3705 = vmatpush1.xpose.msra.mxu0 %v3704
      %3706 = vmatprep.subr.mxu0 0.0
      %v3707 = vand.u32 %v2804, 4294901760
      %3708 = vmatpush1.xpose.msra.mxu0 %v3707
      %3709 = vmatprep.subr.mxu0 0.0
      %v3710 = vand.u32 %v2807, 4294901760
      %3711 = vmatpush1.xpose.msra.mxu0 %v3710
      %3712 = vmatprep.subr.mxu0 0.0
      %v3713 = vand.u32 %v2810, 4294901760
      %3714 = vmatpush1.xpose.msra.mxu0 %v3713
      %3715 = vmatprep.subr.mxu0 0.0
      %v3716 = vand.u32 %v2813, 4294901760
      %3717 = vmatpush1.xpose.msra.mxu0 %v3716
      %3718 = vmatprep.subr.mxu0 0.0
      %v3719 = vand.u32 %v2816, 4294901760
      %3720 = vmatpush1.xpose.msra.mxu0 %v3719
      %3721 = vmatprep.subr.mxu0 0.0
      %v3722 = vand.u32 %v2819, 4294901760
      %3723 = vmatpush1.xpose.msra.mxu0 %v3722
      %3724 = vmatprep.subr.mxu0 0.0
      %v3725 = vand.u32 %v2822, 4294901760
      %3726 = vmatpush1.xpose.msra.mxu0 %v3725
      %3727 = vmatprep.subr.mxu0 0.0
      %3728 = vmatpush1.xpose.msra.mxu0 0.0
      %3729 = vmatprep.subr.mxu0 0.0
      %3730 = vmatpush1.xpose.msra.mxu0 0.0
      %3731 = vmatprep.subr.mxu0 0.0
      %3732 = vmatpush1.xpose.msra.mxu0 0.0
      %3733 = vmatprep.subr.mxu0 0.0
      %3734 = vmatpush1.xpose.msra.mxu0 0.0
      %3735 = vmatprep.subr.mxu0 0.0
      %3736 = vmatpush1.xpose.msra.mxu0 0.0
      %3737 = vmatprep.subr.mxu0 0.0
      %3738 = vmatpush1.xpose.msra.mxu0 0.0
      %3739 = vmatprep.subr.mxu0 0.0
      %3740 = vmatpush1.xpose.msra.mxu0 0.0
      %3741 = vmatprep.subr.mxu0 0.0
      %3742 = vmatpush1.xpose.msra.mxu0 0.0
      %3743 = vmatprep.subr.mxu0 0.0
      %3744 = vmatpush1.xpose.msra.mxu0 0.0
      %3745 = vmatprep.subr.mxu0 0.0
      %3746 = vmatpush1.xpose.msra.mxu0 0.0
      %3747 = vmatprep.subr.mxu0 0.0
      %3748 = vmatpush1.xpose.msra.mxu0 0.0
      %3749 = vmatprep.subr.mxu0 0.0
      %3750 = vmatpush1.xpose.msra.mxu0 0.0
      %3751 = vmatprep.subr.mxu0 0.0
      %3752 = vmatpush1.xpose.msra.mxu0 0.0
      %3753 = vmatprep.subr.mxu0 0.0
      %3754 = vmatpush1.xpose.msra.mxu0 0.0
      %3755 = vmatprep.subr.mxu0 0.0
      %3756 = vmatpush1.xpose.msra.mxu0 0.0
      %3757 = vmatprep.subr.mxu0 0.0
      %3758 = vmatpush1.xpose.msra.mxu0 0.0
      %3759 = vmatprep.mubr.f32.mxu0 0.0
      %v3760 = vand.u32 %v2678, 4294901760
      %v3761 = vsub.f32 %v2678, %v3760
      %v3762 = vand.u32 %v3761, 4294901760
      %v3763 = vsub.f32 %v3761, %v3762
      %v3764 = vand.u32 %v3763, 4294901760
      %3765 = vmatmul.mubr.f32.gmra.mrb[0].mxu0 %v3764
      %v3766 = vpop.f32.mrb[0].mxu0
      %v3767 = vadd.f32 %v2674, %v3766
      %v3768 = vpop.f32.mrb[0].mxu0
      %3769 = vdwg.mxu0
      %3770 = vmatprep.subr.mxu0 0.0
      %v3771 = vand.u32 %v2777, 4294901760
      %v3772 = vsub.f32 %v2777, %v3771
      %v3773 = vand.u32 %v3772, 4294901760
      %v3774 = vsub.f32 %v3772, %v3773
      %v3775 = vand.u32 %v3774, 4294901760
      %3776 = vmatpush1.xpose.msra.mxu0 %v3775
      %3777 = vmatprep.subr.mxu0 0.0
      %v3778 = vand.u32 %v2780, 4294901760
      %v3779 = vsub.f32 %v2780, %v3778
      %v3780 = vand.u32 %v3779, 4294901760
      %v3781 = vsub.f32 %v3779, %v3780
      %v3782 = vand.u32 %v3781, 4294901760
      %3783 = vmatpush1.xpose.msra.mxu0 %v3782
      %3784 = vmatprep.subr.mxu0 0.0
      %v3785 = vand.u32 %v2783, 4294901760
      %v3786 = vsub.f32 %v2783, %v3785
      %v3787 = vand.u32 %v3786, 4294901760
      %v3788 = vsub.f32 %v3786, %v3787
      %v3789 = vand.u32 %v3788, 4294901760
      %3790 = vmatpush1.xpose.msra.mxu0 %v3789
      %3791 = vmatprep.subr.mxu0 0.0
      %v3792 = vand.u32 %v2786, 4294901760
      %v3793 = vsub.f32 %v2786, %v3792
      %v3794 = vand.u32 %v3793, 4294901760
      %v3795 = vsub.f32 %v3793, %v3794
      %v3796 = vand.u32 %v3795, 4294901760
      %3797 = vmatpush1.xpose.msra.mxu0 %v3796
      %3798 = vmatprep.subr.mxu0 0.0
      %v3799 = vand.u32 %v2789, 4294901760
      %v3800 = vsub.f32 %v2789, %v3799
      %v3801 = vand.u32 %v3800, 4294901760
      %v3802 = vsub.f32 %v3800, %v3801
      %v3803 = vand.u32 %v3802, 4294901760
      %3804 = vmatpush1.xpose.msra.mxu0 %v3803
      %3805 = vmatprep.subr.mxu0 0.0
      %v3806 = vand.u32 %v2792, 4294901760
      %v3807 = vsub.f32 %v2792, %v3806
      %v3808 = vand.u32 %v3807, 4294901760
      %v3809 = vsub.f32 %v3807, %v3808
      %v3810 = vand.u32 %v3809, 4294901760
      %3811 = vmatpush1.xpose.msra.mxu0 %v3810
      %3812 = vmatprep.subr.mxu0 0.0
      %v3813 = vand.u32 %v2795, 4294901760
      %v3814 = vsub.f32 %v2795, %v3813
      %v3815 = vand.u32 %v3814, 4294901760
      %v3816 = vsub.f32 %v3814, %v3815
      %v3817 = vand.u32 %v3816, 4294901760
      %3818 = vmatpush1.xpose.msra.mxu0 %v3817
      %3819 = vmatprep.subr.mxu0 0.0
      %v3820 = vand.u32 %v2798, 4294901760
      %v3821 = vsub.f32 %v2798, %v3820
      %v3822 = vand.u32 %v3821, 4294901760
      %v3823 = vsub.f32 %v3821, %v3822
      %v3824 = vand.u32 %v3823, 4294901760
      %3825 = vmatpush1.xpose.msra.mxu0 %v3824
      %3826 = vmatprep.subr.mxu0 0.0
      %v3827 = vand.u32 %v2801, 4294901760
      %v3828 = vsub.f32 %v2801, %v3827
      %v3829 = vand.u32 %v3828, 4294901760
      %v3830 = vsub.f32 %v3828, %v3829
      %v3831 = vand.u32 %v3830, 4294901760
      %3832 = vmatpush1.xpose.msra.mxu0 %v3831
      %3833 = vmatprep.subr.mxu0 0.0
      %v3834 = vand.u32 %v2804, 4294901760
      %v3835 = vsub.f32 %v2804, %v3834
      %v3836 = vand.u32 %v3835, 4294901760
      %v3837 = vsub.f32 %v3835, %v3836
      %v3838 = vand.u32 %v3837, 4294901760
      %3839 = vmatpush1.xpose.msra.mxu0 %v3838
      %3840 = vmatprep.subr.mxu0 0.0
      %v3841 = vand.u32 %v2807, 4294901760
      %v3842 = vsub.f32 %v2807, %v3841
      %v3843 = vand.u32 %v3842, 4294901760
      %v3844 = vsub.f32 %v3842, %v3843
      %v3845 = vand.u32 %v3844, 4294901760
      %3846 = vmatpush1.xpose.msra.mxu0 %v3845
      %3847 = vmatprep.subr.mxu0 0.0
      %v3848 = vand.u32 %v2810, 4294901760
      %v3849 = vsub.f32 %v2810, %v3848
      %v3850 = vand.u32 %v3849, 4294901760
      %v3851 = vsub.f32 %v3849, %v3850
      %v3852 = vand.u32 %v3851, 4294901760
      %3853 = vmatpush1.xpose.msra.mxu0 %v3852
      %3854 = vmatprep.subr.mxu0 0.0
      %v3855 = vand.u32 %v2813, 4294901760
      %v3856 = vsub.f32 %v2813, %v3855
      %v3857 = vand.u32 %v3856, 4294901760
      %v3858 = vsub.f32 %v3856, %v3857
      %v3859 = vand.u32 %v3858, 4294901760
      %3860 = vmatpush1.xpose.msra.mxu0 %v3859
      %3861 = vmatprep.subr.mxu0 0.0
      %v3862 = vand.u32 %v2816, 4294901760
      %v3863 = vsub.f32 %v2816, %v3862
      %v3864 = vand.u32 %v3863, 4294901760
      %v3865 = vsub.f32 %v3863, %v3864
      %v3866 = vand.u32 %v3865, 4294901760
      %3867 = vmatpush1.xpose.msra.mxu0 %v3866
      %3868 = vmatprep.subr.mxu0 0.0
      %v3869 = vand.u32 %v2819, 4294901760
      %v3870 = vsub.f32 %v2819, %v3869
      %v3871 = vand.u32 %v3870, 4294901760
      %v3872 = vsub.f32 %v3870, %v3871
      %v3873 = vand.u32 %v3872, 4294901760
      %3874 = vmatpush1.xpose.msra.mxu0 %v3873
      %3875 = vmatprep.subr.mxu0 0.0
      %v3876 = vand.u32 %v2822, 4294901760
      %v3877 = vsub.f32 %v2822, %v3876
      %v3878 = vand.u32 %v3877, 4294901760
      %v3879 = vsub.f32 %v3877, %v3878
      %v3880 = vand.u32 %v3879, 4294901760
      %3881 = vmatpush1.xpose.msra.mxu0 %v3880
      %3882 = vmatprep.subr.mxu0 0.0
      %3883 = vmatpush1.xpose.msra.mxu0 0.0
      %3884 = vmatprep.subr.mxu0 0.0
      %3885 = vmatpush1.xpose.msra.mxu0 0.0
      %3886 = vmatprep.subr.mxu0 0.0
      %3887 = vmatpush1.xpose.msra.mxu0 0.0
      %3888 = vmatprep.subr.mxu0 0.0
      %3889 = vmatpush1.xpose.msra.mxu0 0.0
      %3890 = vmatprep.subr.mxu0 0.0
      %3891 = vmatpush1.xpose.msra.mxu0 0.0
      %3892 = vmatprep.subr.mxu0 0.0
      %3893 = vmatpush1.xpose.msra.mxu0 0.0
      %3894 = vmatprep.subr.mxu0 0.0
      %3895 = vmatpush1.xpose.msra.mxu0 0.0
      %3896 = vmatprep.subr.mxu0 0.0
      %3897 = vmatpush1.xpose.msra.mxu0 0.0
      %3898 = vmatprep.subr.mxu0 0.0
      %3899 = vmatpush1.xpose.msra.mxu0 0.0
      %3900 = vmatprep.subr.mxu0 0.0
      %3901 = vmatpush1.xpose.msra.mxu0 0.0
      %3902 = vmatprep.subr.mxu0 0.0
      %3903 = vmatpush1.xpose.msra.mxu0 0.0
      %3904 = vmatprep.subr.mxu0 0.0
      %3905 = vmatpush1.xpose.msra.mxu0 0.0
      %3906 = vmatprep.subr.mxu0 0.0
      %3907 = vmatpush1.xpose.msra.mxu0 0.0
      %3908 = vmatprep.subr.mxu0 0.0
      %3909 = vmatpush1.xpose.msra.mxu0 0.0
      %3910 = vmatprep.subr.mxu0 0.0
      %3911 = vmatpush1.xpose.msra.mxu0 0.0
      %3912 = vmatprep.subr.mxu0 0.0
      %3913 = vmatpush1.xpose.msra.mxu0 0.0
      %3914 = vmatprep.mubr.f32.mxu0 0.0
      %v3915 = vand.u32 %v2678, 4294901760
      %3916 = vmatmul.mubr.f32.gmra.mrb[0].mxu0 %v3915
      %v3917 = vpop.f32.mrb[0].mxu0
      %v3918 = vadd.f32 %v3767, %v3917
      %v3919 = vpop.f32.mrb[0].mxu0
      %3920 = vdwg.mxu0
      %3921 = vmatprep.subr.mxu0 0.0
      %v3922 = vand.u32 %v2777, 4294901760
      %v3923 = vsub.f32 %v2777, %v3922
      %3924 = vmatpush1.xpose.msra.mxu0 %v3923
      %3925 = vmatprep.subr.mxu0 0.0
      %v3926 = vand.u32 %v2780, 4294901760
      %v3927 = vsub.f32 %v2780, %v3926
      %3928 = vmatpush1.xpose.msra.mxu0 %v3927
      %3929 = vmatprep.subr.mxu0 0.0
      %v3930 = vand.u32 %v2783, 4294901760
      %v3931 = vsub.f32 %v2783, %v3930
      %3932 = vmatpush1.xpose.msra.mxu0 %v3931
      %3933 = vmatprep.subr.mxu0 0.0
      %v3934 = vand.u32 %v2786, 4294901760
      %v3935 = vsub.f32 %v2786, %v3934
      %3936 = vmatpush1.xpose.msra.mxu0 %v3935
      %3937 = vmatprep.subr.mxu0 0.0
      %v3938 = vand.u32 %v2789, 4294901760
      %v3939 = vsub.f32 %v2789, %v3938
      %3940 = vmatpush1.xpose.msra.mxu0 %v3939
      %3941 = vmatprep.subr.mxu0 0.0
      %v3942 = vand.u32 %v2792, 4294901760
      %v3943 = vsub.f32 %v2792, %v3942
      %3944 = vmatpush1.xpose.msra.mxu0 %v3943
      %3945 = vmatprep.subr.mxu0 0.0
      %v3946 = vand.u32 %v2795, 4294901760
      %v3947 = vsub.f32 %v2795, %v3946
      %3948 = vmatpush1.xpose.msra.mxu0 %v3947
      %3949 = vmatprep.subr.mxu0 0.0
      %v3950 = vand.u32 %v2798, 4294901760
      %v3951 = vsub.f32 %v2798, %v3950
      %3952 = vmatpush1.xpose.msra.mxu0 %v3951
      %3953 = vmatprep.subr.mxu0 0.0
      %v3954 = vand.u32 %v2801, 4294901760
      %v3955 = vsub.f32 %v2801, %v3954
      %3956 = vmatpush1.xpose.msra.mxu0 %v3955
      %3957 = vmatprep.subr.mxu0 0.0
      %v3958 = vand.u32 %v2804, 4294901760
      %v3959 = vsub.f32 %v2804, %v3958
      %3960 = vmatpush1.xpose.msra.mxu0 %v3959
      %3961 = vmatprep.subr.mxu0 0.0
      %v3962 = vand.u32 %v2807, 4294901760
      %v3963 = vsub.f32 %v2807, %v3962
      %3964 = vmatpush1.xpose.msra.mxu0 %v3963
      %3965 = vmatprep.subr.mxu0 0.0
      %v3966 = vand.u32 %v2810, 4294901760
      %v3967 = vsub.f32 %v2810, %v3966
      %3968 = vmatpush1.xpose.msra.mxu0 %v3967
      %3969 = vmatprep.subr.mxu0 0.0
      %v3970 = vand.u32 %v2813, 4294901760
      %v3971 = vsub.f32 %v2813, %v3970
      %3972 = vmatpush1.xpose.msra.mxu0 %v3971
      %3973 = vmatprep.subr.mxu0 0.0
      %v3974 = vand.u32 %v2816, 4294901760
      %v3975 = vsub.f32 %v2816, %v3974
      %3976 = vmatpush1.xpose.msra.mxu0 %v3975
      %3977 = vmatprep.subr.mxu0 0.0
      %v3978 = vand.u32 %v2819, 4294901760
      %v3979 = vsub.f32 %v2819, %v3978
      %3980 = vmatpush1.xpose.msra.mxu0 %v3979
      %3981 = vmatprep.subr.mxu0 0.0
      %v3982 = vand.u32 %v2822, 4294901760
      %v3983 = vsub.f32 %v2822, %v3982
      %3984 = vmatpush1.xpose.msra.mxu0 %v3983
      %3985 = vmatprep.subr.mxu0 0.0
      %3986 = vmatpush1.xpose.msra.mxu0 0.0
      %3987 = vmatprep.subr.mxu0 0.0
      %3988 = vmatpush1.xpose.msra.mxu0 0.0
      %3989 = vmatprep.subr.mxu0 0.0
      %3990 = vmatpush1.xpose.msra.mxu0 0.0
      %3991 = vmatprep.subr.mxu0 0.0
      %3992 = vmatpush1.xpose.msra.mxu0 0.0
      %3993 = vmatprep.subr.mxu0 0.0
      %3994 = vmatpush1.xpose.msra.mxu0 0.0
      %3995 = vmatprep.subr.mxu0 0.0
      %3996 = vmatpush1.xpose.msra.mxu0 0.0
      %3997 = vmatprep.subr.mxu0 0.0
      %3998 = vmatpush1.xpose.msra.mxu0 0.0
      %3999 = vmatprep.subr.mxu0 0.0
      %4000 = vmatpush1.xpose.msra.mxu0 0.0
      %4001 = vmatprep.subr.mxu0 0.0
      %4002 = vmatpush1.xpose.msra.mxu0 0.0
      %4003 = vmatprep.subr.mxu0 0.0
      %4004 = vmatpush1.xpose.msra.mxu0 0.0
      %4005 = vmatprep.subr.mxu0 0.0
      %4006 = vmatpush1.xpose.msra.mxu0 0.0
      %4007 = vmatprep.subr.mxu0 0.0
      %4008 = vmatpush1.xpose.msra.mxu0 0.0
      %4009 = vmatprep.subr.mxu0 0.0
      %4010 = vmatpush1.xpose.msra.mxu0 0.0
      %4011 = vmatprep.subr.mxu0 0.0
      %4012 = vmatpush1.xpose.msra.mxu0 0.0
      %4013 = vmatprep.subr.mxu0 0.0
      %4014 = vmatpush1.xpose.msra.mxu0 0.0
      %4015 = vmatprep.subr.mxu0 0.0
      %4016 = vmatpush1.xpose.msra.mxu0 0.0
      %4017 = vmatprep.mubr.f32.mxu0 0.0
      %v4018 = vand.u32 %v2678, 4294901760
      %v4019 = vsub.f32 %v2678, %v4018
      %4020 = vmatmul.mubr.f32.gmra.mrb[0].mxu0 %v4019
      %v4021 = vpop.f32.mrb[0].mxu0
      %v4022 = vadd.f32 %v3918, %v4021
      %v4023 = vpop.f32.mrb[0].mxu0
      %4024 = vdwg.mxu0
      %4025 = vmatprep.subr.mxu0 0.0
      %v4026 = vand.u32 %v2777, 4294901760
      %4027 = vmatpush1.xpose.msra.mxu0 %v4026
      %4028 = vmatprep.subr.mxu0 0.0
      %v4029 = vand.u32 %v2780, 4294901760
      %4030 = vmatpush1.xpose.msra.mxu0 %v4029
      %4031 = vmatprep.subr.mxu0 0.0
      %v4032 = vand.u32 %v2783, 4294901760
      %4033 = vmatpush1.xpose.msra.mxu0 %v4032
      %4034 = vmatprep.subr.mxu0 0.0
      %v4035 = vand.u32 %v2786, 4294901760
      %4036 = vmatpush1.xpose.msra.mxu0 %v4035
      %4037 = vmatprep.subr.mxu0 0.0
      %v4038 = vand.u32 %v2789, 4294901760
      %4039 = vmatpush1.xpose.msra.mxu0 %v4038
      %4040 = vmatprep.subr.mxu0 0.0
      %v4041 = vand.u32 %v2792, 4294901760
      %4042 = vmatpush1.xpose.msra.mxu0 %v4041
      %4043 = vmatprep.subr.mxu0 0.0
      %v4044 = vand.u32 %v2795, 4294901760
      %4045 = vmatpush1.xpose.msra.mxu0 %v4044
      %4046 = vmatprep.subr.mxu0 0.0
      %v4047 = vand.u32 %v2798, 4294901760
      %4048 = vmatpush1.xpose.msra.mxu0 %v4047
      %4049 = vmatprep.subr.mxu0 0.0
      %v4050 = vand.u32 %v2801, 4294901760
      %4051 = vmatpush1.xpose.msra.mxu0 %v4050
      %4052 = vmatprep.subr.mxu0 0.0
      %v4053 = vand.u32 %v2804, 4294901760
      %4054 = vmatpush1.xpose.msra.mxu0 %v4053
      %4055 = vmatprep.subr.mxu0 0.0
      %v4056 = vand.u32 %v2807, 4294901760
      %4057 = vmatpush1.xpose.msra.mxu0 %v4056
      %4058 = vmatprep.subr.mxu0 0.0
      %v4059 = vand.u32 %v2810, 4294901760
      %4060 = vmatpush1.xpose.msra.mxu0 %v4059
      %4061 = vmatprep.subr.mxu0 0.0
      %v4062 = vand.u32 %v2813, 4294901760
      %4063 = vmatpush1.xpose.msra.mxu0 %v4062
      %4064 = vmatprep.subr.mxu0 0.0
      %v4065 = vand.u32 %v2816, 4294901760
      %4066 = vmatpush1.xpose.msra.mxu0 %v4065
      %4067 = vmatprep.subr.mxu0 0.0
      %v4068 = vand.u32 %v2819, 4294901760
      %4069 = vmatpush1.xpose.msra.mxu0 %v4068
      %4070 = vmatprep.subr.mxu0 0.0
      %v4071 = vand.u32 %v2822, 4294901760
      %4072 = vmatpush1.xpose.msra.mxu0 %v4071
      %4073 = vmatprep.subr.mxu0 0.0
      %4074 = vmatpush1.xpose.msra.mxu0 0.0
      %4075 = vmatprep.subr.mxu0 0.0
      %4076 = vmatpush1.xpose.msra.mxu0 0.0
      %4077 = vmatprep.subr.mxu0 0.0
      %4078 = vmatpush1.xpose.msra.mxu0 0.0
      %4079 = vmatprep.subr.mxu0 0.0
      %4080 = vmatpush1.xpose.msra.mxu0 0.0
      %4081 = vmatprep.subr.mxu0 0.0
      %4082 = vmatpush1.xpose.msra.mxu0 0.0
      %4083 = vmatprep.subr.mxu0 0.0
      %4084 = vmatpush1.xpose.msra.mxu0 0.0
      %4085 = vmatprep.subr.mxu0 0.0
      %4086 = vmatpush1.xpose.msra.mxu0 0.0
      %4087 = vmatprep.subr.mxu0 0.0
      %4088 = vmatpush1.xpose.msra.mxu0 0.0
      %4089 = vmatprep.subr.mxu0 0.0
      %4090 = vmatpush1.xpose.msra.mxu0 0.0
      %4091 = vmatprep.subr.mxu0 0.0
      %4092 = vmatpush1.xpose.msra.mxu0 0.0
      %4093 = vmatprep.subr.mxu0 0.0
      %4094 = vmatpush1.xpose.msra.mxu0 0.0
      %4095 = vmatprep.subr.mxu0 0.0
      %4096 = vmatpush1.xpose.msra.mxu0 0.0
      %4097 = vmatprep.subr.mxu0 0.0
      %4098 = vmatpush1.xpose.msra.mxu0 0.0
      %4099 = vmatprep.subr.mxu0 0.0
      %4100 = vmatpush1.xpose.msra.mxu0 0.0
      %4101 = vmatprep.subr.mxu0 0.0
      %4102 = vmatpush1.xpose.msra.mxu0 0.0
      %4103 = vmatprep.subr.mxu0 0.0
      %4104 = vmatpush1.xpose.msra.mxu0 0.0
      %4105 = vmatprep.mubr.f32.mxu0 0.0
      %v4106 = vand.u32 %v2678, 4294901760
      %v4107 = vsub.f32 %v2678, %v4106
      %v4108 = vand.u32 %v4107, 4294901760
      %4109 = vmatmul.mubr.f32.gmra.mrb[0].mxu0 %v4108
      %v4110 = vpop.f32.mrb[0].mxu0
      %v4111 = vadd.f32 %v4022, %v4110
      %v4112 = vpop.f32.mrb[0].mxu0
      %4113 = vdwg.mxu0
      %4114 = vmatprep.subr.mxu0 0.0
      %v4115 = vand.u32 %v2777, 4294901760
      %v4116 = vsub.f32 %v2777, %v4115
      %v4117 = vand.u32 %v4116, 4294901760
      %4118 = vmatpush1.xpose.msra.mxu0 %v4117
      %4119 = vmatprep.subr.mxu0 0.0
      %v4120 = vand.u32 %v2780, 4294901760
      %v4121 = vsub.f32 %v2780, %v4120
      %v4122 = vand.u32 %v4121, 4294901760
      %4123 = vmatpush1.xpose.msra.mxu0 %v4122
      %4124 = vmatprep.subr.mxu0 0.0
      %v4125 = vand.u32 %v2783, 4294901760
      %v4126 = vsub.f32 %v2783, %v4125
      %v4127 = vand.u32 %v4126, 4294901760
      %4128 = vmatpush1.xpose.msra.mxu0 %v4127
      %4129 = vmatprep.subr.mxu0 0.0
      %v4130 = vand.u32 %v2786, 4294901760
      %v4131 = vsub.f32 %v2786, %v4130
      %v4132 = vand.u32 %v4131, 4294901760
      %4133 = vmatpush1.xpose.msra.mxu0 %v4132
      %4134 = vmatprep.subr.mxu0 0.0
      %v4135 = vand.u32 %v2789, 4294901760
      %v4136 = vsub.f32 %v2789, %v4135
      %v4137 = vand.u32 %v4136, 4294901760
      %4138 = vmatpush1.xpose.msra.mxu0 %v4137
      %4139 = vmatprep.subr.mxu0 0.0
      %v4140 = vand.u32 %v2792, 4294901760
      %v4141 = vsub.f32 %v2792, %v4140
      %v4142 = vand.u32 %v4141, 4294901760
      %4143 = vmatpush1.xpose.msra.mxu0 %v4142
      %4144 = vmatprep.subr.mxu0 0.0
      %v4145 = vand.u32 %v2795, 4294901760
      %v4146 = vsub.f32 %v2795, %v4145
      %v4147 = vand.u32 %v4146, 4294901760
      %4148 = vmatpush1.xpose.msra.mxu0 %v4147
      %4149 = vmatprep.subr.mxu0 0.0
      %v4150 = vand.u32 %v2798, 4294901760
      %v4151 = vsub.f32 %v2798, %v4150
      %v4152 = vand.u32 %v4151, 4294901760
      %4153 = vmatpush1.xpose.msra.mxu0 %v4152
      %4154 = vmatprep.subr.mxu0 0.0
      %v4155 = vand.u32 %v2801, 4294901760
      %v4156 = vsub.f32 %v2801, %v4155
      %v4157 = vand.u32 %v4156, 4294901760
      %4158 = vmatpush1.xpose.msra.mxu0 %v4157
      %4159 = vmatprep.subr.mxu0 0.0
      %v4160 = vand.u32 %v2804, 4294901760
      %v4161 = vsub.f32 %v2804, %v4160
      %v4162 = vand.u32 %v4161, 4294901760
      %4163 = vmatpush1.xpose.msra.mxu0 %v4162
      %4164 = vmatprep.subr.mxu0 0.0
      %v4165 = vand.u32 %v2807, 4294901760
      %v4166 = vsub.f32 %v2807, %v4165
      %v4167 = vand.u32 %v4166, 4294901760
      %4168 = vmatpush1.xpose.msra.mxu0 %v4167
      %4169 = vmatprep.subr.mxu0 0.0
      %v4170 = vand.u32 %v2810, 4294901760
      %v4171 = vsub.f32 %v2810, %v4170
      %v4172 = vand.u32 %v4171, 4294901760
      %4173 = vmatpush1.xpose.msra.mxu0 %v4172
      %4174 = vmatprep.subr.mxu0 0.0
      %v4175 = vand.u32 %v2813, 4294901760
      %v4176 = vsub.f32 %v2813, %v4175
      %v4177 = vand.u32 %v4176, 4294901760
      %4178 = vmatpush1.xpose.msra.mxu0 %v4177
      %4179 = vmatprep.subr.mxu0 0.0
      %v4180 = vand.u32 %v2816, 4294901760
      %v4181 = vsub.f32 %v2816, %v4180
      %v4182 = vand.u32 %v4181, 4294901760
      %4183 = vmatpush1.xpose.msra.mxu0 %v4182
      %4184 = vmatprep.subr.mxu0 0.0
      %v4185 = vand.u32 %v2819, 4294901760
      %v4186 = vsub.f32 %v2819, %v4185
      %v4187 = vand.u32 %v4186, 4294901760
      %4188 = vmatpush1.xpose.msra.mxu0 %v4187
      %4189 = vmatprep.subr.mxu0 0.0
      %v4190 = vand.u32 %v2822, 4294901760
      %v4191 = vsub.f32 %v2822, %v4190
      %v4192 = vand.u32 %v4191, 4294901760
      %4193 = vmatpush1.xpose.msra.mxu0 %v4192
      %4194 = vmatprep.subr.mxu0 0.0
      %4195 = vmatpush1.xpose.msra.mxu0 0.0
      %4196 = vmatprep.subr.mxu0 0.0
      %4197 = vmatpush1.xpose.msra.mxu0 0.0
      %4198 = vmatprep.subr.mxu0 0.0
      %4199 = vmatpush1.xpose.msra.mxu0 0.0
      %4200 = vmatprep.subr.mxu0 0.0
      %4201 = vmatpush1.xpose.msra.mxu0 0.0
      %4202 = vmatprep.subr.mxu0 0.0
      %4203 = vmatpush1.xpose.msra.mxu0 0.0
      %4204 = vmatprep.subr.mxu0 0.0
      %4205 = vmatpush1.xpose.msra.mxu0 0.0
      %4206 = vmatprep.subr.mxu0 0.0
      %4207 = vmatpush1.xpose.msra.mxu0 0.0
      %4208 = vmatprep.subr.mxu0 0.0
      %4209 = vmatpush1.xpose.msra.mxu0 0.0
      %4210 = vmatprep.subr.mxu0 0.0
      %4211 = vmatpush1.xpose.msra.mxu0 0.0
      %4212 = vmatprep.subr.mxu0 0.0
      %4213 = vmatpush1.xpose.msra.mxu0 0.0
      %4214 = vmatprep.subr.mxu0 0.0
      %4215 = vmatpush1.xpose.msra.mxu0 0.0
      %4216 = vmatprep.subr.mxu0 0.0
      %4217 = vmatpush1.xpose.msra.mxu0 0.0
      %4218 = vmatprep.subr.mxu0 0.0
      %4219 = vmatpush1.xpose.msra.mxu0 0.0
      %4220 = vmatprep.subr.mxu0 0.0
      %4221 = vmatpush1.xpose.msra.mxu0 0.0
      %4222 = vmatprep.subr.mxu0 0.0
      %4223 = vmatpush1.xpose.msra.mxu0 0.0
      %4224 = vmatprep.subr.mxu0 0.0
      %4225 = vmatpush1.xpose.msra.mxu0 0.0
      %4226 = vmatprep.mubr.f32.mxu0 0.0
      %v4227 = vand.u32 %v2678, 4294901760
      %4228 = vmatmul.mubr.f32.gmra.mrb[0].mxu0 %v4227
      %v4229 = vpop.f32.mrb[0].mxu0
      %v4230 = vadd.f32 %v4111, %v4229
      %v4231 = vpop.f32.mrb[0].mxu0
      %4232 = vdwg.mxu0
      %4233 = vmatprep.subr.mxu0 0.0
      %v4234 = vand.u32 %v2777, 4294901760
      %4235 = vmatpush1.xpose.msra.mxu0 %v4234
      %4236 = vmatprep.subr.mxu0 0.0
      %v4237 = vand.u32 %v2780, 4294901760
      %4238 = vmatpush1.xpose.msra.mxu0 %v4237
      %4239 = vmatprep.subr.mxu0 0.0
      %v4240 = vand.u32 %v2783, 4294901760
      %4241 = vmatpush1.xpose.msra.mxu0 %v4240
      %4242 = vmatprep.subr.mxu0 0.0
      %v4243 = vand.u32 %v2786, 4294901760
      %4244 = vmatpush1.xpose.msra.mxu0 %v4243
      %4245 = vmatprep.subr.mxu0 0.0
      %v4246 = vand.u32 %v2789, 4294901760
      %4247 = vmatpush1.xpose.msra.mxu0 %v4246
      %4248 = vmatprep.subr.mxu0 0.0
      %v4249 = vand.u32 %v2792, 4294901760
      %4250 = vmatpush1.xpose.msra.mxu0 %v4249
      %4251 = vmatprep.subr.mxu0 0.0
      %v4252 = vand.u32 %v2795, 4294901760
      %4253 = vmatpush1.xpose.msra.mxu0 %v4252
      %4254 = vmatprep.subr.mxu0 0.0
      %v4255 = vand.u32 %v2798, 4294901760
      %4256 = vmatpush1.xpose.msra.mxu0 %v4255
      %4257 = vmatprep.subr.mxu0 0.0
      %v4258 = vand.u32 %v2801, 4294901760
      %4259 = vmatpush1.xpose.msra.mxu0 %v4258
      %4260 = vmatprep.subr.mxu0 0.0
      %v4261 = vand.u32 %v2804, 4294901760
      %4262 = vmatpush1.xpose.msra.mxu0 %v4261
      %4263 = vmatprep.subr.mxu0 0.0
      %v4264 = vand.u32 %v2807, 4294901760
      %4265 = vmatpush1.xpose.msra.mxu0 %v4264
      %4266 = vmatprep.subr.mxu0 0.0
      %v4267 = vand.u32 %v2810, 4294901760
      %4268 = vmatpush1.xpose.msra.mxu0 %v4267
      %4269 = vmatprep.subr.mxu0 0.0
      %v4270 = vand.u32 %v2813, 4294901760
      %4271 = vmatpush1.xpose.msra.mxu0 %v4270
      %4272 = vmatprep.subr.mxu0 0.0
      %v4273 = vand.u32 %v2816, 4294901760
      %4274 = vmatpush1.xpose.msra.mxu0 %v4273
      %4275 = vmatprep.subr.mxu0 0.0
      %v4276 = vand.u32 %v2819, 4294901760
      %4277 = vmatpush1.xpose.msra.mxu0 %v4276
      %4278 = vmatprep.subr.mxu0 0.0
      %v4279 = vand.u32 %v2822, 4294901760
      %4280 = vmatpush1.xpose.msra.mxu0 %v4279
      %4281 = vmatprep.subr.mxu0 0.0
      %4282 = vmatpush1.xpose.msra.mxu0 0.0
      %4283 = vmatprep.subr.mxu0 0.0
      %4284 = vmatpush1.xpose.msra.mxu0 0.0
      %4285 = vmatprep.subr.mxu0 0.0
      %4286 = vmatpush1.xpose.msra.mxu0 0.0
      %4287 = vmatprep.subr.mxu0 0.0
      %4288 = vmatpush1.xpose.msra.mxu0 0.0
      %4289 = vmatprep.subr.mxu0 0.0
      %4290 = vmatpush1.xpose.msra.mxu0 0.0
      %4291 = vmatprep.subr.mxu0 0.0
      %4292 = vmatpush1.xpose.msra.mxu0 0.0
      %4293 = vmatprep.subr.mxu0 0.0
      %4294 = vmatpush1.xpose.msra.mxu0 0.0
      %4295 = vmatprep.subr.mxu0 0.0
      %4296 = vmatpush1.xpose.msra.mxu0 0.0
      %4297 = vmatprep.subr.mxu0 0.0
      %4298 = vmatpush1.xpose.msra.mxu0 0.0
      %4299 = vmatprep.subr.mxu0 0.0
      %4300 = vmatpush1.xpose.msra.mxu0 0.0
      %4301 = vmatprep.subr.mxu0 0.0
      %4302 = vmatpush1.xpose.msra.mxu0 0.0
      %4303 = vmatprep.subr.mxu0 0.0
      %4304 = vmatpush1.xpose.msra.mxu0 0.0
      %4305 = vmatprep.subr.mxu0 0.0
      %4306 = vmatpush1.xpose.msra.mxu0 0.0
      %4307 = vmatprep.subr.mxu0 0.0
      %4308 = vmatpush1.xpose.msra.mxu0 0.0
      %4309 = vmatprep.subr.mxu0 0.0
      %4310 = vmatpush1.xpose.msra.mxu0 0.0
      %4311 = vmatprep.subr.mxu0 0.0
      %4312 = vmatpush1.xpose.msra.mxu0 0.0
      %4313 = vmatprep.mubr.f32.mxu0 0.0
      %v4314 = vand.u32 %v2678, 4294901760
      %4315 = vmatmul.mubr.f32.gmra.mrb[0].mxu0 %v4314
      %v4316 = vpop.f32.mrb[0].mxu0
      %v4317 = vadd.f32 %v4230, %v4316
      %v4318 = vpop.f32.mrb[0].mxu0
      %4319 = vdwg.mxu0
      %4320 = vst [vmem:[%s192] sm:$0xff] %v3675
      %4321 = vst [vmem:[%s192 + $0x8] sm:$0xff] %v3677
      %4322 = vst [vmem:[%s192 + $0x10] sm:$0xff] %v4317
      %s4323 = smul.u32 3, %s19
      %p4324 = scmp.lt.s32.totalorder %s18, 1
      %s4325 = scalar_select %p4324, %s18, 1
      %p4326 = scmp.lt.s32.totalorder %s4323, 2
      %s4327 = scalar_select %p4326, %s4323, 2
      %s4328 = smul.addr %s4325, 3
      %s4329 = sadd.s32 %s4327, %s4328
      %s4330 = smul.addr %s4329, 8
      %s4331 = scalar_lea.vmem %s3, %s4330
      // Predicated region
      $region33: #{my_conv2d.1} parent=31 // pred_check
        %p4332 = pneg %p114
      $region34: #{my_conv2d.1} parent=31 // pred_check_branch
        %4334 = sbr.rel (%p4332) target = $region36
      $region35: #{my_conv2d.1} parent=31 // pred_region
        %s4335 = smul.u32 3, %s19
      $region36: #{my_conv2d.1} parent=31 // pred_fallthru
        _
    $region32: #{my_conv2d.1} parent=5 // pred_fallthru
      _
    %p4336 = scmp.le.s32.totalorder 2, %s9
    // Predicated region
    $region37: #{my_conv2d.1} parent=5 // pred_check
      %p4337 = pneg %p4336
    $region38: #{my_conv2d.1} parent=5 // pred_check_branch
      %4339 = sbr.rel (%p4337) target = $region40
    $region39: #{my_conv2d.1} parent=5 // pred_region
      %s4340 = ssub.s32 %s9, 2
      // Predicated region
      $region41: #{my_conv2d.1} parent=39 // pred_check
        %p4341 = pneg %p120
      $region42: #{my_conv2d.1} parent=39 // pred_check_branch
        %4343 = sbr.rel (%p4341) target = $region44
      $region43: #{my_conv2d.1} parent=39 // pred_region
        %s4344 = smul.u32 3, %s21
        %p4345 = scmp.lt.s32.totalorder %s20, 1
        %s4346 = scalar_select %p4345, %s20, 1
        %p4347 = scmp.lt.s32.totalorder %s4344, 2
        %s4348 = scalar_select %p4347, %s4344, 2
        %s4349 = smul.addr %s4346, 3
        %s4350 = sadd.s32 %s4348, %s4349
        %s4351 = smul.addr %s4350, 8
        %s4352 = scalar_lea.vmem %s3, %s4351
      $region44: #{my_conv2d.1} parent=39 // pred_fallthru
        _
    $region40: #{my_conv2d.1} parent=5 // pred_fallthru
      _
  $region6: #{my_conv2d.1} parent=0 // loop_footer
    %s13 = sadd.s32 1, %s9
  $region7: #{my_conv2d.1} parent=0 // loop_footer_branch
    %8 = sbr.rel target = $region3
  $region8: #{my_conv2d.1} parent=0 // loop_exit
    _

</llo_original>
